<compile_context>
chip_gen: v7x
topology: tpu7x:2x2x1
jax: 0.10.0
libtpu: 0.0.40
codegen_flags: <defaults>
</compile_context>

<pallas_src>
import functools

import jax
import jax.numpy as jnp
from jax.experimental import pallas as pl
from jax.experimental.pallas import tpu as pltpu

EPS = 1e-5
MXU_DTYPE = jnp.bfloat16     # MXU operand dtype (accumulation stays f32)
ACT_DTYPE = jnp.bfloat16     # intermediate activations in HBM


# ----------------------------------------------------------------------------
# Pallas kernels
# ----------------------------------------------------------------------------
def _conv3x3_kernel(scale_ref, shift_ref, body_ref, top_ref, bot_ref, w_ref,
                    y_ref, stats_ref, *, tr, W, Cin, Cout, apply_preact):
    # scale/shift: (1, Cin) f32      pre-activation BN affine (layer-1 fusion)
    # body_ref   : (1, tr, W, Cin)   rows [r*tr, r*tr+tr) of the UNPADDED image
    # top_ref    : (1, 1,  W, Cin)   row  r*tr-1 (clamped; gated to 0 at r==0)
    # bot_ref    : (1, 1,  W, Cin)   row  r*tr+tr (clamped; gated to 0 at last r)
    # w_ref      : (9*Cin, Cout)     im2col-ordered weights (MXU dtype)
    # y_ref      : (1, tr, W, Cout)  conv output tile (ACT_DTYPE)
    # stats_ref  : (1, 2, Cout)      per-image resident accumulator [sum, sum_sq]
    r = pl.program_id(1)
    n_rt = pl.num_programs(1)

    @pl.when(r == 0)
    def _():
        stats_ref[...] = jnp.zeros_like(stats_ref)

    def preact(v, gate=None):
        v = v.astype(jnp.float32)
        if apply_preact:
            # relu(bn(y_prev)) fused into the conv input path.
            v = jnp.maximum(v * scale_ref[...] + shift_ref[...], 0.0)
        if gate is not None:
            # Zero out-of-image halo rows AFTER the pre-activation: the
            # reference pads the post-activation tensor with zeros
            # (pad-then-BN != BN-then-pad when shift != 0).
            v = v * gate
        return v.astype(MXU_DTYPE)

    body = preact(body_ref[0])                                       # (tr, W, Cin)
    top = preact(top_ref[0], gate=(r > 0).astype(jnp.float32))       # (1,  W, Cin)
    bot = preact(bot_ref[0], gate=(r < n_rt - 1).astype(jnp.float32))

    # (tr+2, W+2, Cin) pre-activated, zero-bordered tile built in VMEM
    # (no padded array ever materialized in HBM).
    rows = jnp.concatenate([top, body, bot], axis=0)                 # (tr+2, W, Cin)
    zcol = jnp.zeros((tr + 2, 1, Cin), MXU_DTYPE)
    xw = jnp.concatenate([zcol, rows, zcol], axis=1)                 # (tr+2, W+2, Cin)

    # im2col -> single big-K matmul (K = 9*Cin), f32 accumulation on the MXU.
    patches = jnp.concatenate(
        [xw[di:di + tr, dj:dj + W, :].reshape(tr * W, Cin)
         for di in range(3) for dj in range(3)], axis=-1)            # (tr*W, 9*Cin)
    acc = jnp.dot(patches, w_ref[...], preferred_element_type=jnp.float32)

    y_ref[0] = acc.reshape(tr, W, Cout).astype(y_ref.dtype)

    # Per-image BatchNorm batch statistics from the exact f32 accumulator.
    s = jnp.sum(acc, axis=0, keepdims=True)
    ss = jnp.sum(acc * acc, axis=0, keepdims=True)
    stats_ref[...] += jnp.concatenate([s, ss], axis=0).reshape(1, 2, Cout)


def _bn_relu_kernel(y_ref, scale_ref, shift_ref, o_ref):
    # Lane-dense elementwise BN-apply + ReLU: out = max(y*scale + shift, 0).
    y = y_ref[...].astype(jnp.float32)
    o_ref[...] = jnp.maximum(y * scale_ref[...] + shift_ref[...], 0.0
                             ).astype(o_ref.dtype)


# ----------------------------------------------------------------------------
# Pallas wrappers
# ----------------------------------------------------------------------------
def _pick_row_tile(H, W, Cin, Cout, in_itemsize, budget_bytes=20 << 20):
    """Largest divisor of H whose full (double-buffered) working set fits.

    Budget is kept conservative (~20 MiB live) so the same tiling is safe on
    v7x's 64 MiB VMEM while still allowing large tiles on v5e/v6e.
    """
    def est_bytes(d):
        body = d * W * Cin * in_itemsize
        halo = 2 * W * Cin * in_itemsize
        y_out = d * W * Cout * 2                       # bf16 output tile
        weights = 9 * Cin * Cout * 2
        stats = 2 * Cout * 4
        tmp = (2 * (d + 2) * (W + 2) * Cin * 2         # rows + bordered tile (bf16)
               + d * W * 9 * Cin * 2                   # im2col patches (bf16)
               + d * W * Cout * 4                      # f32 accumulator
               + d * W * Cin * 4)                      # f32 preact temp
        return 2 * (body + halo + y_out) + weights + stats + tmp

    # TODO(synk): tiling over flattened N*H rows (fully divisor-free) is not
    # implemented; tr is any divisor of H (odd divisors now allowed).
    divisors = [d for d in range(1, H + 1) if H % d == 0]
    fits = [d for d in divisors if est_bytes(d) <= budget_bytes]
    tr = max(fits) if fits else 1
    return tr, est_bytes(tr)


def conv3x3_fused(x, w, preact_scale=None, preact_shift=None):
    """3x3 conv (padding=1, no bias), optionally fused with a pre-activation
    BN+ReLU on its input, plus per-image [sum, sum_sq] output-channel stats.

    x: (N, H, W, Cin);  w: (Cout, Cin, 3, 3) PyTorch layout.
    Returns y: (N, H, W, Cout) ACT_DTYPE and stats: (N, 2, Cout) f32.
    """
    N, H, W, Cin = x.shape
    Cout = w.shape[0]
    apply_preact = preact_scale is not None
    if apply_preact:
        preact_scale = preact_scale.reshape(1, Cin).astype(jnp.float32)
        preact_shift = preact_shift.reshape(1, Cin).astype(jnp.float32)
    else:
        preact_scale = jnp.ones((1, Cin), jnp.float32)
        preact_shift = jnp.zeros((1, Cin), jnp.float32)

    # (Cout,Cin,3,3) -> (3,3,Cin,Cout) -> (9*Cin, Cout); row order (di, dj, c)
    # matches the in-kernel patch concatenation.
    wt = jnp.transpose(w, (2, 3, 1, 0)).reshape(9 * Cin, Cout).astype(MXU_DTYPE)

    tr, est = _pick_row_tile(H, W, Cin, Cout, x.dtype.itemsize)
    n_rt = H // tr
    vmem_limit = int(min(48 << 20, max(32 << 20, 2 * est)))

    kernel = functools.partial(_conv3x3_kernel, tr=tr, W=W, Cin=Cin, Cout=Cout,
                               apply_preact=apply_preact)

    flops = 2 * N * H * W * 9 * Cin * Cout
    if apply_preact:
        flops += 3 * N * H * W * Cin
    bytes_accessed = int(N * H * W * Cin * (1.0 + 2.0 / tr) * x.dtype.itemsize
                         + N * H * W * Cout * 2
                         + 9 * Cin * Cout * 2 + N * 2 * Cout * 4)

    y, stats = pl.pallas_call(
        kernel,
        out_shape=(jax.ShapeDtypeStruct((N, H, W, Cout), ACT_DTYPE),
                   jax.ShapeDtypeStruct((N, 2, Cout), jnp.float32)),
        grid=(N, n_rt),
        in_specs=[
            pl.BlockSpec((1, Cin), lambda n, r: (0, 0)),
            pl.BlockSpec((1, Cin), lambda n, r: (0, 0)),
            # body rows [r*tr, r*tr+tr)
            pl.BlockSpec((1, tr, W, Cin), lambda n, r: (n, r, 0, 0)),
            # 1-row top halo (row granularity; clamped, gated in-kernel)
            pl.BlockSpec((1, 1, W, Cin),
                         lambda n, r: (n, jnp.maximum(r * tr - 1, 0), 0, 0)),
            # 1-row bottom halo
            pl.BlockSpec((1, 1, W, Cin),
                         lambda n, r: (n, jnp.minimum(r * tr + tr, H - 1), 0, 0)),
            # weights resident in VMEM
            pl.BlockSpec((9 * Cin, Cout), lambda n, r: (0, 0)),
        ],
        out_specs=(
            pl.BlockSpec((1, tr, W, Cout), lambda n, r: (n, r, 0, 0)),
            # per-image partial stats: resident across r only -> batch axis
            # can be 'parallel' (v7x megacore) without racing.
            pl.BlockSpec((1, 2, Cout), lambda n, r: (n, 0, 0)),
        ),
        compiler_params=pltpu.CompilerParams(
            dimension_semantics=("parallel", "arbitrary"),
            vmem_limit_bytes=vmem_limit),
        cost_estimate=pl.CostEstimate(flops=int(flops), transcendentals=0,
                                      bytes_accessed=bytes_accessed),
    )(preact_scale, preact_shift, x, x, x, wt)
    return y, stats


def bn_relu_apply(y, scale, shift, out_dtype=jnp.float32, tm=512):
    """Tiled BN-apply + ReLU on a lane-dense (N*H, W*C) view of NHWC."""
    N, H, W, C = y.shape
    M, WC = N * H, W * C
    y2 = y.reshape(M, WC)                                   # free trailing reshape
    scale_t = jnp.tile(scale.reshape(1, C).astype(jnp.float32), (1, W))
    shift_t = jnp.tile(shift.reshape(1, C).astype(jnp.float32), (1, W))

    tm = min(tm, M)
    if M >= 8:
        tm = max(8, (tm // 8) * 8)     # keep (8, lane) divisibility; ragged tail ok

    out = pl.pallas_call(
        _bn_relu_kernel,
        out_shape=jax.ShapeDtypeStruct((M, WC), out_dtype),
        grid=(pl.cdiv(M, tm),),
        in_specs=[
            pl.BlockSpec((tm, WC), lambda i: (i, 0)),
            pl.BlockSpec((1, WC), lambda i: (0, 0)),
            pl.BlockSpec((1, WC), lambda i: (0, 0)),
        ],
        out_specs=pl.BlockSpec((tm, WC), lambda i: (i, 0)),
        compiler_params=pltpu.CompilerParams(dimension_semantics=("parallel",)),
        cost_estimate=pl.CostEstimate(
            flops=2 * M * WC, transcendentals=0,
            bytes_accessed=int(M * WC * (y.dtype.itemsize
                                         + jnp.dtype(out_dtype).itemsize)
                               + 2 * WC * 4)),
    )(y2, scale_t, shift_t)
    return out.reshape(N, H, W, C)


def _bn_affine_from_stats(stats, count, gamma, beta):
    """Training-mode BatchNorm affine (batch mean, biased batch variance).

    Note: E[x^2] - mean^2 in f32 can lose precision for very large counts /
    means; clamped at 0, which is adequate at UNet-scale activations.
    """
    total, total_sq = stats[0], stats[1]
    mean = total / count
    var = jnp.maximum(total_sq / count - mean * mean, 0.0)
    scale = gamma * jax.lax.rsqrt(var + EPS)
    shift = beta - mean * scale
    return scale, shift


# ----------------------------------------------------------------------------
# UNetConv: parameter init + forward
# ----------------------------------------------------------------------------
def init_unet_conv_params(key, channel_tup):
    c0, c1, c2 = channel_tup
    k1, k2 = jax.random.split(key)
    return {
        "w1": jax.random.normal(k1, (c1, c0, 3, 3), jnp.float32) * 0.1,
        "g1": jnp.ones((c1,), jnp.float32),
        "b1": jnp.zeros((c1,), jnp.float32),
        "w2": jax.random.normal(k2, (c2, c1, 3, 3), jnp.float32) * 0.1,
        "g2": jnp.ones((c2,), jnp.float32),
        "b2": jnp.zeros((c2,), jnp.float32),
    }


def unet_conv_forward(params, x_nchw):
    """conv3x3(no bias) -> BN(train stats) -> ReLU -> conv3x3 -> BN -> ReLU."""
    x = jnp.transpose(x_nchw, (0, 2, 3, 1)).astype(jnp.float32)   # NCHW -> NHWC
    N, H, W, _ = x.shape
    count = N * H * W

    # conv1 (+ fused batch-statistic accumulation); activation kept bf16 in HBM.
    y1, st1 = conv3x3_fused(x, params["w1"])
    sc1, sh1 = _bn_affine_from_stats(jnp.sum(st1, axis=0), count,
                                     params["g1"], params["b1"])

    # conv2 with layer-1 BN+ReLU (and its zero padding) fused into its input
    # path: no standalone bn_relu pass / pad / z1 HBM round trip in between.
    y2, st2 = conv3x3_fused(y1, params["w2"],
                            preact_scale=sc1, preact_shift=sh1)
    sc2, sh2 = _bn_affine_from_stats(jnp.sum(st2, axis=0), count,
                                     params["g2"], params["b2"])

    # Final BN+ReLU as a lane-dense elementwise pass.
    z2 = bn_relu_apply(y2, sc2, sh2, out_dtype=jnp.float32)
    return jnp.transpose(z2, (0, 3, 1, 2))                        # NHWC -> NCHW


# TODO(synk): BatchNorm running_mean/running_var buffer updates (a training-mode
# side effect) are not reproduced; only the forward normalization with batch
# statistics is.

if __name__ == "__main__":
    key = jax.random.PRNGKey(0)
    kp, kx = jax.random.split(key)

    channel_tup = (4, 32, 32)            # UNetConv(channel_tup)
    params = init_unet_conv_params(kp, channel_tup)

    x = jax.random.normal(kx, (2, channel_tup[0], 16, 16), jnp.float32)  # NCHW

    out = jax.jit(unet_conv_forward)(params, x)
    out = jax.block_until_ready(out)
    assert out.shape == (2, channel_tup[2], 16, 16), out.shape
    assert bool(jnp.all(jnp.isfinite(out)))
    print("KERNEL_OK")
</pallas_src>

<mosaic_0001>
module attributes {stable_mosaic.version = 11 : i64} {
  func.func @_conv3x3_kernel(%arg0: i32, %arg1: i32, %arg2: memref<1x4xf32, #tpu.memory_space<vmem>>, %arg3: memref<1x4xf32, #tpu.memory_space<vmem>>, %arg4: memref<1x16x16x4xf32, #tpu.memory_space<vmem>>, %arg5: memref<1x1x16x4xf32, #tpu.memory_space<vmem>>, %arg6: memref<1x1x16x4xf32, #tpu.memory_space<vmem>>, %arg7: memref<36x32xbf16, #tpu.memory_space<vmem>>, %arg8: memref<1x16x16x32xbf16, #tpu.memory_space<vmem>>, %arg9: memref<1x2x32xf32, #tpu.memory_space<vmem>>) attributes {dimension_semantics = [#tpu.dimension_semantics<parallel>, #tpu.dimension_semantics<arbitrary>], iteration_bounds = array<i64: 2, 1>, scalar_prefetch = 0 : i64, scratch_operands = 0 : i64, tpu.core_type = #tpu.core_type<tc>, window_params = [{pipeline_mode = #tpu.pipeline_mode<synchronous>, transform_indices = @transform_0, window_bounds = array<i64: 1, 4>}, {pipeline_mode = #tpu.pipeline_mode<synchronous>, transform_indices = @transform_1, window_bounds = array<i64: 1, 4>}, {transform_indices = @transform_2, window_bounds = array<i64: 1, 16, 16, 4>}, {transform_indices = @transform_3, window_bounds = array<i64: 1, 1, 16, 4>}, {transform_indices = @transform_4, window_bounds = array<i64: 1, 1, 16, 4>}, {pipeline_mode = #tpu.pipeline_mode<synchronous>, transform_indices = @transform_5, window_bounds = array<i64: 36, 32>}, {transform_indices = @transform_6, window_bounds = array<i64: 1, 16, 16, 32>}, {transform_indices = @transform_7, window_bounds = array<i64: 1, 2, 32>}]} {
    %c0_i32 = arith.constant 0 : i32
    %0 = arith.cmpi eq, %arg1, %c0_i32 : i32
    %1 = arith.extui %0 : i1 to i32
    %c0_i32_0 = arith.constant 0 : i32
    %2 = arith.cmpi ne, %1, %c0_i32_0 : i32
    scf.if %2 {
      %cst_29 = arith.constant 0.000000e+00 : f32
      %61 = vector.broadcast %cst_29 : f32 to vector<1x2x32xf32>
      %c0_30 = arith.constant 0 : index
      %c0_31 = arith.constant 0 : index
      %c0_32 = arith.constant 0 : index
      %62 = vector.load %arg9[%c0_30, %c0_31, %c0_32] : memref<1x2x32xf32, #tpu.memory_space<vmem>>, vector<1x2x32xf32>
      tpu.vector_store %arg9[%c0_30, %c0_31, %c0_32], %61 {strides = array<i32>} : memref<1x2x32xf32, #tpu.memory_space<vmem>>, vector<1x2x32xf32>,
    } else {
    }
    %c0 = arith.constant 0 : index
    %c0_1 = arith.constant 0 : index
    %c0_2 = arith.constant 0 : index
    %c0_3 = arith.constant 0 : index
    %3 = vector.load %arg4[%c0, %c0_1, %c0_2, %c0_3] : memref<1x16x16x4xf32, #tpu.memory_space<vmem>>, vector<1x16x16x4xf32>
    %4 = vector.shape_cast %3 : vector<1x16x16x4xf32> to vector<16x16x4xf32>
    %5 = arith.truncf %4 : vector<16x16x4xf32> to vector<16x16x4xbf16>
    %c0_4 = arith.constant 0 : index
    %c0_5 = arith.constant 0 : index
    %c0_6 = arith.constant 0 : index
    %c0_7 = arith.constant 0 : index
    %6 = vector.load %arg5[%c0_4, %c0_5, %c0_6, %c0_7] : memref<1x1x16x4xf32, #tpu.memory_space<vmem>>, vector<1x1x16x4xf32>
    %7 = vector.shape_cast %6 : vector<1x1x16x4xf32> to vector<1x16x4xf32>
    %c0_i32_8 = arith.constant 0 : i32
    %8 = arith.cmpi sgt, %arg1, %c0_i32_8 : i32
    %9 = arith.extui %8 : i1 to i32
    %10 = arith.sitofp %9 : i32 to f32
    %11 = vector.broadcast %10 : f32 to vector<1x16x4xf32>
    %12 = arith.mulf %7, %11 : vector<1x16x4xf32>
    %13 = arith.truncf %12 : vector<1x16x4xf32> to vector<1x16x4xbf16>
    %c0_9 = arith.constant 0 : index
    %c0_10 = arith.constant 0 : index
    %c0_11 = arith.constant 0 : index
    %c0_12 = arith.constant 0 : index
    %14 = vector.load %arg6[%c0_9, %c0_10, %c0_11, %c0_12] : memref<1x1x16x4xf32, #tpu.memory_space<vmem>>, vector<1x1x16x4xf32>
    %15 = vector.shape_cast %14 : vector<1x1x16x4xf32> to vector<1x16x4xf32>
    %c0_i32_13 = arith.constant 0 : i32
    %16 = arith.cmpi slt, %arg1, %c0_i32_13 : i32
    %17 = arith.extui %16 : i1 to i32
    %18 = arith.sitofp %17 : i32 to f32
    %19 = vector.broadcast %18 : f32 to vector<1x16x4xf32>
    %20 = arith.mulf %15, %19 : vector<1x16x4xf32>
    %21 = arith.truncf %20 : vector<1x16x4xf32> to vector<1x16x4xbf16>
    %22 = tpu.concatenate %13, %5, %21 in 0 : vector<1x16x4xbf16>, vector<16x16x4xbf16>, vector<1x16x4xbf16> -> vector<18x16x4xbf16>
    %cst = arith.constant 0.000000e+00 : bf16
    %23 = vector.broadcast %cst : bf16 to vector<18x1x4xbf16>
    %24 = tpu.concatenate %23, %22, %23 in 1 : vector<18x1x4xbf16>, vector<18x16x4xbf16>, vector<18x1x4xbf16> -> vector<18x18x4xbf16>
    %25 = vector.extract_strided_slice %24 {offsets = [0, 0, 0], sizes = [16, 16, 4], strides = [1, 1, 1]} : vector<18x18x4xbf16> to vector<16x16x4xbf16>
    %26 = vector.shape_cast %25 : vector<16x16x4xbf16> to vector<256x4xbf16>
    %27 = vector.extract_strided_slice %24 {offsets = [0, 1, 0], sizes = [16, 16, 4], strides = [1, 1, 1]} : vector<18x18x4xbf16> to vector<16x16x4xbf16>
    %28 = vector.shape_cast %27 : vector<16x16x4xbf16> to vector<256x4xbf16>
    %29 = vector.extract_strided_slice %24 {offsets = [0, 2, 0], sizes = [16, 16, 4], strides = [1, 1, 1]} : vector<18x18x4xbf16> to vector<16x16x4xbf16>
    %30 = vector.shape_cast %29 : vector<16x16x4xbf16> to vector<256x4xbf16>
    %31 = vector.extract_strided_slice %24 {offsets = [1, 0, 0], sizes = [16, 16, 4], strides = [1, 1, 1]} : vector<18x18x4xbf16> to vector<16x16x4xbf16>
    %32 = vector.shape_cast %31 : vector<16x16x4xbf16> to vector<256x4xbf16>
    %33 = vector.extract_strided_slice %24 {offsets = [1, 1, 0], sizes = [16, 16, 4], strides = [1, 1, 1]} : vector<18x18x4xbf16> to vector<16x16x4xbf16>
    %34 = vector.shape_cast %33 : vector<16x16x4xbf16> to vector<256x4xbf16>
    %35 = vector.extract_strided_slice %24 {offsets = [1, 2, 0], sizes = [16, 16, 4], strides = [1, 1, 1]} : vector<18x18x4xbf16> to vector<16x16x4xbf16>
    %36 = vector.shape_cast %35 : vector<16x16x4xbf16> to vector<256x4xbf16>
    %37 = vector.extract_strided_slice %24 {offsets = [2, 0, 0], sizes = [16, 16, 4], strides = [1, 1, 1]} : vector<18x18x4xbf16> to vector<16x16x4xbf16>
    %38 = vector.shape_cast %37 : vector<16x16x4xbf16> to vector<256x4xbf16>
    %39 = vector.extract_strided_slice %24 {offsets = [2, 1, 0], sizes = [16, 16, 4], strides = [1, 1, 1]} : vector<18x18x4xbf16> to vector<16x16x4xbf16>
    %40 = vector.shape_cast %39 : vector<16x16x4xbf16> to vector<256x4xbf16>
    %41 = vector.extract_strided_slice %24 {offsets = [2, 2, 0], sizes = [16, 16, 4], strides = [1, 1, 1]} : vector<18x18x4xbf16> to vector<16x16x4xbf16>
    %42 = vector.shape_cast %41 : vector<16x16x4xbf16> to vector<256x4xbf16>
    %43 = tpu.concatenate %26, %28, %30, %32, %34, %36, %38, %40, %42 in 1 : vector<256x4xbf16>, vector<256x4xbf16>, vector<256x4xbf16>, vector<256x4xbf16>, vector<256x4xbf16>, vector<256x4xbf16>, vector<256x4xbf16>, vector<256x4xbf16>, vector<256x4xbf16> -> vector<256x36xbf16>
    %c0_14 = arith.constant 0 : index
    %c0_15 = arith.constant 0 : index
    %44 = vector.load %arg7[%c0_14, %c0_15] : memref<36x32xbf16, #tpu.memory_space<vmem>>, vector<36x32xbf16>
    %cst_16 = arith.constant dense<0.000000e+00> : vector<256x32xf32>
    %45 = tpu.matmul %43, %44, %cst_16 {dimension_numbers = #tpu.dot_dimension_numbers<[1], [0], [0], [1], [0, 0, 1, 1], [], []>} : vector<256x36xbf16>, vector<36x32xbf16>, vector<256x32xf32> -> vector<256x32xf32>
    %46 = vector.shape_cast %45 : vector<256x32xf32> to vector<16x16x32xf32>
    %47 = arith.truncf %46 : vector<16x16x32xf32> to vector<16x16x32xbf16>
    %c0_17 = arith.constant 0 : index
    %c0_18 = arith.constant 0 : index
    %c0_19 = arith.constant 0 : index
    %c0_20 = arith.constant 0 : index
    %48 = vector.load %arg8[%c0_17, %c0_18, %c0_19, %c0_20] : memref<1x16x16x32xbf16, #tpu.memory_space<vmem>>, vector<1x16x16x32xbf16>
    %49 = vector.shape_cast %48 : vector<1x16x16x32xbf16> to vector<16x16x32xbf16>
    %50 = vector.shape_cast %47 : vector<16x16x32xbf16> to vector<1x16x16x32xbf16>
    tpu.vector_store %arg8[%c0_17, %c0_18, %c0_19, %c0_20], %50 {strides = array<i32>} : memref<1x16x16x32xbf16, #tpu.memory_space<vmem>>, vector<1x16x16x32xbf16>,
    %cst_21 = arith.constant dense<0.000000e+00> : vector<32xf32>
    %51 = vector.multi_reduction <add>, %45, %cst_21 [0] : vector<256x32xf32> to vector<32xf32>
    %52 = vector.shape_cast %51 : vector<32xf32> to vector<1x32xf32>
    %53 = arith.mulf %45, %45 : vector<256x32xf32>
    %cst_22 = arith.constant dense<0.000000e+00> : vector<32xf32>
    %54 = vector.multi_reduction <add>, %53, %cst_22 [0] : vector<256x32xf32> to vector<32xf32>
    %55 = vector.shape_cast %54 : vector<32xf32> to vector<1x32xf32>
    %c0_23 = arith.constant 0 : index
    %c0_24 = arith.constant 0 : index
    %c0_25 = arith.constant 0 : index
    %56 = vector.load %arg9[%c0_23, %c0_24, %c0_25] : memref<1x2x32xf32, #tpu.memory_space<vmem>>, vector<1x2x32xf32>
    %57 = tpu.concatenate %52, %55 in 0 : vector<1x32xf32>, vector<1x32xf32> -> vector<2x32xf32>
    %58 = vector.shape_cast %57 : vector<2x32xf32> to vector<1x2x32xf32>
    %59 = arith.addf %56, %58 : vector<1x2x32xf32>
    %c0_26 = arith.constant 0 : index
    %c0_27 = arith.constant 0 : index
    %c0_28 = arith.constant 0 : index
    %60 = vector.load %arg9[%c0_26, %c0_27, %c0_28] : memref<1x2x32xf32, #tpu.memory_space<vmem>>, vector<1x2x32xf32>
    tpu.vector_store %arg9[%c0_26, %c0_27, %c0_28], %59 {strides = array<i32>} : memref<1x2x32xf32, #tpu.memory_space<vmem>>, vector<1x2x32xf32>,
    return
  }
  func.func @transform_0(%arg0: i32, %arg1: i32) -> (i32, i32) {
    %c0_i32 = arith.constant 0 : i32
    %c0_i32_0 = arith.constant 0 : i32
    %c0_i32_1 = arith.constant 0 : i32
    return %c0_i32, %c0_i32_0 : i32, i32
  }
  func.func @transform_1(%arg0: i32, %arg1: i32) -> (i32, i32) {
    %c0_i32 = arith.constant 0 : i32
    %c0_i32_0 = arith.constant 0 : i32
    %c0_i32_1 = arith.constant 0 : i32
    return %c0_i32, %c0_i32_0 : i32, i32
  }
  func.func @transform_2(%arg0: i32, %arg1: i32) -> (i32, i32, i32, i32) {
    %c0_i32 = arith.constant 0 : i32
    %c0_i32_0 = arith.constant 0 : i32
    %c0_i32_1 = arith.constant 0 : i32
    return %arg0, %arg1, %c0_i32, %c0_i32_0 : i32, i32, i32, i32
  }
  func.func @transform_3(%arg0: i32, %arg1: i32) -> (i32, i32, i32, i32) {
    %c16_i32 = arith.constant 16 : i32
    %0 = arith.muli %arg1, %c16_i32 : i32
    %c1_i32 = arith.constant 1 : i32
    %1 = arith.subi %0, %c1_i32 : i32
    %c0_i32 = arith.constant 0 : i32
    %2 = arith.maxsi %1, %c0_i32 : i32
    %c0_i32_0 = arith.constant 0 : i32
    %c0_i32_1 = arith.constant 0 : i32
    %c0_i32_2 = arith.constant 0 : i32
    return %arg0, %2, %c0_i32_0, %c0_i32_1 : i32, i32, i32, i32
  }
  func.func @transform_4(%arg0: i32, %arg1: i32) -> (i32, i32, i32, i32) {
    %c16_i32 = arith.constant 16 : i32
    %0 = arith.muli %arg1, %c16_i32 : i32
    %c16_i32_0 = arith.constant 16 : i32
    %1 = arith.addi %0, %c16_i32_0 : i32
    %c15_i32 = arith.constant 15 : i32
    %2 = arith.minsi %1, %c15_i32 : i32
    %c0_i32 = arith.constant 0 : i32
    %c0_i32_1 = arith.constant 0 : i32
    %c0_i32_2 = arith.constant 0 : i32
    return %arg0, %2, %c0_i32, %c0_i32_1 : i32, i32, i32, i32
  }
  func.func @transform_5(%arg0: i32, %arg1: i32) -> (i32, i32) {
    %c0_i32 = arith.constant 0 : i32
    %c0_i32_0 = arith.constant 0 : i32
    %c0_i32_1 = arith.constant 0 : i32
    return %c0_i32, %c0_i32_0 : i32, i32
  }
  func.func @transform_6(%arg0: i32, %arg1: i32) -> (i32, i32, i32, i32) {
    %c0_i32 = arith.constant 0 : i32
    %c0_i32_0 = arith.constant 0 : i32
    %c0_i32_1 = arith.constant 0 : i32
    return %arg0, %arg1, %c0_i32, %c0_i32_0 : i32, i32, i32, i32
  }
  func.func @transform_7(%arg0: i32, %arg1: i32) -> (i32, i32, i32) {
    %c0_i32 = arith.constant 0 : i32
    %c0_i32_0 = arith.constant 0 : i32
    %c0_i32_1 = arith.constant 0 : i32
    return %arg0, %c0_i32, %c0_i32_0 : i32, i32, i32
  }
}

module attributes {stable_mosaic.version = 11 : i64} {
  func.func @_bn_relu_kernel(%arg0: i32, %arg1: memref<32x512xbf16, #tpu.memory_space<vmem>>, %arg2: memref<1x512xf32, #tpu.memory_space<vmem>>, %arg3: memref<1x512xf32, #tpu.memory_space<vmem>>, %arg4: memref<32x512xf32, #tpu.memory_space<vmem>>) attributes {dimension_semantics = [#tpu.dimension_semantics<parallel>], iteration_bounds = array<i64: 1>, scalar_prefetch = 0 : i64, scratch_operands = 0 : i64, tpu.core_type = #tpu.core_type<tc>, window_params = [{transform_indices = @transform_0, window_bounds = array<i64: 32, 512>}, {pipeline_mode = #tpu.pipeline_mode<synchronous>, transform_indices = @transform_1, window_bounds = array<i64: 1, 512>}, {pipeline_mode = #tpu.pipeline_mode<synchronous>, transform_indices = @transform_2, window_bounds = array<i64: 1, 512>}, {transform_indices = @transform_3, window_bounds = array<i64: 32, 512>}]} {
    %c0 = arith.constant 0 : index
    %c0_0 = arith.constant 0 : index
    %0 = vector.load %arg1[%c0, %c0_0] : memref<32x512xbf16, #tpu.memory_space<vmem>>, vector<32x512xbf16>
    %1 = arith.extf %0 : vector<32x512xbf16> to vector<32x512xf32>
    %c0_1 = arith.constant 0 : index
    %c0_2 = arith.constant 0 : index
    %2 = vector.load %arg2[%c0_1, %c0_2] : memref<1x512xf32, #tpu.memory_space<vmem>>, vector<1x512xf32>
    %3 = vector.broadcast %2 : vector<1x512xf32> to vector<32x512xf32>
    %4 = arith.mulf %1, %3 : vector<32x512xf32>
    %c0_3 = arith.constant 0 : index
    %c0_4 = arith.constant 0 : index
    %5 = vector.load %arg3[%c0_3, %c0_4] : memref<1x512xf32, #tpu.memory_space<vmem>>, vector<1x512xf32>
    %6 = vector.broadcast %5 : vector<1x512xf32> to vector<32x512xf32>
    %7 = arith.addf %4, %6 : vector<32x512xf32>
    %cst = arith.constant 0.000000e+00 : f32
    %8 = vector.broadcast %cst : f32 to vector<32x512xf32>
    %9 = arith.maximumf %7, %8 : vector<32x512xf32>
    %c0_5 = arith.constant 0 : index
    %c0_6 = arith.constant 0 : index
    %10 = vector.load %arg4[%c0_5, %c0_6] : memref<32x512xf32, #tpu.memory_space<vmem>>, vector<32x512xf32>
    tpu.vector_store %arg4[%c0_5, %c0_6], %9 {strides = array<i32>} : memref<32x512xf32, #tpu.memory_space<vmem>>, vector<32x512xf32>,
    return
  }
  func.func @transform_0(%arg0: i32) -> (i32, i32) {
    %c0_i32 = arith.constant 0 : i32
    %c0_i32_0 = arith.constant 0 : i32
    return %arg0, %c0_i32 : i32, i32
  }
  func.func @transform_1(%arg0: i32) -> (i32, i32) {
    %c0_i32 = arith.constant 0 : i32
    %c0_i32_0 = arith.constant 0 : i32
    %c0_i32_1 = arith.constant 0 : i32
    return %c0_i32, %c0_i32_0 : i32, i32
  }
  func.func @transform_2(%arg0: i32) -> (i32, i32) {
    %c0_i32 = arith.constant 0 : i32
    %c0_i32_0 = arith.constant 0 : i32
    %c0_i32_1 = arith.constant 0 : i32
    return %c0_i32, %c0_i32_0 : i32, i32
  }
  func.func @transform_3(%arg0: i32) -> (i32, i32) {
    %c0_i32 = arith.constant 0 : i32
    %c0_i32_0 = arith.constant 0 : i32
    return %arg0, %c0_i32 : i32, i32
  }
}

module attributes {stable_mosaic.version = 11 : i64} {
  func.func @_conv3x3_kernel(%arg0: i32, %arg1: i32, %arg2: memref<1x32xf32, #tpu.memory_space<vmem>>, %arg3: memref<1x32xf32, #tpu.memory_space<vmem>>, %arg4: memref<1x16x16x32xbf16, #tpu.memory_space<vmem>>, %arg5: memref<1x1x16x32xbf16, #tpu.memory_space<vmem>>, %arg6: memref<1x1x16x32xbf16, #tpu.memory_space<vmem>>, %arg7: memref<288x32xbf16, #tpu.memory_space<vmem>>, %arg8: memref<1x16x16x32xbf16, #tpu.memory_space<vmem>>, %arg9: memref<1x2x32xf32, #tpu.memory_space<vmem>>) attributes {dimension_semantics = [#tpu.dimension_semantics<parallel>, #tpu.dimension_semantics<arbitrary>], iteration_bounds = array<i64: 2, 1>, scalar_prefetch = 0 : i64, scratch_operands = 0 : i64, tpu.core_type = #tpu.core_type<tc>, window_params = [{pipeline_mode = #tpu.pipeline_mode<synchronous>, transform_indices = @transform_0, window_bounds = array<i64: 1, 32>}, {pipeline_mode = #tpu.pipeline_mode<synchronous>, transform_indices = @transform_1, window_bounds = array<i64: 1, 32>}, {transform_indices = @transform_2, window_bounds = array<i64: 1, 16, 16, 32>}, {transform_indices = @transform_3, window_bounds = array<i64: 1, 1, 16, 32>}, {transform_indices = @transform_4, window_bounds = array<i64: 1, 1, 16, 32>}, {pipeline_mode = #tpu.pipeline_mode<synchronous>, transform_indices = @transform_5, window_bounds = array<i64: 288, 32>}, {transform_indices = @transform_6, window_bounds = array<i64: 1, 16, 16, 32>}, {transform_indices = @transform_7, window_bounds = array<i64: 1, 2, 32>}]} {
    %c0_i32 = arith.constant 0 : i32
    %0 = arith.cmpi eq, %arg1, %c0_i32 : i32
    %1 = arith.extui %0 : i1 to i32
    %c0_i32_0 = arith.constant 0 : i32
    %2 = arith.cmpi ne, %1, %c0_i32_0 : i32
    scf.if %2 {
      %cst_44 = arith.constant 0.000000e+00 : f32
      %94 = vector.broadcast %cst_44 : f32 to vector<1x2x32xf32>
      %c0_45 = arith.constant 0 : index
      %c0_46 = arith.constant 0 : index
      %c0_47 = arith.constant 0 : index
      %95 = vector.load %arg9[%c0_45, %c0_46, %c0_47] : memref<1x2x32xf32, #tpu.memory_space<vmem>>, vector<1x2x32xf32>
      tpu.vector_store %arg9[%c0_45, %c0_46, %c0_47], %94 {strides = array<i32>} : memref<1x2x32xf32, #tpu.memory_space<vmem>>, vector<1x2x32xf32>,
    } else {
    }
    %c0 = arith.constant 0 : index
    %c0_1 = arith.constant 0 : index
    %c0_2 = arith.constant 0 : index
    %c0_3 = arith.constant 0 : index
    %3 = vector.load %arg4[%c0, %c0_1, %c0_2, %c0_3] : memref<1x16x16x32xbf16, #tpu.memory_space<vmem>>, vector<1x16x16x32xbf16>
    %4 = vector.shape_cast %3 : vector<1x16x16x32xbf16> to vector<16x16x32xbf16>
    %5 = arith.extf %4 : vector<16x16x32xbf16> to vector<16x16x32xf32>
    %c0_4 = arith.constant 0 : index
    %c0_5 = arith.constant 0 : index
    %6 = vector.load %arg2[%c0_4, %c0_5] : memref<1x32xf32, #tpu.memory_space<vmem>>, vector<1x32xf32>
    %7 = vector.shape_cast %6 : vector<1x32xf32> to vector<1x1x32xf32>
    %8 = vector.broadcast %7 : vector<1x1x32xf32> to vector<16x16x32xf32>
    %9 = arith.mulf %5, %8 : vector<16x16x32xf32>
    %c0_6 = arith.constant 0 : index
    %c0_7 = arith.constant 0 : index
    %10 = vector.load %arg3[%c0_6, %c0_7] : memref<1x32xf32, #tpu.memory_space<vmem>>, vector<1x32xf32>
    %11 = vector.shape_cast %10 : vector<1x32xf32> to vector<1x1x32xf32>
    %12 = vector.broadcast %11 : vector<1x1x32xf32> to vector<16x16x32xf32>
    %13 = arith.addf %9, %12 : vector<16x16x32xf32>
    %cst = arith.constant 0.000000e+00 : f32
    %14 = vector.broadcast %cst : f32 to vector<16x16x32xf32>
    %15 = arith.maximumf %13, %14 : vector<16x16x32xf32>
    %16 = arith.truncf %15 : vector<16x16x32xf32> to vector<16x16x32xbf16>
    %c0_8 = arith.constant 0 : index
    %c0_9 = arith.constant 0 : index
    %c0_10 = arith.constant 0 : index
    %c0_11 = arith.constant 0 : index
    %17 = vector.load %arg5[%c0_8, %c0_9, %c0_10, %c0_11] : memref<1x1x16x32xbf16, #tpu.memory_space<vmem>>, vector<1x1x16x32xbf16>
    %18 = vector.shape_cast %17 : vector<1x1x16x32xbf16> to vector<1x16x32xbf16>
    %c0_i32_12 = arith.constant 0 : i32
    %19 = arith.cmpi sgt, %arg1, %c0_i32_12 : i32
    %20 = arith.extui %19 : i1 to i32
    %21 = arith.sitofp %20 : i32 to f32
    %22 = arith.extf %18 : vector<1x16x32xbf16> to vector<1x16x32xf32>
    %c0_13 = arith.constant 0 : index
    %c0_14 = arith.constant 0 : index
    %23 = vector.load %arg2[%c0_13, %c0_14] : memref<1x32xf32, #tpu.memory_space<vmem>>, vector<1x32xf32>
    %24 = vector.shape_cast %23 : vector<1x32xf32> to vector<1x1x32xf32>
    %25 = vector.broadcast %24 : vector<1x1x32xf32> to vector<1x16x32xf32>
    %26 = arith.mulf %22, %25 : vector<1x16x32xf32>
    %c0_15 = arith.constant 0 : index
    %c0_16 = arith.constant 0 : index
    %27 = vector.load %arg3[%c0_15, %c0_16] : memref<1x32xf32, #tpu.memory_space<vmem>>, vector<1x32xf32>
    %28 = vector.shape_cast %27 : vector<1x32xf32> to vector<1x1x32xf32>
    %29 = vector.broadcast %28 : vector<1x1x32xf32> to vector<1x16x32xf32>
    %30 = arith.addf %26, %29 : vector<1x16x32xf32>
    %cst_17 = arith.constant 0.000000e+00 : f32
    %31 = vector.broadcast %cst_17 : f32 to vector<1x16x32xf32>
    %32 = arith.maximumf %30, %31 : vector<1x16x32xf32>
    %33 = vector.broadcast %21 : f32 to vector<1x16x32xf32>
    %34 = arith.mulf %32, %33 : vector<1x16x32xf32>
    %35 = arith.truncf %34 : vector<1x16x32xf32> to vector<1x16x32xbf16>
    %c0_18 = arith.constant 0 : index
    %c0_19 = arith.constant 0 : index
    %c0_20 = arith.constant 0 : index
    %c0_21 = arith.constant 0 : index
    %36 = vector.load %arg6[%c0_18, %c0_19, %c0_20, %c0_21] : memref<1x1x16x32xbf16, #tpu.memory_space<vmem>>, vector<1x1x16x32xbf16>
    %37 = vector.shape_cast %36 : vector<1x1x16x32xbf16> to vector<1x16x32xbf16>
    %c0_i32_22 = arith.constant 0 : i32
    %38 = arith.cmpi slt, %arg1, %c0_i32_22 : i32
    %39 = arith.extui %38 : i1 to i32
    %40 = arith.sitofp %39 : i32 to f32
    %41 = arith.extf %37 : vector<1x16x32xbf16> to vector<1x16x32xf32>
    %c0_23 = arith.constant 0 : index
    %c0_24 = arith.constant 0 : index
    %42 = vector.load %arg2[%c0_23, %c0_24] : memref<1x32xf32, #tpu.memory_space<vmem>>, vector<1x32xf32>
    %43 = vector.shape_cast %42 : vector<1x32xf32> to vector<1x1x32xf32>
    %44 = vector.broadcast %43 : vector<1x1x32xf32> to vector<1x16x32xf32>
    %45 = arith.mulf %41, %44 : vector<1x16x32xf32>
    %c0_25 = arith.constant 0 : index
    %c0_26 = arith.constant 0 : index
    %46 = vector.load %arg3[%c0_25, %c0_26] : memref<1x32xf32, #tpu.memory_space<vmem>>, vector<1x32xf32>
    %47 = vector.shape_cast %46 : vector<1x32xf32> to vector<1x1x32xf32>
    %48 = vector.broadcast %47 : vector<1x1x32xf32> to vector<1x16x32xf32>
    %49 = arith.addf %45, %48 : vector<1x16x32xf32>
    %cst_27 = arith.constant 0.000000e+00 : f32
    %50 = vector.broadcast %cst_27 : f32 to vector<1x16x32xf32>
    %51 = arith.maximumf %49, %50 : vector<1x16x32xf32>
    %52 = vector.broadcast %40 : f32 to vector<1x16x32xf32>
    %53 = arith.mulf %51, %52 : vector<1x16x32xf32>
    %54 = arith.truncf %53 : vector<1x16x32xf32> to vector<1x16x32xbf16>
    %55 = tpu.concatenate %35, %16, %54 in 0 : vector<1x16x32xbf16>, vector<16x16x32xbf16>, vector<1x16x32xbf16> -> vector<18x16x32xbf16>
    %cst_28 = arith.constant 0.000000e+00 : bf16
    %56 = vector.broadcast %cst_28 : bf16 to vector<18x1x32xbf16>
    %57 = tpu.concatenate %56, %55, %56 in 1 : vector<18x1x32xbf16>, vector<18x16x32xbf16>, vector<18x1x32xbf16> -> vector<18x18x32xbf16>
    %58 = vector.extract_strided_slice %57 {offsets = [0, 0, 0], sizes = [16, 16, 32], strides = [1, 1, 1]} : vector<18x18x32xbf16> to vector<16x16x32xbf16>
    %59 = vector.shape_cast %58 : vector<16x16x32xbf16> to vector<256x32xbf16>
    %60 = vector.extract_strided_slice %57 {offsets = [0, 1, 0], sizes = [16, 16, 32], strides = [1, 1, 1]} : vector<18x18x32xbf16> to vector<16x16x32xbf16>
    %61 = vector.shape_cast %60 : vector<16x16x32xbf16> to vector<256x32xbf16>
    %62 = vector.extract_strided_slice %57 {offsets = [0, 2, 0], sizes = [16, 16, 32], strides = [1, 1, 1]} : vector<18x18x32xbf16> to vector<16x16x32xbf16>
    %63 = vector.shape_cast %62 : vector<16x16x32xbf16> to vector<256x32xbf16>
    %64 = vector.extract_strided_slice %57 {offsets = [1, 0, 0], sizes = [16, 16, 32], strides = [1, 1, 1]} : vector<18x18x32xbf16> to vector<16x16x32xbf16>
    %65 = vector.shape_cast %64 : vector<16x16x32xbf16> to vector<256x32xbf16>
    %66 = vector.extract_strided_slice %57 {offsets = [1, 1, 0], sizes = [16, 16, 32], strides = [1, 1, 1]} : vector<18x18x32xbf16> to vector<16x16x32xbf16>
    %67 = vector.shape_cast %66 : vector<16x16x32xbf16> to vector<256x32xbf16>
    %68 = vector.extract_strided_slice %57 {offsets = [1, 2, 0], sizes = [16, 16, 32], strides = [1, 1, 1]} : vector<18x18x32xbf16> to vector<16x16x32xbf16>
    %69 = vector.shape_cast %68 : vector<16x16x32xbf16> to vector<256x32xbf16>
    %70 = vector.extract_strided_slice %57 {offsets = [2, 0, 0], sizes = [16, 16, 32], strides = [1, 1, 1]} : vector<18x18x32xbf16> to vector<16x16x32xbf16>
    %71 = vector.shape_cast %70 : vector<16x16x32xbf16> to vector<256x32xbf16>
    %72 = vector.extract_strided_slice %57 {offsets = [2, 1, 0], sizes = [16, 16, 32], strides = [1, 1, 1]} : vector<18x18x32xbf16> to vector<16x16x32xbf16>
    %73 = vector.shape_cast %72 : vector<16x16x32xbf16> to vector<256x32xbf16>
    %74 = vector.extract_strided_slice %57 {offsets = [2, 2, 0], sizes = [16, 16, 32], strides = [1, 1, 1]} : vector<18x18x32xbf16> to vector<16x16x32xbf16>
    %75 = vector.shape_cast %74 : vector<16x16x32xbf16> to vector<256x32xbf16>
    %76 = tpu.concatenate %59, %61, %63, %65, %67, %69, %71, %73, %75 in 1 : vector<256x32xbf16>, vector<256x32xbf16>, vector<256x32xbf16>, vector<256x32xbf16>, vector<256x32xbf16>, vector<256x32xbf16>, vector<256x32xbf16>, vector<256x32xbf16>, vector<256x32xbf16> -> vector<256x288xbf16>
    %c0_29 = arith.constant 0 : index
    %c0_30 = arith.constant 0 : index
    %77 = vector.load %arg7[%c0_29, %c0_30] : memref<288x32xbf16, #tpu.memory_space<vmem>>, vector<288x32xbf16>
    %cst_31 = arith.constant dense<0.000000e+00> : vector<256x32xf32>
    %78 = tpu.matmul %76, %77, %cst_31 {dimension_numbers = #tpu.dot_dimension_numbers<[1], [0], [0], [1], [0, 0, 1, 1], [], []>} : vector<256x288xbf16>, vector<288x32xbf16>, vector<256x32xf32> -> vector<256x32xf32>
    %79 = vector.shape_cast %78 : vector<256x32xf32> to vector<16x16x32xf32>
    %80 = arith.truncf %79 : vector<16x16x32xf32> to vector<16x16x32xbf16>
    %c0_32 = arith.constant 0 : index
    %c0_33 = arith.constant 0 : index
    %c0_34 = arith.constant 0 : index
    %c0_35 = arith.constant 0 : index
    %81 = vector.load %arg8[%c0_32, %c0_33, %c0_34, %c0_35] : memref<1x16x16x32xbf16, #tpu.memory_space<vmem>>, vector<1x16x16x32xbf16>
    %82 = vector.shape_cast %81 : vector<1x16x16x32xbf16> to vector<16x16x32xbf16>
    %83 = vector.shape_cast %80 : vector<16x16x32xbf16> to vector<1x16x16x32xbf16>
    tpu.vector_store %arg8[%c0_32, %c0_33, %c0_34, %c0_35], %83 {strides = array<i32>} : memref<1x16x16x32xbf16, #tpu.memory_space<vmem>>, vector<1x16x16x32xbf16>,
    %cst_36 = arith.constant dense<0.000000e+00> : vector<32xf32>
    %84 = vector.multi_reduction <add>, %78, %cst_36 [0] : vector<256x32xf32> to vector<32xf32>
    %85 = vector.shape_cast %84 : vector<32xf32> to vector<1x32xf32>
    %86 = arith.mulf %78, %78 : vector<256x32xf32>
    %cst_37 = arith.constant dense<0.000000e+00> : vector<32xf32>
    %87 = vector.multi_reduction <add>, %86, %cst_37 [0] : vector<256x32xf32> to vector<32xf32>
    %88 = vector.shape_cast %87 : vector<32xf32> to vector<1x32xf32>
    %c0_38 = arith.constant 0 : index
    %c0_39 = arith.constant 0 : index
    %c0_40 = arith.constant 0 : index
    %89 = vector.load %arg9[%c0_38, %c0_39, %c0_40] : memref<1x2x32xf32, #tpu.memory_space<vmem>>, vector<1x2x32xf32>
    %90 = tpu.concatenate %85, %88 in 0 : vector<1x32xf32>, vector<1x32xf32> -> vector<2x32xf32>
    %91 = vector.shape_cast %90 : vector<2x32xf32> to vector<1x2x32xf32>
    %92 = arith.addf %89, %91 : vector<1x2x32xf32>
    %c0_41 = arith.constant 0 : index
    %c0_42 = arith.constant 0 : index
    %c0_43 = arith.constant 0 : index
    %93 = vector.load %arg9[%c0_41, %c0_42, %c0_43] : memref<1x2x32xf32, #tpu.memory_space<vmem>>, vector<1x2x32xf32>
    tpu.vector_store %arg9[%c0_41, %c0_42, %c0_43], %92 {strides = array<i32>} : memref<1x2x32xf32, #tpu.memory_space<vmem>>, vector<1x2x32xf32>,
    return
  }
  func.func @transform_0(%arg0: i32, %arg1: i32) -> (i32, i32) {
    %c0_i32 = arith.constant 0 : i32
    %c0_i32_0 = arith.constant 0 : i32
    %c0_i32_1 = arith.constant 0 : i32
    return %c0_i32, %c0_i32_0 : i32, i32
  }
  func.func @transform_1(%arg0: i32, %arg1: i32) -> (i32, i32) {
    %c0_i32 = arith.constant 0 : i32
    %c0_i32_0 = arith.constant 0 : i32
    %c0_i32_1 = arith.constant 0 : i32
    return %c0_i32, %c0_i32_0 : i32, i32
  }
  func.func @transform_2(%arg0: i32, %arg1: i32) -> (i32, i32, i32, i32) {
    %c0_i32 = arith.constant 0 : i32
    %c0_i32_0 = arith.constant 0 : i32
    %c0_i32_1 = arith.constant 0 : i32
    return %arg0, %arg1, %c0_i32, %c0_i32_0 : i32, i32, i32, i32
  }
  func.func @transform_3(%arg0: i32, %arg1: i32) -> (i32, i32, i32, i32) {
    %c16_i32 = arith.constant 16 : i32
    %0 = arith.muli %arg1, %c16_i32 : i32
    %c1_i32 = arith.constant 1 : i32
    %1 = arith.subi %0, %c1_i32 : i32
    %c0_i32 = arith.constant 0 : i32
    %2 = arith.maxsi %1, %c0_i32 : i32
    %c0_i32_0 = arith.constant 0 : i32
    %c0_i32_1 = arith.constant 0 : i32
    %c0_i32_2 = arith.constant 0 : i32
    return %arg0, %2, %c0_i32_0, %c0_i32_1 : i32, i32, i32, i32
  }
  func.func @transform_4(%arg0: i32, %arg1: i32) -> (i32, i32, i32, i32) {
    %c16_i32 = arith.constant 16 : i32
    %0 = arith.muli %arg1, %c16_i32 : i32
    %c16_i32_0 = arith.constant 16 : i32
    %1 = arith.addi %0, %c16_i32_0 : i32
    %c15_i32 = arith.constant 15 : i32
    %2 = arith.minsi %1, %c15_i32 : i32
    %c0_i32 = arith.constant 0 : i32
    %c0_i32_1 = arith.constant 0 : i32
    %c0_i32_2 = arith.constant 0 : i32
    return %arg0, %2, %c0_i32, %c0_i32_1 : i32, i32, i32, i32
  }
  func.func @transform_5(%arg0: i32, %arg1: i32) -> (i32, i32) {
    %c0_i32 = arith.constant 0 : i32
    %c0_i32_0 = arith.constant 0 : i32
    %c0_i32_1 = arith.constant 0 : i32
    return %c0_i32, %c0_i32_0 : i32, i32
  }
  func.func @transform_6(%arg0: i32, %arg1: i32) -> (i32, i32, i32, i32) {
    %c0_i32 = arith.constant 0 : i32
    %c0_i32_0 = arith.constant 0 : i32
    %c0_i32_1 = arith.constant 0 : i32
    return %arg0, %arg1, %c0_i32, %c0_i32_0 : i32, i32, i32, i32
  }
  func.func @transform_7(%arg0: i32, %arg1: i32) -> (i32, i32, i32) {
    %c0_i32 = arith.constant 0 : i32
    %c0_i32_0 = arith.constant 0 : i32
    %c0_i32_1 = arith.constant 0 : i32
    return %arg0, %c0_i32, %c0_i32_0 : i32, i32, i32
  }
}

</mosaic_0001>

<llo_original>
// kernel: unet_conv_forward.5
$region0: #{unet_conv_forward.5}
  #allocation0 [shape = 'u32[]', space=smem, size = 0x4, offset = 0x4, fixed_abs, tag = 'smem constant byte address 0x4 - core index']
  #allocation1 [shape = 'u32[144,128]{1,0:T(1,128)}', space=vmem, size = 0x12000, scoped, tag = 'internal scratch']
  %s0 = inlined_call_operand.vmem [shape: bf16[32,512], index: 0, kind: input, shape index: {}]
  %s1 = inlined_call_operand.vmem [shape: f32[1,512], index: 1, kind: input, shape index: {}]
  %s2 = inlined_call_operand.vmem [shape: f32[1,512], index: 2, kind: input, shape index: {}]
  %s3 = inlined_call_operand.vmem [shape: f32[32,512], index: 3, kind: output, shape index: {}]
  %s4 = sld [smem:[#allocation0]]
  $region22: #{unet_conv_forward.5} parent=0
    _
  %s6 = ssub.s32 1, %s4
  %s7 = scalar_select 0, %s6, %s4
  // Predicated region
  $region2: #{unet_conv_forward.5} parent=0 // pred_check
    _
  $region3: #{unet_conv_forward.5} parent=0 // pred_check_branch
    %9 = sbr.rel (0) target = $region5
  $region4: #{unet_conv_forward.5} parent=0 // pred_region
    _
  $region5: #{unet_conv_forward.5} parent=0 // pred_fallthru
    _
  // Predicated region
  $region6: #{unet_conv_forward.5} parent=0 // pred_check
    _
  $region7: #{unet_conv_forward.5} parent=0 // pred_check_branch
    %11 = sbr.rel (0) target = $region9
  $region8: #{unet_conv_forward.5} parent=0 // pred_region
    _
  $region9: #{unet_conv_forward.5} parent=0 // pred_fallthru
    _
  // Predicated region
  $region10: #{unet_conv_forward.5} parent=0 // pred_check
    _
  $region11: #{unet_conv_forward.5} parent=0 // pred_check_branch
    %13 = sbr.rel (0) target = $region13
  $region12: #{unet_conv_forward.5} parent=0 // pred_region
    _
  $region13: #{unet_conv_forward.5} parent=0 // pred_fallthru
    _
  %v14 = vld [vmem:[%s0] sm:$0xff]
  %v15 = vld [vmem:[%s0 + $0x8] sm:$0xff]
  %v16 = vld [vmem:[%s0 + $0x10] sm:$0xff]
  %v17 = vld [vmem:[%s0 + $0x18] sm:$0xff]
  %v18 = vld [vmem:[%s0 + $0x20] sm:$0xff]
  %v19 = vld [vmem:[%s0 + $0x28] sm:$0xff]
  %v20 = vld [vmem:[%s0 + $0x30] sm:$0xff]
  %v21 = vld [vmem:[%s0 + $0x38] sm:$0xff]
  %v22 = vunpack.c.l.bf16 %v14
  %v23 = vunpack.c.h.bf16 %v14
  %v24 = vunpack.c.l.bf16 %v15
  %v25 = vunpack.c.h.bf16 %v15
  %v26 = vunpack.c.l.bf16 %v16
  %v27 = vunpack.c.h.bf16 %v16
  %v28 = vunpack.c.l.bf16 %v17
  %v29 = vunpack.c.h.bf16 %v17
  %v30 = vunpack.c.l.bf16 %v18
  %v31 = vunpack.c.h.bf16 %v18
  %v32 = vunpack.c.l.bf16 %v19
  %v33 = vunpack.c.h.bf16 %v19
  %v34 = vunpack.c.l.bf16 %v20
  %v35 = vunpack.c.h.bf16 %v20
  %v36 = vunpack.c.l.bf16 %v21
  %v37 = vunpack.c.h.bf16 %v21
  %v38 = vld [vmem:[%s1] sm:$0xf]
  %v40 = vlaneseq
  %v41 = vshrl.u32 %v40, 7
  %v42 = vsub.s32 0, %v41
  %v43 = vrot.slane %v38, %v42
  %v44 = vlaneseq
  %v45 = vshrl.u32 %v44, 7
  %v46 = vsub.s32 1, %v45
  %v47 = vrot.slane %v38, %v46
  %v48 = vlaneseq
  %v49 = vshrl.u32 %v48, 7
  %v50 = vsub.s32 2, %v49
  %v51 = vrot.slane %v38, %v50
  %v52 = vlaneseq
  %v53 = vshrl.u32 %v52, 7
  %v54 = vsub.s32 3, %v53
  %v55 = vrot.slane %v38, %v54
  %v60 = vmul.f32 %v22, %v43
  %v61 = vmul.f32 %v23, %v47
  %v62 = vmul.f32 %v24, %v51
  %v63 = vmul.f32 %v25, %v55
  %v64 = vmul.f32 %v26, %v43
  %v65 = vmul.f32 %v27, %v47
  %v66 = vmul.f32 %v28, %v51
  %v67 = vmul.f32 %v29, %v55
  %v68 = vmul.f32 %v30, %v43
  %v69 = vmul.f32 %v31, %v47
  %v70 = vmul.f32 %v32, %v51
  %v71 = vmul.f32 %v33, %v55
  %v72 = vmul.f32 %v34, %v43
  %v73 = vmul.f32 %v35, %v47
  %v74 = vmul.f32 %v36, %v51
  %v75 = vmul.f32 %v37, %v55
  %v76 = vld [vmem:[%s2] sm:$0xf]
  %v78 = vlaneseq
  %v79 = vshrl.u32 %v78, 7
  %v80 = vsub.s32 0, %v79
  %v81 = vrot.slane %v76, %v80
  %v82 = vlaneseq
  %v83 = vshrl.u32 %v82, 7
  %v84 = vsub.s32 1, %v83
  %v85 = vrot.slane %v76, %v84
  %v86 = vlaneseq
  %v87 = vshrl.u32 %v86, 7
  %v88 = vsub.s32 2, %v87
  %v89 = vrot.slane %v76, %v88
  %v90 = vlaneseq
  %v91 = vshrl.u32 %v90, 7
  %v92 = vsub.s32 3, %v91
  %v93 = vrot.slane %v76, %v92
  %v98 = vadd.f32 %v60, %v81
  %v99 = vadd.f32 %v61, %v85
  %v100 = vadd.f32 %v62, %v89
  %v101 = vadd.f32 %v63, %v93
  %v102 = vadd.f32 %v64, %v81
  %v103 = vadd.f32 %v65, %v85
  %v104 = vadd.f32 %v66, %v89
  %v105 = vadd.f32 %v67, %v93
  %v106 = vadd.f32 %v68, %v81
  %v107 = vadd.f32 %v69, %v85
  %v108 = vadd.f32 %v70, %v89
  %v109 = vadd.f32 %v71, %v93
  %v110 = vadd.f32 %v72, %v81
  %v111 = vadd.f32 %v73, %v85
  %v112 = vadd.f32 %v74, %v89
  %v113 = vadd.f32 %v75, %v93
  %v114 = vmax.f32 %v98, 0.0
  %v115 = vmax.f32 %v99, 0.0
  %v116 = vmax.f32 %v100, 0.0
  %v117 = vmax.f32 %v101, 0.0
  %v118 = vmax.f32 %v102, 0.0
  %v119 = vmax.f32 %v103, 0.0
  %v120 = vmax.f32 %v104, 0.0
  %v121 = vmax.f32 %v105, 0.0
  %v122 = vmax.f32 %v106, 0.0
  %v123 = vmax.f32 %v107, 0.0
  %v124 = vmax.f32 %v108, 0.0
  %v125 = vmax.f32 %v109, 0.0
  %v126 = vmax.f32 %v110, 0.0
  %v127 = vmax.f32 %v111, 0.0
  %v128 = vmax.f32 %v112, 0.0
  %v129 = vmax.f32 %v113, 0.0
  %130 = vst [vmem:[%s3] sm:$0xff] %v114
  %131 = vst [vmem:[%s3 + $0x8] sm:$0xff] %v115
  %132 = vst [vmem:[%s3 + $0x10] sm:$0xff] %v116
  %133 = vst [vmem:[%s3 + $0x18] sm:$0xff] %v117
  %134 = vst [vmem:[%s3 + $0x20] sm:$0xff] %v118
  %135 = vst [vmem:[%s3 + $0x28] sm:$0xff] %v119
  %136 = vst [vmem:[%s3 + $0x30] sm:$0xff] %v120
  %137 = vst [vmem:[%s3 + $0x38] sm:$0xff] %v121
  %138 = vst [vmem:[%s3 + $0x40] sm:$0xff] %v122
  %139 = vst [vmem:[%s3 + $0x48] sm:$0xff] %v123
  %140 = vst [vmem:[%s3 + $0x50] sm:$0xff] %v124
  %141 = vst [vmem:[%s3 + $0x58] sm:$0xff] %v125
  %142 = vst [vmem:[%s3 + $0x60] sm:$0xff] %v126
  %143 = vst [vmem:[%s3 + $0x68] sm:$0xff] %v127
  %144 = vst [vmem:[%s3 + $0x70] sm:$0xff] %v128
  %145 = vst [vmem:[%s3 + $0x78] sm:$0xff] %v129
  // Predicated region
  $region14: #{unet_conv_forward.5} parent=0 // pred_check
    _
  $region15: #{unet_conv_forward.5} parent=0 // pred_check_branch
    %147 = sbr.rel (0) target = $region17
  $region16: #{unet_conv_forward.5} parent=0 // pred_region
    _
  $region17: #{unet_conv_forward.5} parent=0 // pred_fallthru
    _
  // Predicated region
  $region18: #{unet_conv_forward.5} parent=0 // pred_check
    _
  $region19: #{unet_conv_forward.5} parent=0 // pred_check_branch
    %149 = sbr.rel (0) target = $region21
  $region20: #{unet_conv_forward.5} parent=0 // pred_region
    _
  $region21: #{unet_conv_forward.5} parent=0 // pred_fallthru
    _

// kernel: unet_conv_forward.3
$region0: #{unet_conv_forward.3}
  #allocation0 [shape = 'u32[]', space=smem, size = 0x4, offset = 0x4, fixed_abs, tag = 'smem constant byte address 0x4 - core index']
  #allocation1 [shape = 'u32[144,128]{1,0:T(1,128)}', space=vmem, size = 0x12000, scoped, tag = 'internal scratch']
  %s0 = inlined_call_operand.vmem [shape: f32[1,4], index: 0, kind: input, shape index: {}]
  %s1 = inlined_call_operand.vmem [shape: f32[1,4], index: 1, kind: input, shape index: {}]
  %s2 = inlined_call_operand.vmem [shape: f32[2,16,16,4], index: 2, kind: input, shape index: {}, may-alias: {2,3,4}]
  %s3 = inlined_call_operand.vmem [shape: f32[2,16,16,4], index: 3, kind: input, shape index: {}, may-alias: {2,3,4}]
  %s4 = inlined_call_operand.vmem [shape: f32[2,16,16,4], index: 4, kind: input, shape index: {}, may-alias: {2,3,4}]
  %s5 = inlined_call_operand.vmem [shape: bf16[36,32], index: 5, kind: input, shape index: {}]
  %s6 = inlined_call_operand.vmem [shape: bf16[2,16,16,32], index: 6, kind: output, shape index: {0}]
  %s7 = inlined_call_operand.vmem [shape: f32[2,2,32], index: 7, kind: output, shape index: {1}]
  %8 = xla_tuple %s6, %s7
  %s9 = sld [smem:[#allocation0]]
  $region69: #{unet_conv_forward.3} parent=0
    _
  %s11 = ssub.s32 1, %s9
  %s12 = scalar_select 0, %s11, %s9
  loop: start=0, step=1, limit=4
  $region2: #{unet_conv_forward.3} parent=0 // loop_pre_header
    _
  $region3: #{unet_conv_forward.3} parent=0 // loop_header
    %s14 = sphi 0, %s18
    %p15 = scmp.ge.s32.totalorder %s14, 4
    %s21 = sphi 0, %s33
    %s22 = sphi 0, %s29
    %s23 = sphi 0, %s21
    %s24 = sphi 0, %s22
    %s25 = sphi 0, %s23
    %s26 = sphi 0, %s24
    %s34 = sphi 0, %s34
    %s36 = sphi 0, %s34
    %s37 = sphi 0, %s36
    %s51 = sphi 0, %s37
    %s55 = sphi 0, %s55
    %s57 = sphi 0, %s55
    %s58 = sphi 0, %s57
    %s72 = sphi 0, %s58
    %s80 = sphi 0, %s82
    %s83 = sphi 0, %s80
    %s84 = sphi 0, %s83
    %s100 = sphi 0, %s84
    %s116 = sphi 0, %s118
    %s119 = sphi 0, %s116
    %s120 = sphi 0, %s119
    %s136 = sphi 0, %s120
    %s152 = sphi 0, %s154
    %s155 = sphi 0, %s152
    %s156 = sphi 0, %s155
    %s172 = sphi 0, %s156
    %s176 = sphi 0, %s176
    %s178 = sphi 0, %s176
    %s179 = sphi 0, %s178
    %s193 = sphi 0, %s179
    %s201 = sphi 0, %s203
    %s204 = sphi 0, %s201
    %s205 = sphi 0, %s204
    %s221 = sphi 0, %s205
    %s227 = sphi 0, %s229
    %s230 = sphi 0, %s227
    %s231 = sphi 0, %s230
    %s247 = sphi 0, %s231
  $region4: #{unet_conv_forward.3} parent=0 // loop_header_branch
    %17 = sbr.rel (%p15) target = $region8
  $region5: #{unet_conv_forward.3} parent=0 // loop_body
    %s19 = ssub.s32 %s14, 1
    %s20 = ssub.s32 %s14, 2
    %s27 = sadd.s32 1, %s22
    %p28 = scmp.ge.s32.totalorder %s27, 1
    %s29 = scalar_select %p28, 0, %s27
    %s30 = sadd.s32 1, %s21
    %s31 = scalar_select %p28, %s30, %s21
    %p32 = scmp.ge.s32.totalorder %s31, 2
    %s33 = scalar_select %p32, 0, %s31
    %s35 = sadd.s32 %s34, 1
    %p38 = scmp.eq.s32.totalorder %s14, 1
    %p39 = scmp.ne.s32.totalorder %s34, %s36
    %p40 = scmp.eq.s32.totalorder %s14, 0
    %p41 = por %p39, %p40
    %p42 = scmp.ne.s32.totalorder %s34, %s36
    %p43 = scmp.eq.s32.totalorder %s19, 1
    %p44 = por %p42, %p43
    %p45 = scmp.ne.s32.totalorder %s36, %s37
    %p46 = scmp.eq.s32.totalorder %s19, 0
    %p47 = por %p45, %p46
    %p48 = scmp.ne.s32.totalorder %s36, %s37
    %p49 = scmp.eq.s32.totalorder %s20, 1
    %p50 = por %p48, %p49
    %p52 = scmp.ne.s32.totalorder %s37, %s51
    %p53 = scmp.eq.s32.totalorder %s20, 0
    %p54 = por %p52, %p53
    %s56 = sadd.s32 %s55, 1
    %p59 = scmp.eq.s32.totalorder %s14, 1
    %p60 = scmp.ne.s32.totalorder %s55, %s57
    %p61 = scmp.eq.s32.totalorder %s14, 0
    %p62 = por %p60, %p61
    %p63 = scmp.ne.s32.totalorder %s55, %s57
    %p64 = scmp.eq.s32.totalorder %s19, 1
    %p65 = por %p63, %p64
    %p66 = scmp.ne.s32.totalorder %s57, %s58
    %p67 = scmp.eq.s32.totalorder %s19, 0
    %p68 = por %p66, %p67
    %p69 = scmp.ne.s32.totalorder %s57, %s58
    %p70 = scmp.eq.s32.totalorder %s20, 1
    %p71 = por %p69, %p70
    %p73 = scmp.ne.s32.totalorder %s58, %s72
    %p74 = scmp.eq.s32.totalorder %s20, 0
    %p75 = por %p73, %p74
    %s76 = ssub.s32 %s21, %s33
    %s77 = ssub.s32 %s22, %s29
    %s78 = sor.u32 %s76, %s77
    %p79 = scmp.eq.s32.totalorder %s78, 0
    %s81 = sadd.s32 %s80, 1
    %s82 = scalar_select %p79, %s80, %s81
    %p85 = pneg %p79
    %p86 = scmp.eq.s32.totalorder %s14, 1
    %p87 = por %p85, %p86
    %p88 = scmp.ne.s32.totalorder %s80, %s83
    %p89 = scmp.eq.s32.totalorder %s14, 0
    %p90 = por %p88, %p89
    %p91 = scmp.ne.s32.totalorder %s80, %s83
    %p92 = scmp.eq.s32.totalorder %s19, 1
    %p93 = por %p91, %p92
    %p94 = scmp.ne.s32.totalorder %s83, %s84
    %p95 = scmp.eq.s32.totalorder %s19, 0
    %p96 = por %p94, %p95
    %p97 = scmp.ne.s32.totalorder %s83, %s84
    %p98 = scmp.eq.s32.totalorder %s20, 1
    %p99 = por %p97, %p98
    %p101 = scmp.ne.s32.totalorder %s84, %s100
    %p102 = scmp.eq.s32.totalorder %s20, 0
    %p103 = por %p101, %p102
    %s104 = smul.u32 %s22, 16
    %s105 = ssub.s32 %s104, 1
    %p106 = scmp.gt.s32.totalorder %s105, 0
    %s107 = scalar_select %p106, %s105, 0
    %s108 = smul.u32 %s29, 16
    %s109 = ssub.s32 %s108, 1
    %p110 = scmp.gt.s32.totalorder %s109, 0
    %s111 = scalar_select %p110, %s109, 0
    %s112 = ssub.s32 %s21, %s33
    %s113 = ssub.s32 %s107, %s111
    %s114 = sor.u32 %s112, %s113
    %p115 = scmp.eq.s32.totalorder %s114, 0
    %s117 = sadd.s32 %s116, 1
    %s118 = scalar_select %p115, %s116, %s117
    %p121 = pneg %p115
    %p122 = scmp.eq.s32.totalorder %s14, 1
    %p123 = por %p121, %p122
    %p124 = scmp.ne.s32.totalorder %s116, %s119
    %p125 = scmp.eq.s32.totalorder %s14, 0
    %p126 = por %p124, %p125
    %p127 = scmp.ne.s32.totalorder %s116, %s119
    %p128 = scmp.eq.s32.totalorder %s19, 1
    %p129 = por %p127, %p128
    %p130 = scmp.ne.s32.totalorder %s119, %s120
    %p131 = scmp.eq.s32.totalorder %s19, 0
    %p132 = por %p130, %p131
    %p133 = scmp.ne.s32.totalorder %s119, %s120
    %p134 = scmp.eq.s32.totalorder %s20, 1
    %p135 = por %p133, %p134
    %p137 = scmp.ne.s32.totalorder %s120, %s136
    %p138 = scmp.eq.s32.totalorder %s20, 0
    %p139 = por %p137, %p138
    %s140 = smul.u32 %s22, 16
    %s141 = sadd.s32 %s140, 16
    %p142 = scmp.lt.s32.totalorder %s141, 15
    %s143 = scalar_select %p142, %s141, 15
    %s144 = smul.u32 %s29, 16
    %s145 = sadd.s32 %s144, 16
    %p146 = scmp.lt.s32.totalorder %s145, 15
    %s147 = scalar_select %p146, %s145, 15
    %s148 = ssub.s32 %s21, %s33
    %s149 = ssub.s32 %s143, %s147
    %s150 = sor.u32 %s148, %s149
    %p151 = scmp.eq.s32.totalorder %s150, 0
    %s153 = sadd.s32 %s152, 1
    %s154 = scalar_select %p151, %s152, %s153
    %p157 = pneg %p151
    %p158 = scmp.eq.s32.totalorder %s14, 1
    %p159 = por %p157, %p158
    %p160 = scmp.ne.s32.totalorder %s152, %s155
    %p161 = scmp.eq.s32.totalorder %s14, 0
    %p162 = por %p160, %p161
    %p163 = scmp.ne.s32.totalorder %s152, %s155
    %p164 = scmp.eq.s32.totalorder %s19, 1
    %p165 = por %p163, %p164
    %p166 = scmp.ne.s32.totalorder %s155, %s156
    %p167 = scmp.eq.s32.totalorder %s19, 0
    %p168 = por %p166, %p167
    %p169 = scmp.ne.s32.totalorder %s155, %s156
    %p170 = scmp.eq.s32.totalorder %s20, 1
    %p171 = por %p169, %p170
    %p173 = scmp.ne.s32.totalorder %s156, %s172
    %p174 = scmp.eq.s32.totalorder %s20, 0
    %p175 = por %p173, %p174
    %s177 = sadd.s32 %s176, 1
    %p180 = scmp.eq.s32.totalorder %s14, 1
    %p181 = scmp.ne.s32.totalorder %s176, %s178
    %p182 = scmp.eq.s32.totalorder %s14, 0
    %p183 = por %p181, %p182
    %p184 = scmp.ne.s32.totalorder %s176, %s178
    %p185 = scmp.eq.s32.totalorder %s19, 1
    %p186 = por %p184, %p185
    %p187 = scmp.ne.s32.totalorder %s178, %s179
    %p188 = scmp.eq.s32.totalorder %s19, 0
    %p189 = por %p187, %p188
    %p190 = scmp.ne.s32.totalorder %s178, %s179
    %p191 = scmp.eq.s32.totalorder %s20, 1
    %p192 = por %p190, %p191
    %p194 = scmp.ne.s32.totalorder %s179, %s193
    %p195 = scmp.eq.s32.totalorder %s20, 0
    %p196 = por %p194, %p195
    %s197 = ssub.s32 %s21, %s33
    %s198 = ssub.s32 %s22, %s29
    %s199 = sor.u32 %s197, %s198
    %p200 = scmp.eq.s32.totalorder %s199, 0
    %s202 = sadd.s32 %s201, 1
    %s203 = scalar_select %p200, %s201, %s202
    %p206 = pneg %p200
    %p207 = scmp.eq.s32.totalorder %s14, 1
    %p208 = por %p206, %p207
    %p209 = scmp.ne.s32.totalorder %s201, %s204
    %p210 = scmp.eq.s32.totalorder %s14, 0
    %p211 = por %p209, %p210
    %p212 = scmp.ne.s32.totalorder %s201, %s204
    %p213 = scmp.eq.s32.totalorder %s19, 1
    %p214 = por %p212, %p213
    %p215 = scmp.ne.s32.totalorder %s204, %s205
    %p216 = scmp.eq.s32.totalorder %s19, 0
    %p217 = por %p215, %p216
    %p218 = scmp.ne.s32.totalorder %s204, %s205
    %p219 = scmp.eq.s32.totalorder %s20, 1
    %p220 = por %p218, %p219
    %p222 = scmp.ne.s32.totalorder %s205, %s221
    %p223 = scmp.eq.s32.totalorder %s20, 0
    %p224 = por %p222, %p223
    %s225 = ssub.s32 %s21, %s33
    %p226 = scmp.eq.s32.totalorder %s225, 0
    %s228 = sadd.s32 %s227, 1
    %s229 = scalar_select %p226, %s227, %s228
    %p232 = pneg %p226
    %p233 = scmp.eq.s32.totalorder %s14, 1
    %p234 = por %p232, %p233
    %p235 = scmp.ne.s32.totalorder %s227, %s230
    %p236 = scmp.eq.s32.totalorder %s14, 0
    %p237 = por %p235, %p236
    %p238 = scmp.ne.s32.totalorder %s227, %s230
    %p239 = scmp.eq.s32.totalorder %s19, 1
    %p240 = por %p238, %p239
    %p241 = scmp.ne.s32.totalorder %s230, %s231
    %p242 = scmp.eq.s32.totalorder %s19, 0
    %p243 = por %p241, %p242
    %p244 = scmp.ne.s32.totalorder %s230, %s231
    %p245 = scmp.eq.s32.totalorder %s20, 1
    %p246 = por %p244, %p245
    %p248 = scmp.ne.s32.totalorder %s231, %s247
    %p249 = scmp.eq.s32.totalorder %s20, 0
    %p250 = por %p248, %p249
    %p251 = scmp.le.s32.totalorder 1, %s14
    %p252 = scmp.lt.s32.totalorder %s14, 3
    %p253 = pnand %p251, %p252
    %p254 = pneg %p253
    // Predicated region
    $region9: #{unet_conv_forward.3} parent=5 // pred_check
      _
    $region10: #{unet_conv_forward.3} parent=5 // pred_check_branch
      %256 = sbr.rel (%p253) target = $region12
    $region11: #{unet_conv_forward.3} parent=5 // pred_region
      %s257 = ssub.s32 %s14, 1
      // Predicated region
      $region13: #{unet_conv_forward.3} parent=11 // pred_check
        %p258 = pneg %p47
      $region14: #{unet_conv_forward.3} parent=11 // pred_check_branch
        %260 = sbr.rel (%p258) target = $region16
      $region15: #{unet_conv_forward.3} parent=11 // pred_region
        _
      $region16: #{unet_conv_forward.3} parent=11 // pred_fallthru
        _
      // Predicated region
      $region17: #{unet_conv_forward.3} parent=11 // pred_check
        %p261 = pneg %p68
      $region18: #{unet_conv_forward.3} parent=11 // pred_check_branch
        %263 = sbr.rel (%p261) target = $region20
      $region19: #{unet_conv_forward.3} parent=11 // pred_region
        _
      $region20: #{unet_conv_forward.3} parent=11 // pred_fallthru
        _
      // Predicated region
      $region21: #{unet_conv_forward.3} parent=11 // pred_check
        %p264 = pneg %p189
      $region22: #{unet_conv_forward.3} parent=11 // pred_check_branch
        %266 = sbr.rel (%p264) target = $region24
      $region23: #{unet_conv_forward.3} parent=11 // pred_region
        _
      $region24: #{unet_conv_forward.3} parent=11 // pred_fallthru
        _
    $region12: #{unet_conv_forward.3} parent=5 // pred_fallthru
      _
    %p267 = scmp.lt.s32.totalorder %s14, 2
    // Predicated region
    $region25: #{unet_conv_forward.3} parent=5 // pred_check
      %p268 = pneg %p267
    $region26: #{unet_conv_forward.3} parent=5 // pred_check_branch
      %270 = sbr.rel (%p268) target = $region28
    $region27: #{unet_conv_forward.3} parent=5 // pred_region
      // Predicated region
      $region29: #{unet_conv_forward.3} parent=27 // pred_check
        %p271 = pneg %p90
      $region30: #{unet_conv_forward.3} parent=27 // pred_check_branch
        %273 = sbr.rel (%p271) target = $region32
      $region31: #{unet_conv_forward.3} parent=27 // pred_region
        %s274 = smul.u32 16, %s22
        %p275 = scmp.lt.s32.totalorder %s21, 1
        %s276 = scalar_select %p275, %s21, 1
        %p277 = scmp.lt.s32.totalorder %s274, 15
        %s278 = scalar_select %p277, %s274, 15
        %s279 = smul.addr %s278, 2
        %s280 = smul.addr %s276, 32
        %s281 = sadd.s32 %s279, %s280
        %s282 = smul.addr %s281, 8
        %s283 = scalar_lea.vmem %s2, %s282
        %s284 = smul.u32 16, %s22
      $region32: #{unet_conv_forward.3} parent=27 // pred_fallthru
        _
      // Predicated region
      $region33: #{unet_conv_forward.3} parent=27 // pred_check
        %p285 = pneg %p126
      $region34: #{unet_conv_forward.3} parent=27 // pred_check_branch
        %287 = sbr.rel (%p285) target = $region36
      $region35: #{unet_conv_forward.3} parent=27 // pred_region
        %s288 = smul.u32 %s22, 16
        %s289 = ssub.s32 %s288, 1
        %p290 = scmp.gt.s32.totalorder %s289, 0
        %s291 = scalar_select %p290, %s289, 0
        %p292 = scmp.lt.s32.totalorder %s21, 1
        %s293 = scalar_select %p292, %s21, 1
        %p294 = scmp.lt.s32.totalorder %s291, 15
        %s295 = scalar_select %p294, %s291, 15
        %s296 = smul.addr %s295, 2
        %s297 = smul.addr %s293, 32
        %s298 = sadd.s32 %s296, %s297
        %s299 = smul.addr %s298, 8
        %s300 = scalar_lea.vmem %s3, %s299
        %s301 = smul.u32 %s22, 16
        %s302 = ssub.s32 %s301, 1
        %p303 = scmp.gt.s32.totalorder %s302, 0
        %s304 = scalar_select %p303, %s302, 0
      $region36: #{unet_conv_forward.3} parent=27 // pred_fallthru
        _
      // Predicated region
      $region37: #{unet_conv_forward.3} parent=27 // pred_check
        %p305 = pneg %p162
      $region38: #{unet_conv_forward.3} parent=27 // pred_check_branch
        %307 = sbr.rel (%p305) target = $region40
      $region39: #{unet_conv_forward.3} parent=27 // pred_region
        %s308 = smul.u32 %s22, 16
        %s309 = sadd.s32 %s308, 16
        %p310 = scmp.lt.s32.totalorder %s309, 15
        %s311 = scalar_select %p310, %s309, 15
        %p312 = scmp.lt.s32.totalorder %s21, 1
        %s313 = scalar_select %p312, %s21, 1
        %p314 = scmp.lt.s32.totalorder %s311, 15
        %s315 = scalar_select %p314, %s311, 15
        %s316 = smul.addr %s315, 2
        %s317 = smul.addr %s313, 32
        %s318 = sadd.s32 %s316, %s317
        %s319 = smul.addr %s318, 8
        %s320 = scalar_lea.vmem %s4, %s319
        %s321 = smul.u32 %s22, 16
        %s322 = sadd.s32 %s321, 16
        %p323 = scmp.lt.s32.totalorder %s322, 15
        %s324 = scalar_select %p323, %s322, 15
      $region40: #{unet_conv_forward.3} parent=27 // pred_fallthru
        _
    $region28: #{unet_conv_forward.3} parent=5 // pred_fallthru
      _
    %p325 = scmp.le.s32.totalorder 1, %s14
    %p326 = scmp.lt.s32.totalorder %s14, 3
    %p327 = pnand %p325, %p326
    %p328 = pneg %p327
    // Predicated region
    $region41: #{unet_conv_forward.3} parent=5 // pred_check
      _
    $region42: #{unet_conv_forward.3} parent=5 // pred_check_branch
      %330 = sbr.rel (%p327) target = $region44
    $region43: #{unet_conv_forward.3} parent=5 // pred_region
      %s331 = ssub.s32 %s14, 1
      %p332 = pneg %p47
      %p333 = pneg %p44
      %p334 = pneg %p68
      %p335 = pneg %p65
      %s336 = smul.u32 16, %s24
      %p337 = scmp.lt.s32.totalorder %s23, 1
      %s338 = scalar_select %p337, %s23, 1
      %p339 = scmp.lt.s32.totalorder %s336, 15
      %s340 = scalar_select %p339, %s336, 15
      %s341 = smul.addr %s340, 2
      %s342 = smul.addr %s338, 32
      %s343 = sadd.s32 %s341, %s342
      %s344 = smul.addr %s343, 8
      %s345 = scalar_lea.vmem %s2, %s344
      %p346 = pneg %p96
      %p347 = pneg %p93
      %s348 = smul.u32 %s24, 16
      %s349 = ssub.s32 %s348, 1
      %p350 = scmp.gt.s32.totalorder %s349, 0
      %s351 = scalar_select %p350, %s349, 0
      %p352 = scmp.lt.s32.totalorder %s23, 1
      %s353 = scalar_select %p352, %s23, 1
      %p354 = scmp.lt.s32.totalorder %s351, 15
      %s355 = scalar_select %p354, %s351, 15
      %s356 = smul.addr %s355, 2
      %s357 = smul.addr %s353, 32
      %s358 = sadd.s32 %s356, %s357
      %s359 = smul.addr %s358, 8
      %s360 = scalar_lea.vmem %s3, %s359
      %p361 = pneg %p132
      %p362 = pneg %p129
      %s363 = smul.u32 %s24, 16
      %s364 = sadd.s32 %s363, 16
      %p365 = scmp.lt.s32.totalorder %s364, 15
      %s366 = scalar_select %p365, %s364, 15
      %p367 = scmp.lt.s32.totalorder %s23, 1
      %s368 = scalar_select %p367, %s23, 1
      %p369 = scmp.lt.s32.totalorder %s366, 15
      %s370 = scalar_select %p369, %s366, 15
      %s371 = smul.addr %s370, 2
      %s372 = smul.addr %s368, 32
      %s373 = sadd.s32 %s371, %s372
      %s374 = smul.addr %s373, 8
      %s375 = scalar_lea.vmem %s4, %s374
      %p376 = pneg %p168
      %p377 = pneg %p165
      %p378 = pneg %p189
      %p379 = pneg %p186
      %p380 = pneg %p217
      %p381 = pneg %p214
      %s382 = smul.u32 16, %s24
      %p383 = scmp.lt.s32.totalorder %s23, 1
      %s384 = scalar_select %p383, %s23, 1
      %p385 = scmp.lt.s32.totalorder %s382, 15
      %s386 = scalar_select %p385, %s382, 15
      %s387 = smul.addr %s386, 2
      %s388 = smul.addr %s384, 32
      %s389 = sadd.s32 %s387, %s388
      %s390 = smul.addr %s389, 4
      %s391 = scalar_lea.vmem %s6, %s390
      %p392 = pneg %p243
      %p393 = pneg %p240
      %p394 = scmp.lt.s32.totalorder %s23, 1
      %s395 = scalar_select %p394, %s23, 1
      %s396 = smul.addr %s395, 2
      %s397 = scalar_lea.vmem %s7, %s396
      %s398 = smul.u32 16, %s24
      %p399 = scmp.lt.s32.totalorder %s23, 1
      %s400 = scalar_select %p399, %s23, 1
      %p401 = scmp.lt.s32.totalorder %s398, 15
      %s402 = scalar_select %p401, %s398, 15
      %s403 = smul.addr %s402, 2
      %s404 = smul.addr %s400, 32
      %s405 = sadd.s32 %s403, %s404
      %s406 = smul.addr %s405, 8
      %s407 = scalar_lea.vmem %s2, %s406
      %s408 = smul.u32 16, %s24
      %s409 = smul.u32 %s24, 16
      %s410 = ssub.s32 %s409, 1
      %p411 = scmp.gt.s32.totalorder %s410, 0
      %s412 = scalar_select %p411, %s410, 0
      %p413 = scmp.lt.s32.totalorder %s23, 1
      %s414 = scalar_select %p413, %s23, 1
      %p415 = scmp.lt.s32.totalorder %s412, 15
      %s416 = scalar_select %p415, %s412, 15
      %s417 = smul.addr %s416, 2
      %s418 = smul.addr %s414, 32
      %s419 = sadd.s32 %s417, %s418
      %s420 = smul.addr %s419, 8
      %s421 = scalar_lea.vmem %s3, %s420
      %s422 = smul.u32 %s24, 16
      %s423 = ssub.s32 %s422, 1
      %p424 = scmp.gt.s32.totalorder %s423, 0
      %s425 = scalar_select %p424, %s423, 0
      %s426 = smul.u32 %s24, 16
      %s427 = sadd.s32 %s426, 16
      %p428 = scmp.lt.s32.totalorder %s427, 15
      %s429 = scalar_select %p428, %s427, 15
      %p430 = scmp.lt.s32.totalorder %s23, 1
      %s431 = scalar_select %p430, %s23, 1
      %p432 = scmp.lt.s32.totalorder %s429, 15
      %s433 = scalar_select %p432, %s429, 15
      %s434 = smul.addr %s433, 2
      %s435 = smul.addr %s431, 32
      %s436 = sadd.s32 %s434, %s435
      %s437 = smul.addr %s436, 8
      %s438 = scalar_lea.vmem %s4, %s437
      %s439 = smul.u32 %s24, 16
      %s440 = sadd.s32 %s439, 16
      %p441 = scmp.lt.s32.totalorder %s440, 15
      %s442 = scalar_select %p441, %s440, 15
      %s443 = smul.u32 16, %s24
      %p444 = scmp.lt.s32.totalorder %s23, 1
      %s445 = scalar_select %p444, %s23, 1
      %p446 = scmp.lt.s32.totalorder %s443, 15
      %s447 = scalar_select %p446, %s443, 15
      %s448 = smul.addr %s447, 2
      %s449 = smul.addr %s445, 32
      %s450 = sadd.s32 %s448, %s449
      %s451 = smul.addr %s450, 4
      %s452 = scalar_lea.vmem %s6, %s451
      %s453 = smul.u32 16, %s24
      %p454 = scmp.lt.s32.totalorder %s23, 1
      %s455 = scalar_select %p454, %s23, 1
      %s456 = smul.addr %s455, 2
      %s457 = scalar_lea.vmem %s7, %s456
      %p459 = scmp.eq.s32.totalorder %s24, 0
      // Predicated region
      $region45: #{unet_conv_forward.3} parent=43 // pred_check
        %p460 = pneg %p459
      $region46: #{unet_conv_forward.3} parent=43 // pred_check_branch
        %462 = sbr.rel (%p460) target = $region48
      $region47: #{unet_conv_forward.3} parent=43 // pred_region
        %vm463 = vcmask 254976
        %464 = vst.msk [vmem:[%s457] sm:$0x3] %vm463, 0.0
      $region48: #{unet_conv_forward.3} parent=43 // pred_fallthru
        _
      %v465 = vld [vmem:[%s407] sm:$0xff]
      %v466 = vld [vmem:[%s407 + $0x8] sm:$0xff]
      %v467 = vld [vmem:[%s407 + $0x10] sm:$0xff]
      %v468 = vld [vmem:[%s407 + $0x18] sm:$0xff]
      %v469 = vld [vmem:[%s407 + $0x20] sm:$0xff]
      %v470 = vld [vmem:[%s407 + $0x28] sm:$0xff]
      %v471 = vld [vmem:[%s407 + $0x30] sm:$0xff]
      %v472 = vld [vmem:[%s407 + $0x38] sm:$0xff]
      %v473 = vld [vmem:[%s407 + $0x40] sm:$0xff]
      %v474 = vld [vmem:[%s407 + $0x48] sm:$0xff]
      %v475 = vld [vmem:[%s407 + $0x50] sm:$0xff]
      %v476 = vld [vmem:[%s407 + $0x58] sm:$0xff]
      %v477 = vld [vmem:[%s407 + $0x60] sm:$0xff]
      %v478 = vld [vmem:[%s407 + $0x68] sm:$0xff]
      %v479 = vld [vmem:[%s407 + $0x70] sm:$0xff]
      %v480 = vld [vmem:[%s407 + $0x78] sm:$0xff]
      %v481 = vld [vmem:[%s407 + $0x80] sm:$0xff]
      %v482 = vld [vmem:[%s407 + $0x88] sm:$0xff]
      %v483 = vld [vmem:[%s407 + $0x90] sm:$0xff]
      %v484 = vld [vmem:[%s407 + $0x98] sm:$0xff]
      %v485 = vld [vmem:[%s407 + $0xa0] sm:$0xff]
      %v486 = vld [vmem:[%s407 + $0xa8] sm:$0xff]
      %v487 = vld [vmem:[%s407 + $0xb0] sm:$0xff]
      %v488 = vld [vmem:[%s407 + $0xb8] sm:$0xff]
      %v489 = vld [vmem:[%s407 + $0xc0] sm:$0xff]
      %v490 = vld [vmem:[%s407 + $0xc8] sm:$0xff]
      %v491 = vld [vmem:[%s407 + $0xd0] sm:$0xff]
      %v492 = vld [vmem:[%s407 + $0xd8] sm:$0xff]
      %v493 = vld [vmem:[%s407 + $0xe0] sm:$0xff]
      %v494 = vld [vmem:[%s407 + $0xe8] sm:$0xff]
      %v495 = vld [vmem:[%s407 + $0xf0] sm:$0xff]
      %v496 = vld [vmem:[%s407 + $0xf8] sm:$0xff]
      %v497 = vpack.c.bf16 %v466, %v465
      %v498 = vpack.c.bf16 %v468, %v467
      %v499 = vpack.c.bf16 %v470, %v469
      %v500 = vpack.c.bf16 %v472, %v471
      %v501 = vpack.c.bf16 %v474, %v473
      %v502 = vpack.c.bf16 %v476, %v475
      %v503 = vpack.c.bf16 %v478, %v477
      %v504 = vpack.c.bf16 %v480, %v479
      %v505 = vpack.c.bf16 %v482, %v481
      %v506 = vpack.c.bf16 %v484, %v483
      %v507 = vpack.c.bf16 %v486, %v485
      %v508 = vpack.c.bf16 %v488, %v487
      %v509 = vpack.c.bf16 %v490, %v489
      %v510 = vpack.c.bf16 %v492, %v491
      %v511 = vpack.c.bf16 %v494, %v493
      %v512 = vpack.c.bf16 %v496, %v495
      %v513 = vld [vmem:[%s421] sm:$0xff]
      %v514 = vld [vmem:[%s421 + $0x8] sm:$0xff]
      %p515 = scmp.gt.s32.totalorder %s24, 0
      %s516 = scalar_select %p515, 1, 0
      %s517 = scvt.s32.f32 %s516
      %v518 = vstv %s517
      %v519 = vmul.f32 %v513, %v518
      %v520 = vmul.f32 %v514, %v518
      %v521 = vpack.c.bf16 %v520, %v519
      %v522 = vld [vmem:[%s438] sm:$0xff]
      %v523 = vld [vmem:[%s438 + $0x8] sm:$0xff]
      %p524 = scmp.lt.s32.totalorder %s24, 0
      %s525 = scalar_select %p524, 1, 0
      %s526 = scvt.s32.f32 %s525
      %v527 = vstv %s526
      %v528 = vmul.f32 %v522, %v527
      %v529 = vmul.f32 %v523, %v527
      %v530 = vpack.c.bf16 %v529, %v528
      %v532 = vshrl.u32 %v521, 16
      %v534 = vrot.slane %v532, 7
      %v535 = vshll.u32 %v521, 16
      %v537 = vor.u32 %v534, %v535
      %v539 = vshrl.u32 %v497, 16
      %v541 = vrot.slane %v539, 7
      %v542 = vshll.u32 %v497, 16
      %v544 = vor.u32 %v541, %v542
      %v546 = vshrl.u32 %v498, 16
      %v548 = vrot.slane %v546, 7
      %v549 = vshll.u32 %v498, 16
      %v551 = vor.u32 %v548, %v549
      %v553 = vshrl.u32 %v499, 16
      %v555 = vrot.slane %v553, 7
      %v556 = vshll.u32 %v499, 16
      %v558 = vor.u32 %v555, %v556
      %v560 = vshrl.u32 %v500, 16
      %v562 = vrot.slane %v560, 7
      %v563 = vshll.u32 %v500, 16
      %v565 = vor.u32 %v562, %v563
      %v567 = vshrl.u32 %v501, 16
      %v569 = vrot.slane %v567, 7
      %v570 = vshll.u32 %v501, 16
      %v572 = vor.u32 %v569, %v570
      %v574 = vshrl.u32 %v502, 16
      %v576 = vrot.slane %v574, 7
      %v577 = vshll.u32 %v502, 16
      %v579 = vor.u32 %v576, %v577
      %v581 = vshrl.u32 %v503, 16
      %v583 = vrot.slane %v581, 7
      %v584 = vshll.u32 %v503, 16
      %v586 = vor.u32 %v583, %v584
      %v588 = vshrl.u32 %v504, 16
      %v590 = vrot.slane %v588, 7
      %v591 = vshll.u32 %v504, 16
      %v593 = vor.u32 %v590, %v591
      %v595 = vshrl.u32 %v505, 16
      %v597 = vrot.slane %v595, 7
      %v598 = vshll.u32 %v505, 16
      %v600 = vor.u32 %v597, %v598
      %v602 = vshrl.u32 %v506, 16
      %v604 = vrot.slane %v602, 7
      %v605 = vshll.u32 %v506, 16
      %v607 = vor.u32 %v604, %v605
      %v609 = vshrl.u32 %v507, 16
      %v611 = vrot.slane %v609, 7
      %v612 = vshll.u32 %v507, 16
      %v614 = vor.u32 %v611, %v612
      %v616 = vshrl.u32 %v508, 16
      %v618 = vrot.slane %v616, 7
      %v619 = vshll.u32 %v508, 16
      %v621 = vor.u32 %v618, %v619
      %v623 = vshrl.u32 %v509, 16
      %v625 = vrot.slane %v623, 7
      %v626 = vshll.u32 %v509, 16
      %v628 = vor.u32 %v625, %v626
      %v630 = vshrl.u32 %v510, 16
      %v632 = vrot.slane %v630, 7
      %v633 = vshll.u32 %v510, 16
      %v635 = vor.u32 %v632, %v633
      %v637 = vshrl.u32 %v511, 16
      %v639 = vrot.slane %v637, 7
      %v640 = vshll.u32 %v511, 16
      %v642 = vor.u32 %v639, %v640
      %v644 = vshrl.u32 %v512, 16
      %v646 = vrot.slane %v644, 7
      %v647 = vshll.u32 %v512, 16
      %v649 = vor.u32 %v646, %v647
      %v651 = vshrl.u32 %v530, 16
      %v653 = vrot.slane %v651, 7
      %v654 = vshll.u32 %v530, 16
      %v656 = vor.u32 %v653, %v654
      %vm693 = vcmask 1040384
      %vm694 = vsmask.f32 256
      %vm695 = vmand %vm693, %vm694
      %v696 = vsel %vm695, 0, %v537
      %v697 = vsel %vm695, 0, %v544
      %v698 = vsel %vm695, 0, %v551
      %v699 = vsel %vm695, 0, %v558
      %v700 = vsel %vm695, 0, %v565
      %v701 = vsel %vm695, 0, %v572
      %v702 = vsel %vm695, 0, %v579
      %v703 = vsel %vm695, 0, %v586
      %v704 = vsel %vm695, 0, %v593
      %v705 = vsel %vm695, 0, %v600
      %v706 = vsel %vm695, 0, %v607
      %v707 = vsel %vm695, 0, %v614
      %v708 = vsel %vm695, 0, %v621
      %v709 = vsel %vm695, 0, %v628
      %v710 = vsel %vm695, 0, %v635
      %v711 = vsel %vm695, 0, %v642
      %v712 = vsel %vm695, 0, %v649
      %v713 = vsel %vm695, 0, %v656
      %v714 = vsel %vm695, %v534, 0
      %v715 = vsel %vm695, %v541, 0
      %v716 = vsel %vm695, %v548, 0
      %v717 = vsel %vm695, %v555, 0
      %v718 = vsel %vm695, %v562, 0
      %v719 = vsel %vm695, %v569, 0
      %v720 = vsel %vm695, %v576, 0
      %v721 = vsel %vm695, %v583, 0
      %v722 = vsel %vm695, %v590, 0
      %v723 = vsel %vm695, %v597, 0
      %v724 = vsel %vm695, %v604, 0
      %v725 = vsel %vm695, %v611, 0
      %v726 = vsel %vm695, %v618, 0
      %v727 = vsel %vm695, %v625, 0
      %v728 = vsel %vm695, %v632, 0
      %v729 = vsel %vm695, %v639, 0
      %v730 = vsel %vm695, %v646, 0
      %v731 = vsel %vm695, %v653, 0
      %vm732 = vsmask.f32 7424
      %v734 = vshrl.u32 %v696, 16
      %v736 = vshll.u32 %v696, 16
      %v738 = vrot.slane %v736, 1
      %v739 = vor.u32 %v734, %v738
      %v741 = vshll.u32 %v714, 16
      %v743 = vrot.slane %v741, 1
      %v744 = vsel %vm732, %v739, %v743
      %v746 = vshrl.u32 %v697, 16
      %v748 = vshll.u32 %v697, 16
      %v750 = vrot.slane %v748, 1
      %v751 = vor.u32 %v746, %v750
      %v753 = vshll.u32 %v715, 16
      %v755 = vrot.slane %v753, 1
      %v756 = vsel %vm732, %v751, %v755
      %v758 = vshrl.u32 %v698, 16
      %v760 = vshll.u32 %v698, 16
      %v762 = vrot.slane %v760, 1
      %v763 = vor.u32 %v758, %v762
      %v765 = vshll.u32 %v716, 16
      %v767 = vrot.slane %v765, 1
      %v768 = vsel %vm732, %v763, %v767
      %v770 = vshrl.u32 %v699, 16
      %v772 = vshll.u32 %v699, 16
      %v774 = vrot.slane %v772, 1
      %v775 = vor.u32 %v770, %v774
      %v777 = vshll.u32 %v717, 16
      %v779 = vrot.slane %v777, 1
      %v780 = vsel %vm732, %v775, %v779
      %v782 = vshrl.u32 %v700, 16
      %v784 = vshll.u32 %v700, 16
      %v786 = vrot.slane %v784, 1
      %v787 = vor.u32 %v782, %v786
      %v789 = vshll.u32 %v718, 16
      %v791 = vrot.slane %v789, 1
      %v792 = vsel %vm732, %v787, %v791
      %v794 = vshrl.u32 %v701, 16
      %v796 = vshll.u32 %v701, 16
      %v798 = vrot.slane %v796, 1
      %v799 = vor.u32 %v794, %v798
      %v801 = vshll.u32 %v719, 16
      %v803 = vrot.slane %v801, 1
      %v804 = vsel %vm732, %v799, %v803
      %v806 = vshrl.u32 %v702, 16
      %v808 = vshll.u32 %v702, 16
      %v810 = vrot.slane %v808, 1
      %v811 = vor.u32 %v806, %v810
      %v813 = vshll.u32 %v720, 16
      %v815 = vrot.slane %v813, 1
      %v816 = vsel %vm732, %v811, %v815
      %v818 = vshrl.u32 %v703, 16
      %v820 = vshll.u32 %v703, 16
      %v822 = vrot.slane %v820, 1
      %v823 = vor.u32 %v818, %v822
      %v825 = vshll.u32 %v721, 16
      %v827 = vrot.slane %v825, 1
      %v828 = vsel %vm732, %v823, %v827
      %v830 = vshrl.u32 %v704, 16
      %v832 = vshll.u32 %v704, 16
      %v834 = vrot.slane %v832, 1
      %v835 = vor.u32 %v830, %v834
      %v837 = vshll.u32 %v722, 16
      %v839 = vrot.slane %v837, 1
      %v840 = vsel %vm732, %v835, %v839
      %v842 = vshrl.u32 %v705, 16
      %v844 = vshll.u32 %v705, 16
      %v846 = vrot.slane %v844, 1
      %v847 = vor.u32 %v842, %v846
      %v849 = vshll.u32 %v723, 16
      %v851 = vrot.slane %v849, 1
      %v852 = vsel %vm732, %v847, %v851
      %v854 = vshrl.u32 %v706, 16
      %v856 = vshll.u32 %v706, 16
      %v858 = vrot.slane %v856, 1
      %v859 = vor.u32 %v854, %v858
      %v861 = vshll.u32 %v724, 16
      %v863 = vrot.slane %v861, 1
      %v864 = vsel %vm732, %v859, %v863
      %v866 = vshrl.u32 %v707, 16
      %v868 = vshll.u32 %v707, 16
      %v870 = vrot.slane %v868, 1
      %v871 = vor.u32 %v866, %v870
      %v873 = vshll.u32 %v725, 16
      %v875 = vrot.slane %v873, 1
      %v876 = vsel %vm732, %v871, %v875
      %v878 = vshrl.u32 %v708, 16
      %v880 = vshll.u32 %v708, 16
      %v882 = vrot.slane %v880, 1
      %v883 = vor.u32 %v878, %v882
      %v885 = vshll.u32 %v726, 16
      %v887 = vrot.slane %v885, 1
      %v888 = vsel %vm732, %v883, %v887
      %v890 = vshrl.u32 %v709, 16
      %v892 = vshll.u32 %v709, 16
      %v894 = vrot.slane %v892, 1
      %v895 = vor.u32 %v890, %v894
      %v897 = vshll.u32 %v727, 16
      %v899 = vrot.slane %v897, 1
      %v900 = vsel %vm732, %v895, %v899
      %v902 = vshrl.u32 %v710, 16
      %v904 = vshll.u32 %v710, 16
      %v906 = vrot.slane %v904, 1
      %v907 = vor.u32 %v902, %v906
      %v909 = vshll.u32 %v728, 16
      %v911 = vrot.slane %v909, 1
      %v912 = vsel %vm732, %v907, %v911
      %v914 = vshrl.u32 %v711, 16
      %v916 = vshll.u32 %v711, 16
      %v918 = vrot.slane %v916, 1
      %v919 = vor.u32 %v914, %v918
      %v921 = vshll.u32 %v729, 16
      %v923 = vrot.slane %v921, 1
      %v924 = vsel %vm732, %v919, %v923
      %vm957 = vcmask 1046528
      %v958 = vrot.slane %v696, 1
      %v959 = vrot.slane %v714, 1
      %v960 = vsel %vm957, %v958, %v959
      %v961 = vrot.slane %v697, 1
      %v962 = vrot.slane %v715, 1
      %v963 = vsel %vm957, %v961, %v962
      %v964 = vrot.slane %v698, 1
      %v965 = vrot.slane %v716, 1
      %v966 = vsel %vm957, %v964, %v965
      %v967 = vrot.slane %v699, 1
      %v968 = vrot.slane %v717, 1
      %v969 = vsel %vm957, %v967, %v968
      %v970 = vrot.slane %v700, 1
      %v971 = vrot.slane %v718, 1
      %v972 = vsel %vm957, %v970, %v971
      %v973 = vrot.slane %v701, 1
      %v974 = vrot.slane %v719, 1
      %v975 = vsel %vm957, %v973, %v974
      %v976 = vrot.slane %v702, 1
      %v977 = vrot.slane %v720, 1
      %v978 = vsel %vm957, %v976, %v977
      %v979 = vrot.slane %v703, 1
      %v980 = vrot.slane %v721, 1
      %v981 = vsel %vm957, %v979, %v980
      %v982 = vrot.slane %v704, 1
      %v983 = vrot.slane %v722, 1
      %v984 = vsel %vm957, %v982, %v983
      %v985 = vrot.slane %v705, 1
      %v986 = vrot.slane %v723, 1
      %v987 = vsel %vm957, %v985, %v986
      %v988 = vrot.slane %v706, 1
      %v989 = vrot.slane %v724, 1
      %v990 = vsel %vm957, %v988, %v989
      %v991 = vrot.slane %v707, 1
      %v992 = vrot.slane %v725, 1
      %v993 = vsel %vm957, %v991, %v992
      %v994 = vrot.slane %v708, 1
      %v995 = vrot.slane %v726, 1
      %v996 = vsel %vm957, %v994, %v995
      %v997 = vrot.slane %v709, 1
      %v998 = vrot.slane %v727, 1
      %v999 = vsel %vm957, %v997, %v998
      %v1000 = vrot.slane %v710, 1
      %v1001 = vrot.slane %v728, 1
      %v1002 = vsel %vm957, %v1000, %v1001
      %v1003 = vrot.slane %v711, 1
      %v1004 = vrot.slane %v729, 1
      %v1005 = vsel %vm957, %v1003, %v1004
      %v1007 = vshrl.u32 %v712, 16
      %v1009 = vshll.u32 %v712, 16
      %v1011 = vrot.slane %v1009, 1
      %v1012 = vor.u32 %v1007, %v1011
      %v1014 = vshll.u32 %v730, 16
      %v1016 = vrot.slane %v1014, 1
      %v1017 = vsel %vm732, %v1012, %v1016
      %v1020 = vrot.slane %v712, 1
      %v1021 = vrot.slane %v730, 1
      %v1022 = vsel %vm957, %v1020, %v1021
      %v1024 = vshrl.u32 %v713, 16
      %v1026 = vshll.u32 %v713, 16
      %v1028 = vrot.slane %v1026, 1
      %v1029 = vor.u32 %v1024, %v1028
      %v1031 = vshll.u32 %v731, 16
      %v1033 = vrot.slane %v1031, 1
      %v1034 = vsel %vm732, %v1029, %v1033
      %v1037 = vrot.slane %v713, 1
      %v1038 = vrot.slane %v731, 1
      %v1039 = vsel %vm957, %v1037, %v1038
      %1040 = vrot.lane.b32.xlu0 %v744, 4
      %v1041 = vpop.permute.xlu0 %1040
      %1042 = vrot.lane.b32.xlu0 %v756, 4
      %v1043 = vpop.permute.xlu0 %1042
      %1044 = vrot.lane.b32.xlu0 %v768, 4
      %v1045 = vpop.permute.xlu0 %1044
      %1046 = vrot.lane.b32.xlu0 %v780, 4
      %v1047 = vpop.permute.xlu0 %1046
      %1048 = vrot.lane.b32.xlu0 %v792, 4
      %v1049 = vpop.permute.xlu0 %1048
      %1050 = vrot.lane.b32.xlu0 %v804, 4
      %v1051 = vpop.permute.xlu0 %1050
      %1052 = vrot.lane.b32.xlu0 %v816, 4
      %v1053 = vpop.permute.xlu0 %1052
      %1054 = vrot.lane.b32.xlu0 %v828, 4
      %v1055 = vpop.permute.xlu0 %1054
      %1056 = vrot.lane.b32.xlu0 %v840, 4
      %v1057 = vpop.permute.xlu0 %1056
      %1058 = vrot.lane.b32.xlu0 %v852, 4
      %v1059 = vpop.permute.xlu0 %1058
      %1060 = vrot.lane.b32.xlu0 %v864, 4
      %v1061 = vpop.permute.xlu0 %1060
      %1062 = vrot.lane.b32.xlu0 %v876, 4
      %v1063 = vpop.permute.xlu0 %1062
      %1064 = vrot.lane.b32.xlu0 %v888, 4
      %v1065 = vpop.permute.xlu0 %1064
      %1066 = vrot.lane.b32.xlu0 %v900, 4
      %v1067 = vpop.permute.xlu0 %1066
      %1068 = vrot.lane.b32.xlu0 %v912, 4
      %v1069 = vpop.permute.xlu0 %1068
      %1070 = vrot.lane.b32.xlu0 %v924, 4
      %v1071 = vpop.permute.xlu0 %1070
      %1072 = vrot.lane.b32.xlu0 %v960, 8
      %v1073 = vpop.permute.xlu0 %1072
      %1074 = vrot.lane.b32.xlu0 %v963, 8
      %v1075 = vpop.permute.xlu0 %1074
      %1076 = vrot.lane.b32.xlu0 %v966, 8
      %v1077 = vpop.permute.xlu0 %1076
      %1078 = vrot.lane.b32.xlu0 %v969, 8
      %v1079 = vpop.permute.xlu0 %1078
      %1080 = vrot.lane.b32.xlu0 %v972, 8
      %v1081 = vpop.permute.xlu0 %1080
      %1082 = vrot.lane.b32.xlu0 %v975, 8
      %v1083 = vpop.permute.xlu0 %1082
      %1084 = vrot.lane.b32.xlu0 %v978, 8
      %v1085 = vpop.permute.xlu0 %1084
      %1086 = vrot.lane.b32.xlu0 %v981, 8
      %v1087 = vpop.permute.xlu0 %1086
      %1088 = vrot.lane.b32.xlu0 %v984, 8
      %v1089 = vpop.permute.xlu0 %1088
      %1090 = vrot.lane.b32.xlu0 %v987, 8
      %v1091 = vpop.permute.xlu0 %1090
      %1092 = vrot.lane.b32.xlu0 %v990, 8
      %v1093 = vpop.permute.xlu0 %1092
      %1094 = vrot.lane.b32.xlu0 %v993, 8
      %v1095 = vpop.permute.xlu0 %1094
      %1096 = vrot.lane.b32.xlu0 %v996, 8
      %v1097 = vpop.permute.xlu0 %1096
      %1098 = vrot.lane.b32.xlu0 %v999, 8
      %v1099 = vpop.permute.xlu0 %1098
      %1100 = vrot.lane.b32.xlu0 %v1002, 8
      %v1101 = vpop.permute.xlu0 %1100
      %1102 = vrot.lane.b32.xlu0 %v1005, 8
      %v1103 = vpop.permute.xlu0 %1102
      %1104 = vrot.lane.b32.xlu0 %v697, 12
      %v1105 = vpop.permute.xlu0 %1104
      %1106 = vrot.lane.b32.xlu0 %v698, 12
      %v1107 = vpop.permute.xlu0 %1106
      %1108 = vrot.lane.b32.xlu0 %v699, 12
      %v1109 = vpop.permute.xlu0 %1108
      %1110 = vrot.lane.b32.xlu0 %v700, 12
      %v1111 = vpop.permute.xlu0 %1110
      %1112 = vrot.lane.b32.xlu0 %v701, 12
      %v1113 = vpop.permute.xlu0 %1112
      %1114 = vrot.lane.b32.xlu0 %v702, 12
      %v1115 = vpop.permute.xlu0 %1114
      %1116 = vrot.lane.b32.xlu0 %v703, 12
      %v1117 = vpop.permute.xlu0 %1116
      %1118 = vrot.lane.b32.xlu0 %v704, 12
      %v1119 = vpop.permute.xlu0 %1118
      %1120 = vrot.lane.b32.xlu0 %v705, 12
      %v1121 = vpop.permute.xlu0 %1120
      %1122 = vrot.lane.b32.xlu0 %v706, 12
      %v1123 = vpop.permute.xlu0 %1122
      %1124 = vrot.lane.b32.xlu0 %v707, 12
      %v1125 = vpop.permute.xlu0 %1124
      %1126 = vrot.lane.b32.xlu0 %v708, 12
      %v1127 = vpop.permute.xlu0 %1126
      %1128 = vrot.lane.b32.xlu0 %v709, 12
      %v1129 = vpop.permute.xlu0 %1128
      %1130 = vrot.lane.b32.xlu0 %v710, 12
      %v1131 = vpop.permute.xlu0 %1130
      %1132 = vrot.lane.b32.xlu0 %v711, 12
      %v1133 = vpop.permute.xlu0 %1132
      %1134 = vrot.lane.b32.xlu0 %v712, 12
      %v1135 = vpop.permute.xlu0 %1134
      %1136 = vrot.lane.b32.xlu0 %v756, 16
      %v1137 = vpop.permute.xlu0 %1136
      %1138 = vrot.lane.b32.xlu0 %v768, 16
      %v1139 = vpop.permute.xlu0 %1138
      %1140 = vrot.lane.b32.xlu0 %v780, 16
      %v1141 = vpop.permute.xlu0 %1140
      %1142 = vrot.lane.b32.xlu0 %v792, 16
      %v1143 = vpop.permute.xlu0 %1142
      %1144 = vrot.lane.b32.xlu0 %v804, 16
      %v1145 = vpop.permute.xlu0 %1144
      %1146 = vrot.lane.b32.xlu0 %v816, 16
      %v1147 = vpop.permute.xlu0 %1146
      %1148 = vrot.lane.b32.xlu0 %v828, 16
      %v1149 = vpop.permute.xlu0 %1148
      %1150 = vrot.lane.b32.xlu0 %v840, 16
      %v1151 = vpop.permute.xlu0 %1150
      %1152 = vrot.lane.b32.xlu0 %v852, 16
      %v1153 = vpop.permute.xlu0 %1152
      %1154 = vrot.lane.b32.xlu0 %v864, 16
      %v1155 = vpop.permute.xlu0 %1154
      %1156 = vrot.lane.b32.xlu0 %v876, 16
      %v1157 = vpop.permute.xlu0 %1156
      %1158 = vrot.lane.b32.xlu0 %v888, 16
      %v1159 = vpop.permute.xlu0 %1158
      %1160 = vrot.lane.b32.xlu0 %v900, 16
      %v1161 = vpop.permute.xlu0 %1160
      %1162 = vrot.lane.b32.xlu0 %v912, 16
      %v1163 = vpop.permute.xlu0 %1162
      %1164 = vrot.lane.b32.xlu0 %v924, 16
      %v1165 = vpop.permute.xlu0 %1164
      %1166 = vrot.lane.b32.xlu0 %v1017, 16
      %v1167 = vpop.permute.xlu0 %1166
      %1168 = vrot.lane.b32.xlu0 %v963, 20
      %v1169 = vpop.permute.xlu0 %1168
      %1170 = vrot.lane.b32.xlu0 %v966, 20
      %v1171 = vpop.permute.xlu0 %1170
      %1172 = vrot.lane.b32.xlu0 %v969, 20
      %v1173 = vpop.permute.xlu0 %1172
      %1174 = vrot.lane.b32.xlu0 %v972, 20
      %v1175 = vpop.permute.xlu0 %1174
      %1176 = vrot.lane.b32.xlu0 %v975, 20
      %v1177 = vpop.permute.xlu0 %1176
      %1178 = vrot.lane.b32.xlu0 %v978, 20
      %v1179 = vpop.permute.xlu0 %1178
      %1180 = vrot.lane.b32.xlu0 %v981, 20
      %v1181 = vpop.permute.xlu0 %1180
      %1182 = vrot.lane.b32.xlu0 %v984, 20
      %v1183 = vpop.permute.xlu0 %1182
      %1184 = vrot.lane.b32.xlu0 %v987, 20
      %v1185 = vpop.permute.xlu0 %1184
      %1186 = vrot.lane.b32.xlu0 %v990, 20
      %v1187 = vpop.permute.xlu0 %1186
      %1188 = vrot.lane.b32.xlu0 %v993, 20
      %v1189 = vpop.permute.xlu0 %1188
      %1190 = vrot.lane.b32.xlu0 %v996, 20
      %v1191 = vpop.permute.xlu0 %1190
      %1192 = vrot.lane.b32.xlu0 %v999, 20
      %v1193 = vpop.permute.xlu0 %1192
      %1194 = vrot.lane.b32.xlu0 %v1002, 20
      %v1195 = vpop.permute.xlu0 %1194
      %1196 = vrot.lane.b32.xlu0 %v1005, 20
      %v1197 = vpop.permute.xlu0 %1196
      %1198 = vrot.lane.b32.xlu0 %v1022, 20
      %v1199 = vpop.permute.xlu0 %1198
      %1200 = vrot.lane.b32.xlu0 %v698, 24
      %v1201 = vpop.permute.xlu0 %1200
      %1202 = vrot.lane.b32.xlu0 %v699, 24
      %v1203 = vpop.permute.xlu0 %1202
      %1204 = vrot.lane.b32.xlu0 %v700, 24
      %v1205 = vpop.permute.xlu0 %1204
      %1206 = vrot.lane.b32.xlu0 %v701, 24
      %v1207 = vpop.permute.xlu0 %1206
      %1208 = vrot.lane.b32.xlu0 %v702, 24
      %v1209 = vpop.permute.xlu0 %1208
      %1210 = vrot.lane.b32.xlu0 %v703, 24
      %v1211 = vpop.permute.xlu0 %1210
      %1212 = vrot.lane.b32.xlu0 %v704, 24
      %v1213 = vpop.permute.xlu0 %1212
      %1214 = vrot.lane.b32.xlu0 %v705, 24
      %v1215 = vpop.permute.xlu0 %1214
      %1216 = vrot.lane.b32.xlu0 %v706, 24
      %v1217 = vpop.permute.xlu0 %1216
      %1218 = vrot.lane.b32.xlu0 %v707, 24
      %v1219 = vpop.permute.xlu0 %1218
      %1220 = vrot.lane.b32.xlu0 %v708, 24
      %v1221 = vpop.permute.xlu0 %1220
      %1222 = vrot.lane.b32.xlu0 %v709, 24
      %v1223 = vpop.permute.xlu0 %1222
      %1224 = vrot.lane.b32.xlu0 %v710, 24
      %v1225 = vpop.permute.xlu0 %1224
      %1226 = vrot.lane.b32.xlu0 %v711, 24
      %v1227 = vpop.permute.xlu0 %1226
      %1228 = vrot.lane.b32.xlu0 %v712, 24
      %v1229 = vpop.permute.xlu0 %1228
      %1230 = vrot.lane.b32.xlu0 %v713, 24
      %v1231 = vpop.permute.xlu0 %1230
      %1232 = vrot.lane.b32.xlu0 %v768, 28
      %v1233 = vpop.permute.xlu0 %1232
      %1234 = vrot.lane.b32.xlu0 %v780, 28
      %v1235 = vpop.permute.xlu0 %1234
      %1236 = vrot.lane.b32.xlu0 %v792, 28
      %v1237 = vpop.permute.xlu0 %1236
      %1238 = vrot.lane.b32.xlu0 %v804, 28
      %v1239 = vpop.permute.xlu0 %1238
      %1240 = vrot.lane.b32.xlu0 %v816, 28
      %v1241 = vpop.permute.xlu0 %1240
      %1242 = vrot.lane.b32.xlu0 %v828, 28
      %v1243 = vpop.permute.xlu0 %1242
      %1244 = vrot.lane.b32.xlu0 %v840, 28
      %v1245 = vpop.permute.xlu0 %1244
      %1246 = vrot.lane.b32.xlu0 %v852, 28
      %v1247 = vpop.permute.xlu0 %1246
      %1248 = vrot.lane.b32.xlu0 %v864, 28
      %v1249 = vpop.permute.xlu0 %1248
      %1250 = vrot.lane.b32.xlu0 %v876, 28
      %v1251 = vpop.permute.xlu0 %1250
      %1252 = vrot.lane.b32.xlu0 %v888, 28
      %v1253 = vpop.permute.xlu0 %1252
      %1254 = vrot.lane.b32.xlu0 %v900, 28
      %v1255 = vpop.permute.xlu0 %1254
      %1256 = vrot.lane.b32.xlu0 %v912, 28
      %v1257 = vpop.permute.xlu0 %1256
      %1258 = vrot.lane.b32.xlu0 %v924, 28
      %v1259 = vpop.permute.xlu0 %1258
      %1260 = vrot.lane.b32.xlu0 %v1017, 28
      %v1261 = vpop.permute.xlu0 %1260
      %1262 = vrot.lane.b32.xlu0 %v1034, 28
      %v1263 = vpop.permute.xlu0 %1262
      %1264 = vrot.lane.b32.xlu0 %v966, 32
      %v1265 = vpop.permute.xlu0 %1264
      %1266 = vrot.lane.b32.xlu0 %v969, 32
      %v1267 = vpop.permute.xlu0 %1266
      %1268 = vrot.lane.b32.xlu0 %v972, 32
      %v1269 = vpop.permute.xlu0 %1268
      %1270 = vrot.lane.b32.xlu0 %v975, 32
      %v1271 = vpop.permute.xlu0 %1270
      %1272 = vrot.lane.b32.xlu0 %v978, 32
      %v1273 = vpop.permute.xlu0 %1272
      %1274 = vrot.lane.b32.xlu0 %v981, 32
      %v1275 = vpop.permute.xlu0 %1274
      %1276 = vrot.lane.b32.xlu0 %v984, 32
      %v1277 = vpop.permute.xlu0 %1276
      %1278 = vrot.lane.b32.xlu0 %v987, 32
      %v1279 = vpop.permute.xlu0 %1278
      %1280 = vrot.lane.b32.xlu0 %v990, 32
      %v1281 = vpop.permute.xlu0 %1280
      %1282 = vrot.lane.b32.xlu0 %v993, 32
      %v1283 = vpop.permute.xlu0 %1282
      %1284 = vrot.lane.b32.xlu0 %v996, 32
      %v1285 = vpop.permute.xlu0 %1284
      %1286 = vrot.lane.b32.xlu0 %v999, 32
      %v1287 = vpop.permute.xlu0 %1286
      %1288 = vrot.lane.b32.xlu0 %v1002, 32
      %v1289 = vpop.permute.xlu0 %1288
      %1290 = vrot.lane.b32.xlu0 %v1005, 32
      %v1291 = vpop.permute.xlu0 %1290
      %1292 = vrot.lane.b32.xlu0 %v1022, 32
      %v1293 = vpop.permute.xlu0 %1292
      %1294 = vrot.lane.b32.xlu0 %v1039, 32
      %v1295 = vpop.permute.xlu0 %1294
      %vm1296 = vcmask 31744
      %v1298 = vsel %vm1296, %v696, %v1041
      %v1300 = vsel %vm1296, %v697, %v1043
      %v1302 = vsel %vm1296, %v698, %v1045
      %v1304 = vsel %vm1296, %v699, %v1047
      %v1306 = vsel %vm1296, %v700, %v1049
      %v1308 = vsel %vm1296, %v701, %v1051
      %v1310 = vsel %vm1296, %v702, %v1053
      %v1312 = vsel %vm1296, %v703, %v1055
      %v1314 = vsel %vm1296, %v704, %v1057
      %v1316 = vsel %vm1296, %v705, %v1059
      %v1318 = vsel %vm1296, %v706, %v1061
      %v1320 = vsel %vm1296, %v707, %v1063
      %v1322 = vsel %vm1296, %v708, %v1065
      %v1324 = vsel %vm1296, %v709, %v1067
      %v1326 = vsel %vm1296, %v710, %v1069
      %v1328 = vsel %vm1296, %v711, %v1071
      %vm1329 = vcmask 64512
      %v1331 = vsel %vm1329, %v1298, %v1073
      %v1333 = vsel %vm1329, %v1300, %v1075
      %v1335 = vsel %vm1329, %v1302, %v1077
      %v1337 = vsel %vm1329, %v1304, %v1079
      %v1339 = vsel %vm1329, %v1306, %v1081
      %v1341 = vsel %vm1329, %v1308, %v1083
      %v1343 = vsel %vm1329, %v1310, %v1085
      %v1345 = vsel %vm1329, %v1312, %v1087
      %v1347 = vsel %vm1329, %v1314, %v1089
      %v1349 = vsel %vm1329, %v1316, %v1091
      %v1351 = vsel %vm1329, %v1318, %v1093
      %v1353 = vsel %vm1329, %v1320, %v1095
      %v1355 = vsel %vm1329, %v1322, %v1097
      %v1357 = vsel %vm1329, %v1324, %v1099
      %v1359 = vsel %vm1329, %v1326, %v1101
      %v1361 = vsel %vm1329, %v1328, %v1103
      %vm1362 = vcmask 97280
      %v1364 = vsel %vm1362, %v1331, %v1105
      %v1366 = vsel %vm1362, %v1333, %v1107
      %v1368 = vsel %vm1362, %v1335, %v1109
      %v1370 = vsel %vm1362, %v1337, %v1111
      %v1372 = vsel %vm1362, %v1339, %v1113
      %v1374 = vsel %vm1362, %v1341, %v1115
      %v1376 = vsel %vm1362, %v1343, %v1117
      %v1378 = vsel %vm1362, %v1345, %v1119
      %v1380 = vsel %vm1362, %v1347, %v1121
      %v1382 = vsel %vm1362, %v1349, %v1123
      %v1384 = vsel %vm1362, %v1351, %v1125
      %v1386 = vsel %vm1362, %v1353, %v1127
      %v1388 = vsel %vm1362, %v1355, %v1129
      %v1390 = vsel %vm1362, %v1357, %v1131
      %v1392 = vsel %vm1362, %v1359, %v1133
      %v1394 = vsel %vm1362, %v1361, %v1135
      %vm1395 = vcmask 130048
      %v1397 = vsel %vm1395, %v1364, %v1137
      %v1399 = vsel %vm1395, %v1366, %v1139
      %v1401 = vsel %vm1395, %v1368, %v1141
      %v1403 = vsel %vm1395, %v1370, %v1143
      %v1405 = vsel %vm1395, %v1372, %v1145
      %v1407 = vsel %vm1395, %v1374, %v1147
      %v1409 = vsel %vm1395, %v1376, %v1149
      %v1411 = vsel %vm1395, %v1378, %v1151
      %v1413 = vsel %vm1395, %v1380, %v1153
      %v1415 = vsel %vm1395, %v1382, %v1155
      %v1417 = vsel %vm1395, %v1384, %v1157
      %v1419 = vsel %vm1395, %v1386, %v1159
      %v1421 = vsel %vm1395, %v1388, %v1161
      %v1423 = vsel %vm1395, %v1390, %v1163
      %v1425 = vsel %vm1395, %v1392, %v1165
      %v1427 = vsel %vm1395, %v1394, %v1167
      %vm1428 = vcmask 162816
      %v1430 = vsel %vm1428, %v1397, %v1169
      %v1432 = vsel %vm1428, %v1399, %v1171
      %v1434 = vsel %vm1428, %v1401, %v1173
      %v1436 = vsel %vm1428, %v1403, %v1175
      %v1438 = vsel %vm1428, %v1405, %v1177
      %v1440 = vsel %vm1428, %v1407, %v1179
      %v1442 = vsel %vm1428, %v1409, %v1181
      %v1444 = vsel %vm1428, %v1411, %v1183
      %v1446 = vsel %vm1428, %v1413, %v1185
      %v1448 = vsel %vm1428, %v1415, %v1187
      %v1450 = vsel %vm1428, %v1417, %v1189
      %v1452 = vsel %vm1428, %v1419, %v1191
      %v1454 = vsel %vm1428, %v1421, %v1193
      %v1456 = vsel %vm1428, %v1423, %v1195
      %v1458 = vsel %vm1428, %v1425, %v1197
      %v1460 = vsel %vm1428, %v1427, %v1199
      %vm1461 = vcmask 195584
      %v1463 = vsel %vm1461, %v1430, %v1201
      %v1465 = vsel %vm1461, %v1432, %v1203
      %v1467 = vsel %vm1461, %v1434, %v1205
      %v1469 = vsel %vm1461, %v1436, %v1207
      %v1471 = vsel %vm1461, %v1438, %v1209
      %v1473 = vsel %vm1461, %v1440, %v1211
      %v1475 = vsel %vm1461, %v1442, %v1213
      %v1477 = vsel %vm1461, %v1444, %v1215
      %v1479 = vsel %vm1461, %v1446, %v1217
      %v1481 = vsel %vm1461, %v1448, %v1219
      %v1483 = vsel %vm1461, %v1450, %v1221
      %v1485 = vsel %vm1461, %v1452, %v1223
      %v1487 = vsel %vm1461, %v1454, %v1225
      %v1489 = vsel %vm1461, %v1456, %v1227
      %v1491 = vsel %vm1461, %v1458, %v1229
      %v1493 = vsel %vm1461, %v1460, %v1231
      %vm1494 = vcmask 228352
      %v1496 = vsel %vm1494, %v1463, %v1233
      %v1498 = vsel %vm1494, %v1465, %v1235
      %v1500 = vsel %vm1494, %v1467, %v1237
      %v1502 = vsel %vm1494, %v1469, %v1239
      %v1504 = vsel %vm1494, %v1471, %v1241
      %v1506 = vsel %vm1494, %v1473, %v1243
      %v1508 = vsel %vm1494, %v1475, %v1245
      %v1510 = vsel %vm1494, %v1477, %v1247
      %v1512 = vsel %vm1494, %v1479, %v1249
      %v1514 = vsel %vm1494, %v1481, %v1251
      %v1516 = vsel %vm1494, %v1483, %v1253
      %v1518 = vsel %vm1494, %v1485, %v1255
      %v1520 = vsel %vm1494, %v1487, %v1257
      %v1522 = vsel %vm1494, %v1489, %v1259
      %v1524 = vsel %vm1494, %v1491, %v1261
      %v1526 = vsel %vm1494, %v1493, %v1263
      %vm1527 = vcmask 261120
      %v1529 = vsel %vm1527, %v1496, %v1265
      %v1531 = vsel %vm1527, %v1498, %v1267
      %v1533 = vsel %vm1527, %v1500, %v1269
      %v1535 = vsel %vm1527, %v1502, %v1271
      %v1537 = vsel %vm1527, %v1504, %v1273
      %v1539 = vsel %vm1527, %v1506, %v1275
      %v1541 = vsel %vm1527, %v1508, %v1277
      %v1543 = vsel %vm1527, %v1510, %v1279
      %v1545 = vsel %vm1527, %v1512, %v1281
      %v1547 = vsel %vm1527, %v1514, %v1283
      %v1549 = vsel %vm1527, %v1516, %v1285
      %v1551 = vsel %vm1527, %v1518, %v1287
      %v1553 = vsel %vm1527, %v1520, %v1289
      %v1555 = vsel %vm1527, %v1522, %v1291
      %v1557 = vsel %vm1527, %v1524, %v1293
      %v1559 = vsel %vm1527, %v1526, %v1295
      %v1560 = vld [vmem:[%s5] sm:$0xf]
      %v1561 = vld [vmem:[%s5 + $0x4] sm:$0xf]
      %v1562 = vld [vmem:[%s5 + $0x8] sm:$0xf]
      %v1563 = vld [vmem:[%s5 + $0xc] sm:$0xf]
      %v1564 = vld [vmem:[%s5 + $0x10] sm:$0x3]
      %v1570 = vunpack.c.l.b16 %v1560
      %v1571 = vunpack.c.l.b16 %v1561
      %v1572 = vunpack.c.l.b16 %v1562
      %v1573 = vunpack.c.l.b16 %v1563
      %v1574 = vunpack.c.l.b16 %v1564
      %v1575 = vpack.c.b16 %v1571, %v1570
      %v1576 = vpack.c.b16 %v1573, %v1572
      %v1577 = vpack.c.b16 %v1574, %v1574
      %vm1580 = vcmask 293888
      %v1581 = vsel %vm1580, %v1529, 0
      %v1583 = vsel %vm1580, %v1531, 0
      %v1585 = vsel %vm1580, %v1533, 0
      %v1587 = vsel %vm1580, %v1535, 0
      %v1589 = vsel %vm1580, %v1537, 0
      %v1591 = vsel %vm1580, %v1539, 0
      %v1593 = vsel %vm1580, %v1541, 0
      %v1595 = vsel %vm1580, %v1543, 0
      %v1597 = vsel %vm1580, %v1545, 0
      %v1599 = vsel %vm1580, %v1547, 0
      %v1601 = vsel %vm1580, %v1549, 0
      %v1603 = vsel %vm1580, %v1551, 0
      %v1605 = vsel %vm1580, %v1553, 0
      %v1607 = vsel %vm1580, %v1555, 0
      %v1609 = vsel %vm1580, %v1557, 0
      %v1611 = vsel %vm1580, %v1559, 0
      %vm1613 = vcmask 1041408
      %v1615 = vsel %vm1613, %v1577, 0
      %1617 = vmatprep.subr.bf16.mxu0 0
      %1618 = vmatpush1.bf16.msra.mxu0 %v1575
      %1619 = vmatprep.subr.bf16.mxu0 0
      %1620 = vmatpush1.bf16.msra.mxu0 %v1576
      %1621 = vmatprep.subr.bf16.mxu0 0
      %1622 = vmatpush1.bf16.msra.mxu0 %v1615
      %1623 = vmatprep.subr.bf16.mxu0 0
      %1624 = vmatpush1.bf16.msra.mxu0 0
      %1625 = vmatprep.subr.bf16.mxu0 0
      %1626 = vmatpush1.bf16.msra.mxu0 0
      %1627 = vmatprep.subr.bf16.mxu0 0
      %1628 = vmatpush1.bf16.msra.mxu0 0
      %1629 = vmatprep.subr.bf16.mxu0 0
      %1630 = vmatpush1.bf16.msra.mxu0 0
      %1631 = vmatprep.subr.bf16.mxu0 0
      %1632 = vmatpush1.bf16.msra.mxu0 0
      %1633 = vmatprep.subr.bf16.mxu0 0
      %1634 = vmatpush1.bf16.msra.mxu0 0
      %1635 = vmatprep.subr.bf16.mxu0 0
      %1636 = vmatpush1.bf16.msra.mxu0 0
      %1637 = vmatprep.subr.bf16.mxu0 0
      %1638 = vmatpush1.bf16.msra.mxu0 0
      %1639 = vmatprep.subr.bf16.mxu0 0
      %1640 = vmatpush1.bf16.msra.mxu0 0
      %1641 = vmatprep.subr.bf16.mxu0 0
      %1642 = vmatpush1.bf16.msra.mxu0 0
      %1643 = vmatprep.subr.bf16.mxu0 0
      %1644 = vmatpush1.bf16.msra.mxu0 0
      %1645 = vmatprep.subr.bf16.mxu0 0
      %1646 = vmatpush1.bf16.msra.mxu0 0
      %1647 = vmatprep.subr.bf16.mxu0 0
      %1648 = vmatpush1.bf16.msra.mxu0 0
      %1649 = vmatprep.mubr.bf16.mxu0 0
      %1650 = vmatmul.mubr.bf16.gmra.mrb[0].mxu0 %v1581
      %v1651 = vpop.f32.mrb[0].mxu0
      %v1652 = vadd.f32 0.0, %v1651
      %v1653 = vpop.f32.mrb[0].mxu0
      %v1654 = vpop.f32.mrb[0].mxu0
      %v1655 = vadd.f32 0.0, %v1654
      %v1656 = vpop.f32.mrb[0].mxu0
      %1657 = vmatprep.mubr.bf16.mxu0 0
      %1658 = vmatmul.mubr.bf16.gmra.mrb[0].mxu0 %v1583
      %v1659 = vpop.f32.mrb[0].mxu0
      %v1660 = vadd.f32 0.0, %v1659
      %v1661 = vpop.f32.mrb[0].mxu0
      %v1662 = vpop.f32.mrb[0].mxu0
      %v1663 = vadd.f32 0.0, %v1662
      %v1664 = vpop.f32.mrb[0].mxu0
      %1665 = vmatprep.mubr.bf16.mxu0 0
      %1666 = vmatmul.mubr.bf16.gmra.mrb[0].mxu0 %v1585
      %v1667 = vpop.f32.mrb[0].mxu0
      %v1668 = vadd.f32 0.0, %v1667
      %v1669 = vpop.f32.mrb[0].mxu0
      %v1670 = vpop.f32.mrb[0].mxu0
      %v1671 = vadd.f32 0.0, %v1670
      %v1672 = vpop.f32.mrb[0].mxu0
      %1673 = vmatprep.mubr.bf16.mxu0 0
      %1674 = vmatmul.mubr.bf16.gmra.mrb[0].mxu0 %v1587
      %v1675 = vpop.f32.mrb[0].mxu0
      %v1676 = vadd.f32 0.0, %v1675
      %v1677 = vpop.f32.mrb[0].mxu0
      %v1678 = vpop.f32.mrb[0].mxu0
      %v1679 = vadd.f32 0.0, %v1678
      %v1680 = vpop.f32.mrb[0].mxu0
      %1681 = vmatprep.mubr.bf16.mxu0 0
      %1682 = vmatmul.mubr.bf16.gmra.mrb[0].mxu0 %v1589
      %v1683 = vpop.f32.mrb[0].mxu0
      %v1684 = vadd.f32 0.0, %v1683
      %v1685 = vpop.f32.mrb[0].mxu0
      %v1686 = vpop.f32.mrb[0].mxu0
      %v1687 = vadd.f32 0.0, %v1686
      %v1688 = vpop.f32.mrb[0].mxu0
      %1689 = vmatprep.mubr.bf16.mxu0 0
      %1690 = vmatmul.mubr.bf16.gmra.mrb[0].mxu0 %v1591
      %v1691 = vpop.f32.mrb[0].mxu0
      %v1692 = vadd.f32 0.0, %v1691
      %v1693 = vpop.f32.mrb[0].mxu0
      %v1694 = vpop.f32.mrb[0].mxu0
      %v1695 = vadd.f32 0.0, %v1694
      %v1696 = vpop.f32.mrb[0].mxu0
      %1697 = vmatprep.mubr.bf16.mxu0 0
      %1698 = vmatmul.mubr.bf16.gmra.mrb[0].mxu0 %v1593
      %v1699 = vpop.f32.mrb[0].mxu0
      %v1700 = vadd.f32 0.0, %v1699
      %v1701 = vpop.f32.mrb[0].mxu0
      %v1702 = vpop.f32.mrb[0].mxu0
      %v1703 = vadd.f32 0.0, %v1702
      %v1704 = vpop.f32.mrb[0].mxu0
      %1705 = vmatprep.mubr.bf16.mxu0 0
      %1706 = vmatmul.mubr.bf16.gmra.mrb[0].mxu0 %v1595
      %v1707 = vpop.f32.mrb[0].mxu0
      %v1708 = vadd.f32 0.0, %v1707
      %v1709 = vpop.f32.mrb[0].mxu0
      %v1710 = vpop.f32.mrb[0].mxu0
      %v1711 = vadd.f32 0.0, %v1710
      %v1712 = vpop.f32.mrb[0].mxu0
      %1713 = vmatprep.mubr.bf16.mxu0 0
      %1714 = vmatmul.mubr.bf16.gmra.mrb[0].mxu0 %v1597
      %v1715 = vpop.f32.mrb[0].mxu0
      %v1716 = vadd.f32 0.0, %v1715
      %v1717 = vpop.f32.mrb[0].mxu0
      %v1718 = vpop.f32.mrb[0].mxu0
      %v1719 = vadd.f32 0.0, %v1718
      %v1720 = vpop.f32.mrb[0].mxu0
      %1721 = vmatprep.mubr.bf16.mxu0 0
      %1722 = vmatmul.mubr.bf16.gmra.mrb[0].mxu0 %v1599
      %v1723 = vpop.f32.mrb[0].mxu0
      %v1724 = vadd.f32 0.0, %v1723
      %v1725 = vpop.f32.mrb[0].mxu0
      %v1726 = vpop.f32.mrb[0].mxu0
      %v1727 = vadd.f32 0.0, %v1726
      %v1728 = vpop.f32.mrb[0].mxu0
      %1729 = vmatprep.mubr.bf16.mxu0 0
      %1730 = vmatmul.mubr.bf16.gmra.mrb[0].mxu0 %v1601
      %v1731 = vpop.f32.mrb[0].mxu0
      %v1732 = vadd.f32 0.0, %v1731
      %v1733 = vpop.f32.mrb[0].mxu0
      %v1734 = vpop.f32.mrb[0].mxu0
      %v1735 = vadd.f32 0.0, %v1734
      %v1736 = vpop.f32.mrb[0].mxu0
      %1737 = vmatprep.mubr.bf16.mxu0 0
      %1738 = vmatmul.mubr.bf16.gmra.mrb[0].mxu0 %v1603
      %v1739 = vpop.f32.mrb[0].mxu0
      %v1740 = vadd.f32 0.0, %v1739
      %v1741 = vpop.f32.mrb[0].mxu0
      %v1742 = vpop.f32.mrb[0].mxu0
      %v1743 = vadd.f32 0.0, %v1742
      %v1744 = vpop.f32.mrb[0].mxu0
      %1745 = vmatprep.mubr.bf16.mxu0 0
      %1746 = vmatmul.mubr.bf16.gmra.mrb[0].mxu0 %v1605
      %v1747 = vpop.f32.mrb[0].mxu0
      %v1748 = vadd.f32 0.0, %v1747
      %v1749 = vpop.f32.mrb[0].mxu0
      %v1750 = vpop.f32.mrb[0].mxu0
      %v1751 = vadd.f32 0.0, %v1750
      %v1752 = vpop.f32.mrb[0].mxu0
      %1753 = vmatprep.mubr.bf16.mxu0 0
      %1754 = vmatmul.mubr.bf16.gmra.mrb[0].mxu0 %v1607
      %v1755 = vpop.f32.mrb[0].mxu0
      %v1756 = vadd.f32 0.0, %v1755
      %v1757 = vpop.f32.mrb[0].mxu0
      %v1758 = vpop.f32.mrb[0].mxu0
      %v1759 = vadd.f32 0.0, %v1758
      %v1760 = vpop.f32.mrb[0].mxu0
      %1761 = vmatprep.mubr.bf16.mxu0 0
      %1762 = vmatmul.mubr.bf16.gmra.mrb[0].mxu0 %v1609
      %v1763 = vpop.f32.mrb[0].mxu0
      %v1764 = vadd.f32 0.0, %v1763
      %v1765 = vpop.f32.mrb[0].mxu0
      %v1766 = vpop.f32.mrb[0].mxu0
      %v1767 = vadd.f32 0.0, %v1766
      %v1768 = vpop.f32.mrb[0].mxu0
      %1769 = vmatprep.mubr.bf16.mxu0 0
      %1770 = vmatmul.mubr.bf16.gmra.mrb[0].mxu0 %v1611
      %v1771 = vpop.f32.mrb[0].mxu0
      %v1772 = vadd.f32 0.0, %v1771
      %v1773 = vpop.f32.mrb[0].mxu0
      %v1774 = vpop.f32.mrb[0].mxu0
      %v1775 = vadd.f32 0.0, %v1774
      %v1776 = vpop.f32.mrb[0].mxu0
      %1777 = vdwg.mxu0
      %v1778 = vpack.c.bf16 %v1655, %v1652
      %v1779 = vpack.c.bf16 %v1663, %v1660
      %v1780 = vpack.c.bf16 %v1671, %v1668
      %v1781 = vpack.c.bf16 %v1679, %v1676
      %v1782 = vpack.c.bf16 %v1687, %v1684
      %v1783 = vpack.c.bf16 %v1695, %v1692
      %v1784 = vpack.c.bf16 %v1703, %v1700
      %v1785 = vpack.c.bf16 %v1711, %v1708
      %v1786 = vpack.c.bf16 %v1719, %v1716
      %v1787 = vpack.c.bf16 %v1727, %v1724
      %v1788 = vpack.c.bf16 %v1735, %v1732
      %v1789 = vpack.c.bf16 %v1743, %v1740
      %v1790 = vpack.c.bf16 %v1751, %v1748
      %v1791 = vpack.c.bf16 %v1759, %v1756
      %v1792 = vpack.c.bf16 %v1767, %v1764
      %v1793 = vpack.c.bf16 %v1775, %v1772
      %v1810 = vunpack.c.l.b16 %v1778
      %v1811 = vunpack.c.h.b16 %v1778
      %v1812 = vunpack.c.l.b16 %v1779
      %v1813 = vunpack.c.h.b16 %v1779
      %v1814 = vunpack.c.l.b16 %v1780
      %v1815 = vunpack.c.h.b16 %v1780
      %v1816 = vunpack.c.l.b16 %v1781
      %v1817 = vunpack.c.h.b16 %v1781
      %v1818 = vunpack.c.l.b16 %v1782
      %v1819 = vunpack.c.h.b16 %v1782
      %v1820 = vunpack.c.l.b16 %v1783
      %v1821 = vunpack.c.h.b16 %v1783
      %v1822 = vunpack.c.l.b16 %v1784
      %v1823 = vunpack.c.h.b16 %v1784
      %v1824 = vunpack.c.l.b16 %v1785
      %v1825 = vunpack.c.h.b16 %v1785
      %v1826 = vunpack.c.l.b16 %v1786
      %v1827 = vunpack.c.h.b16 %v1786
      %v1828 = vunpack.c.l.b16 %v1787
      %v1829 = vunpack.c.h.b16 %v1787
      %v1830 = vunpack.c.l.b16 %v1788
      %v1831 = vunpack.c.h.b16 %v1788
      %v1832 = vunpack.c.l.b16 %v1789
      %v1833 = vunpack.c.h.b16 %v1789
      %v1834 = vunpack.c.l.b16 %v1790
      %v1835 = vunpack.c.h.b16 %v1790
      %v1836 = vunpack.c.l.b16 %v1791
      %v1837 = vunpack.c.h.b16 %v1791
      %v1838 = vunpack.c.l.b16 %v1792
      %v1839 = vunpack.c.h.b16 %v1792
      %v1840 = vunpack.c.l.b16 %v1793
      %v1841 = vunpack.c.h.b16 %v1793
      %v1842 = vpack.c.b16 %v1810, %v1810
      %v1843 = vpack.c.b16 %v1811, %v1811
      %v1844 = vpack.c.b16 %v1812, %v1812
      %v1845 = vpack.c.b16 %v1813, %v1813
      %v1846 = vpack.c.b16 %v1814, %v1814
      %v1847 = vpack.c.b16 %v1815, %v1815
      %v1848 = vpack.c.b16 %v1816, %v1816
      %v1849 = vpack.c.b16 %v1817, %v1817
      %v1850 = vpack.c.b16 %v1818, %v1818
      %v1851 = vpack.c.b16 %v1819, %v1819
      %v1852 = vpack.c.b16 %v1820, %v1820
      %v1853 = vpack.c.b16 %v1821, %v1821
      %v1854 = vpack.c.b16 %v1822, %v1822
      %v1855 = vpack.c.b16 %v1823, %v1823
      %v1856 = vpack.c.b16 %v1824, %v1824
      %v1857 = vpack.c.b16 %v1825, %v1825
      %v1858 = vpack.c.b16 %v1826, %v1826
      %v1859 = vpack.c.b16 %v1827, %v1827
      %v1860 = vpack.c.b16 %v1828, %v1828
      %v1861 = vpack.c.b16 %v1829, %v1829
      %v1862 = vpack.c.b16 %v1830, %v1830
      %v1863 = vpack.c.b16 %v1831, %v1831
      %v1864 = vpack.c.b16 %v1832, %v1832
      %v1865 = vpack.c.b16 %v1833, %v1833
      %v1866 = vpack.c.b16 %v1834, %v1834
      %v1867 = vpack.c.b16 %v1835, %v1835
      %v1868 = vpack.c.b16 %v1836, %v1836
      %v1869 = vpack.c.b16 %v1837, %v1837
      %v1870 = vpack.c.b16 %v1838, %v1838
      %v1871 = vpack.c.b16 %v1839, %v1839
      %v1872 = vpack.c.b16 %v1840, %v1840
      %v1873 = vpack.c.b16 %v1841, %v1841
      %vm1906 = vcmask 257024
      %1907 = vst.msk [vmem:[%s452] sm:$0xf] %vm1906, %v1842
      %1908 = vst.msk [vmem:[%s452 + $0x4] sm:$0xf] %vm1906, %v1843
      %1909 = vst.msk [vmem:[%s452 + $0x8] sm:$0xf] %vm1906, %v1844
      %1910 = vst.msk [vmem:[%s452 + $0xc] sm:$0xf] %vm1906, %v1845
      %1911 = vst.msk [vmem:[%s452 + $0x10] sm:$0xf] %vm1906, %v1846
      %1912 = vst.msk [vmem:[%s452 + $0x14] sm:$0xf] %vm1906, %v1847
      %1913 = vst.msk [vmem:[%s452 + $0x18] sm:$0xf] %vm1906, %v1848
      %1914 = vst.msk [vmem:[%s452 + $0x1c] sm:$0xf] %vm1906, %v1849
      %1915 = vst.msk [vmem:[%s452 + $0x20] sm:$0xf] %vm1906, %v1850
      %1916 = vst.msk [vmem:[%s452 + $0x24] sm:$0xf] %vm1906, %v1851
      %1917 = vst.msk [vmem:[%s452 + $0x28] sm:$0xf] %vm1906, %v1852
      %1918 = vst.msk [vmem:[%s452 + $0x2c] sm:$0xf] %vm1906, %v1853
      %1919 = vst.msk [vmem:[%s452 + $0x30] sm:$0xf] %vm1906, %v1854
      %1920 = vst.msk [vmem:[%s452 + $0x34] sm:$0xf] %vm1906, %v1855
      %1921 = vst.msk [vmem:[%s452 + $0x38] sm:$0xf] %vm1906, %v1856
      %1922 = vst.msk [vmem:[%s452 + $0x3c] sm:$0xf] %vm1906, %v1857
      %1923 = vst.msk [vmem:[%s452 + $0x40] sm:$0xf] %vm1906, %v1858
      %1924 = vst.msk [vmem:[%s452 + $0x44] sm:$0xf] %vm1906, %v1859
      %1925 = vst.msk [vmem:[%s452 + $0x48] sm:$0xf] %vm1906, %v1860
      %1926 = vst.msk [vmem:[%s452 + $0x4c] sm:$0xf] %vm1906, %v1861
      %1927 = vst.msk [vmem:[%s452 + $0x50] sm:$0xf] %vm1906, %v1862
      %1928 = vst.msk [vmem:[%s452 + $0x54] sm:$0xf] %vm1906, %v1863
      %1929 = vst.msk [vmem:[%s452 + $0x58] sm:$0xf] %vm1906, %v1864
      %1930 = vst.msk [vmem:[%s452 + $0x5c] sm:$0xf] %vm1906, %v1865
      %1931 = vst.msk [vmem:[%s452 + $0x60] sm:$0xf] %vm1906, %v1866
      %1932 = vst.msk [vmem:[%s452 + $0x64] sm:$0xf] %vm1906, %v1867
      %1933 = vst.msk [vmem:[%s452 + $0x68] sm:$0xf] %vm1906, %v1868
      %1934 = vst.msk [vmem:[%s452 + $0x6c] sm:$0xf] %vm1906, %v1869
      %1935 = vst.msk [vmem:[%s452 + $0x70] sm:$0xf] %vm1906, %v1870
      %1936 = vst.msk [vmem:[%s452 + $0x74] sm:$0xf] %vm1906, %v1871
      %1937 = vst.msk [vmem:[%s452 + $0x78] sm:$0xf] %vm1906, %v1872
      %1938 = vst.msk [vmem:[%s452 + $0x7c] sm:$0xf] %vm1906, %v1873
      %v1939 = vsel %vm1527, %v1652, 0.0
      %v1940 = vsel %vm1527, %v1655, 0.0
      %v1941 = vadd.f32 %v1939, %v1940
      %v1942 = vsel %vm1527, %v1660, 0.0
      %v1943 = vadd.f32 %v1941, %v1942
      %v1944 = vsel %vm1527, %v1663, 0.0
      %v1945 = vadd.f32 %v1943, %v1944
      %v1946 = vsel %vm1527, %v1668, 0.0
      %v1947 = vadd.f32 %v1945, %v1946
      %v1948 = vsel %vm1527, %v1671, 0.0
      %v1949 = vadd.f32 %v1947, %v1948
      %v1950 = vsel %vm1527, %v1676, 0.0
      %v1951 = vadd.f32 %v1949, %v1950
      %v1952 = vsel %vm1527, %v1679, 0.0
      %v1953 = vadd.f32 %v1951, %v1952
      %v1954 = vsel %vm1527, %v1684, 0.0
      %v1955 = vadd.f32 %v1953, %v1954
      %v1956 = vsel %vm1527, %v1687, 0.0
      %v1957 = vadd.f32 %v1955, %v1956
      %v1958 = vsel %vm1527, %v1692, 0.0
      %v1959 = vadd.f32 %v1957, %v1958
      %v1960 = vsel %vm1527, %v1695, 0.0
      %v1961 = vadd.f32 %v1959, %v1960
      %v1962 = vsel %vm1527, %v1700, 0.0
      %v1963 = vadd.f32 %v1961, %v1962
      %v1964 = vsel %vm1527, %v1703, 0.0
      %v1965 = vadd.f32 %v1963, %v1964
      %v1966 = vsel %vm1527, %v1708, 0.0
      %v1967 = vadd.f32 %v1965, %v1966
      %v1968 = vsel %vm1527, %v1711, 0.0
      %v1969 = vadd.f32 %v1967, %v1968
      %v1970 = vsel %vm1527, %v1716, 0.0
      %v1971 = vadd.f32 %v1969, %v1970
      %v1972 = vsel %vm1527, %v1719, 0.0
      %v1973 = vadd.f32 %v1971, %v1972
      %v1974 = vsel %vm1527, %v1724, 0.0
      %v1975 = vadd.f32 %v1973, %v1974
      %v1976 = vsel %vm1527, %v1727, 0.0
      %v1977 = vadd.f32 %v1975, %v1976
      %v1978 = vsel %vm1527, %v1732, 0.0
      %v1979 = vadd.f32 %v1977, %v1978
      %v1980 = vsel %vm1527, %v1735, 0.0
      %v1981 = vadd.f32 %v1979, %v1980
      %v1982 = vsel %vm1527, %v1740, 0.0
      %v1983 = vadd.f32 %v1981, %v1982
      %v1984 = vsel %vm1527, %v1743, 0.0
      %v1985 = vadd.f32 %v1983, %v1984
      %v1986 = vsel %vm1527, %v1748, 0.0
      %v1987 = vadd.f32 %v1985, %v1986
      %v1988 = vsel %vm1527, %v1751, 0.0
      %v1989 = vadd.f32 %v1987, %v1988
      %v1990 = vsel %vm1527, %v1756, 0.0
      %v1991 = vadd.f32 %v1989, %v1990
      %v1992 = vsel %vm1527, %v1759, 0.0
      %v1993 = vadd.f32 %v1991, %v1992
      %v1994 = vsel %vm1527, %v1764, 0.0
      %v1995 = vadd.f32 %v1993, %v1994
      %v1996 = vsel %vm1527, %v1767, 0.0
      %v1997 = vadd.f32 %v1995, %v1996
      %v1998 = vsel %vm1527, %v1772, 0.0
      %v1999 = vadd.f32 %v1997, %v1998
      %v2000 = vsel %vm1527, %v1775, 0.0
      %v2001 = vadd.f32 %v1999, %v2000
      %v2002 = vrot.slane %v2001, 4
      %v2003 = vadd.f32 %v2001, %v2002
      %v2004 = vrot.slane %v2003, 2
      %v2005 = vadd.f32 %v2003, %v2004
      %v2006 = vrot.slane %v2005, 1
      %v2007 = vadd.f32 %v2005, %v2006
      %v2008 = vmul.f32 %v1652, %v1652
      %v2009 = vmul.f32 %v1655, %v1655
      %v2010 = vmul.f32 %v1660, %v1660
      %v2011 = vmul.f32 %v1663, %v1663
      %v2012 = vmul.f32 %v1668, %v1668
      %v2013 = vmul.f32 %v1671, %v1671
      %v2014 = vmul.f32 %v1676, %v1676
      %v2015 = vmul.f32 %v1679, %v1679
      %v2016 = vmul.f32 %v1684, %v1684
      %v2017 = vmul.f32 %v1687, %v1687
      %v2018 = vmul.f32 %v1692, %v1692
      %v2019 = vmul.f32 %v1695, %v1695
      %v2020 = vmul.f32 %v1700, %v1700
      %v2021 = vmul.f32 %v1703, %v1703
      %v2022 = vmul.f32 %v1708, %v1708
      %v2023 = vmul.f32 %v1711, %v1711
      %v2024 = vmul.f32 %v1716, %v1716
      %v2025 = vmul.f32 %v1719, %v1719
      %v2026 = vmul.f32 %v1724, %v1724
      %v2027 = vmul.f32 %v1727, %v1727
      %v2028 = vmul.f32 %v1732, %v1732
      %v2029 = vmul.f32 %v1735, %v1735
      %v2030 = vmul.f32 %v1740, %v1740
      %v2031 = vmul.f32 %v1743, %v1743
      %v2032 = vmul.f32 %v1748, %v1748
      %v2033 = vmul.f32 %v1751, %v1751
      %v2034 = vmul.f32 %v1756, %v1756
      %v2035 = vmul.f32 %v1759, %v1759
      %v2036 = vmul.f32 %v1764, %v1764
      %v2037 = vmul.f32 %v1767, %v1767
      %v2038 = vmul.f32 %v1772, %v1772
      %v2039 = vmul.f32 %v1775, %v1775
      %v2040 = vsel %vm1527, %v2008, 0.0
      %v2041 = vsel %vm1527, %v2009, 0.0
      %v2042 = vadd.f32 %v2040, %v2041
      %v2043 = vsel %vm1527, %v2010, 0.0
      %v2044 = vadd.f32 %v2042, %v2043
      %v2045 = vsel %vm1527, %v2011, 0.0
      %v2046 = vadd.f32 %v2044, %v2045
      %v2047 = vsel %vm1527, %v2012, 0.0
      %v2048 = vadd.f32 %v2046, %v2047
      %v2049 = vsel %vm1527, %v2013, 0.0
      %v2050 = vadd.f32 %v2048, %v2049
      %v2051 = vsel %vm1527, %v2014, 0.0
      %v2052 = vadd.f32 %v2050, %v2051
      %v2053 = vsel %vm1527, %v2015, 0.0
      %v2054 = vadd.f32 %v2052, %v2053
      %v2055 = vsel %vm1527, %v2016, 0.0
      %v2056 = vadd.f32 %v2054, %v2055
      %v2057 = vsel %vm1527, %v2017, 0.0
      %v2058 = vadd.f32 %v2056, %v2057
      %v2059 = vsel %vm1527, %v2018, 0.0
      %v2060 = vadd.f32 %v2058, %v2059
      %v2061 = vsel %vm1527, %v2019, 0.0
      %v2062 = vadd.f32 %v2060, %v2061
      %v2063 = vsel %vm1527, %v2020, 0.0
      %v2064 = vadd.f32 %v2062, %v2063
      %v2065 = vsel %vm1527, %v2021, 0.0
      %v2066 = vadd.f32 %v2064, %v2065
      %v2067 = vsel %vm1527, %v2022, 0.0
      %v2068 = vadd.f32 %v2066, %v2067
      %v2069 = vsel %vm1527, %v2023, 0.0
      %v2070 = vadd.f32 %v2068, %v2069
      %v2071 = vsel %vm1527, %v2024, 0.0
      %v2072 = vadd.f32 %v2070, %v2071
      %v2073 = vsel %vm1527, %v2025, 0.0
      %v2074 = vadd.f32 %v2072, %v2073
      %v2075 = vsel %vm1527, %v2026, 0.0
      %v2076 = vadd.f32 %v2074, %v2075
      %v2077 = vsel %vm1527, %v2027, 0.0
      %v2078 = vadd.f32 %v2076, %v2077
      %v2079 = vsel %vm1527, %v2028, 0.0
      %v2080 = vadd.f32 %v2078, %v2079
      %v2081 = vsel %vm1527, %v2029, 0.0
      %v2082 = vadd.f32 %v2080, %v2081
      %v2083 = vsel %vm1527, %v2030, 0.0
      %v2084 = vadd.f32 %v2082, %v2083
      %v2085 = vsel %vm1527, %v2031, 0.0
      %v2086 = vadd.f32 %v2084, %v2085
      %v2087 = vsel %vm1527, %v2032, 0.0
      %v2088 = vadd.f32 %v2086, %v2087
      %v2089 = vsel %vm1527, %v2033, 0.0
      %v2090 = vadd.f32 %v2088, %v2089
      %v2091 = vsel %vm1527, %v2034, 0.0
      %v2092 = vadd.f32 %v2090, %v2091
      %v2093 = vsel %vm1527, %v2035, 0.0
      %v2094 = vadd.f32 %v2092, %v2093
      %v2095 = vsel %vm1527, %v2036, 0.0
      %v2096 = vadd.f32 %v2094, %v2095
      %v2097 = vsel %vm1527, %v2037, 0.0
      %v2098 = vadd.f32 %v2096, %v2097
      %v2099 = vsel %vm1527, %v2038, 0.0
      %v2100 = vadd.f32 %v2098, %v2099
      %v2101 = vsel %vm1527, %v2039, 0.0
      %v2102 = vadd.f32 %v2100, %v2101
      %v2103 = vrot.slane %v2102, 4
      %v2104 = vadd.f32 %v2102, %v2103
      %v2105 = vrot.slane %v2104, 2
      %v2106 = vadd.f32 %v2104, %v2105
      %v2107 = vrot.slane %v2106, 1
      %v2108 = vadd.f32 %v2106, %v2107
      %v2109 = vld [vmem:[%s457] sm:$0x3]
      %vm2110 = vcmask 1040384
      %v2111 = vsel %vm2110, %v2007, %v2108
      %v2112 = vadd.f32 %v2109, %v2111
      %vm2113 = vcmask 254976
      %2114 = vst.msk [vmem:[%s457] sm:$0x3] %vm2113, %v2112
      %s2115 = smul.u32 16, %s24
      %p2116 = scmp.lt.s32.totalorder %s23, 1
      %s2117 = scalar_select %p2116, %s23, 1
      %p2118 = scmp.lt.s32.totalorder %s2115, 15
      %s2119 = scalar_select %p2118, %s2115, 15
      %s2120 = smul.addr %s2119, 2
      %s2121 = smul.addr %s2117, 32
      %s2122 = sadd.s32 %s2120, %s2121
      %s2123 = smul.addr %s2122, 4
      %s2124 = scalar_lea.vmem %s6, %s2123
      %p2125 = scmp.lt.s32.totalorder %s23, 1
      %s2126 = scalar_select %p2125, %s23, 1
      %s2127 = smul.addr %s2126, 2
      %s2128 = scalar_lea.vmem %s7, %s2127
      // Predicated region
      $region49: #{unet_conv_forward.3} parent=43 // pred_check
        %p2129 = pneg %p214
      $region50: #{unet_conv_forward.3} parent=43 // pred_check_branch
        %2131 = sbr.rel (%p2129) target = $region52
      $region51: #{unet_conv_forward.3} parent=43 // pred_region
        %s2132 = smul.u32 16, %s24
      $region52: #{unet_conv_forward.3} parent=43 // pred_fallthru
        _
      // Predicated region
      $region53: #{unet_conv_forward.3} parent=43 // pred_check
        %p2133 = pneg %p240
      $region54: #{unet_conv_forward.3} parent=43 // pred_check_branch
        %2135 = sbr.rel (%p2133) target = $region56
      $region55: #{unet_conv_forward.3} parent=43 // pred_region
        _
      $region56: #{unet_conv_forward.3} parent=43 // pred_fallthru
        _
    $region44: #{unet_conv_forward.3} parent=5 // pred_fallthru
      _
    %p2136 = scmp.le.s32.totalorder 2, %s14
    // Predicated region
    $region57: #{unet_conv_forward.3} parent=5 // pred_check
      %p2137 = pneg %p2136
    $region58: #{unet_conv_forward.3} parent=5 // pred_check_branch
      %2139 = sbr.rel (%p2137) target = $region60
    $region59: #{unet_conv_forward.3} parent=5 // pred_region
      %s2140 = ssub.s32 %s14, 2
      // Predicated region
      $region61: #{unet_conv_forward.3} parent=59 // pred_check
        %p2141 = pneg %p220
      $region62: #{unet_conv_forward.3} parent=59 // pred_check_branch
        %2143 = sbr.rel (%p2141) target = $region64
      $region63: #{unet_conv_forward.3} parent=59 // pred_region
        %s2144 = smul.u32 16, %s26
        %p2145 = scmp.lt.s32.totalorder %s25, 1
        %s2146 = scalar_select %p2145, %s25, 1
        %p2147 = scmp.lt.s32.totalorder %s2144, 15
        %s2148 = scalar_select %p2147, %s2144, 15
        %s2149 = smul.addr %s2148, 2
        %s2150 = smul.addr %s2146, 32
        %s2151 = sadd.s32 %s2149, %s2150
        %s2152 = smul.addr %s2151, 4
        %s2153 = scalar_lea.vmem %s6, %s2152
      $region64: #{unet_conv_forward.3} parent=59 // pred_fallthru
        _
      // Predicated region
      $region65: #{unet_conv_forward.3} parent=59 // pred_check
        %p2154 = pneg %p246
      $region66: #{unet_conv_forward.3} parent=59 // pred_check_branch
        %2156 = sbr.rel (%p2154) target = $region68
      $region67: #{unet_conv_forward.3} parent=59 // pred_region
        %p2157 = scmp.lt.s32.totalorder %s25, 1
        %s2158 = scalar_select %p2157, %s25, 1
        %s2159 = smul.addr %s2158, 2
        %s2160 = scalar_lea.vmem %s7, %s2159
      $region68: #{unet_conv_forward.3} parent=59 // pred_fallthru
        _
    $region60: #{unet_conv_forward.3} parent=5 // pred_fallthru
      _
  $region6: #{unet_conv_forward.3} parent=0 // loop_footer
    %s18 = sadd.s32 1, %s14
  $region7: #{unet_conv_forward.3} parent=0 // loop_footer_branch
    %13 = sbr.rel target = $region3
  $region8: #{unet_conv_forward.3} parent=0 // loop_exit
    _

// kernel: unet_conv_forward.4
$region0: #{unet_conv_forward.4}
  #allocation0 [shape = 'u32[]', space=smem, size = 0x4, offset = 0x4, fixed_abs, tag = 'smem constant byte address 0x4 - core index']
  #allocation1 [shape = 'u32[144,128]{1,0:T(1,128)}', space=vmem, size = 0x12000, scoped, tag = 'internal scratch']
  %s0 = inlined_call_operand.vmem [shape: f32[1,32], index: 0, kind: input, shape index: {}]
  %s1 = inlined_call_operand.vmem [shape: f32[1,32], index: 1, kind: input, shape index: {}]
  %s2 = inlined_call_operand.vmem [shape: bf16[2,16,16,32], index: 2, kind: input, shape index: {}, may-alias: {2,3,4}]
  %s3 = inlined_call_operand.vmem [shape: bf16[2,16,16,32], index: 3, kind: input, shape index: {}, may-alias: {2,3,4}]
  %s4 = inlined_call_operand.vmem [shape: bf16[2,16,16,32], index: 4, kind: input, shape index: {}, may-alias: {2,3,4}]
  %s5 = inlined_call_operand.vmem [shape: bf16[288,32], index: 5, kind: input, shape index: {}]
  %s6 = inlined_call_operand.vmem [shape: bf16[2,16,16,32], index: 6, kind: output, shape index: {0}]
  %s7 = inlined_call_operand.vmem [shape: f32[2,2,32], index: 7, kind: output, shape index: {1}]
  %8 = xla_tuple %s6, %s7
  %s9 = sld [smem:[#allocation0]]
  $region69: #{unet_conv_forward.4} parent=0
    _
  %s11 = ssub.s32 1, %s9
  %s12 = scalar_select 0, %s11, %s9
  loop: start=0, step=1, limit=4
  $region2: #{unet_conv_forward.4} parent=0 // loop_pre_header
    _
  $region3: #{unet_conv_forward.4} parent=0 // loop_header
    %s14 = sphi 0, %s18
    %p15 = scmp.ge.s32.totalorder %s14, 4
    %s21 = sphi 0, %s33
    %s22 = sphi 0, %s29
    %s23 = sphi 0, %s21
    %s24 = sphi 0, %s22
    %s25 = sphi 0, %s23
    %s26 = sphi 0, %s24
    %s34 = sphi 0, %s34
    %s36 = sphi 0, %s34
    %s37 = sphi 0, %s36
    %s51 = sphi 0, %s37
    %s55 = sphi 0, %s55
    %s57 = sphi 0, %s55
    %s58 = sphi 0, %s57
    %s72 = sphi 0, %s58
    %s80 = sphi 0, %s82
    %s83 = sphi 0, %s80
    %s84 = sphi 0, %s83
    %s100 = sphi 0, %s84
    %s116 = sphi 0, %s118
    %s119 = sphi 0, %s116
    %s120 = sphi 0, %s119
    %s136 = sphi 0, %s120
    %s152 = sphi 0, %s154
    %s155 = sphi 0, %s152
    %s156 = sphi 0, %s155
    %s172 = sphi 0, %s156
    %s176 = sphi 0, %s176
    %s178 = sphi 0, %s176
    %s179 = sphi 0, %s178
    %s193 = sphi 0, %s179
    %s201 = sphi 0, %s203
    %s204 = sphi 0, %s201
    %s205 = sphi 0, %s204
    %s221 = sphi 0, %s205
    %s227 = sphi 0, %s229
    %s230 = sphi 0, %s227
    %s231 = sphi 0, %s230
    %s247 = sphi 0, %s231
  $region4: #{unet_conv_forward.4} parent=0 // loop_header_branch
    %17 = sbr.rel (%p15) target = $region8
  $region5: #{unet_conv_forward.4} parent=0 // loop_body
    %s19 = ssub.s32 %s14, 1
    %s20 = ssub.s32 %s14, 2
    %s27 = sadd.s32 1, %s22
    %p28 = scmp.ge.s32.totalorder %s27, 1
    %s29 = scalar_select %p28, 0, %s27
    %s30 = sadd.s32 1, %s21
    %s31 = scalar_select %p28, %s30, %s21
    %p32 = scmp.ge.s32.totalorder %s31, 2
    %s33 = scalar_select %p32, 0, %s31
    %s35 = sadd.s32 %s34, 1
    %p38 = scmp.eq.s32.totalorder %s14, 1
    %p39 = scmp.ne.s32.totalorder %s34, %s36
    %p40 = scmp.eq.s32.totalorder %s14, 0
    %p41 = por %p39, %p40
    %p42 = scmp.ne.s32.totalorder %s34, %s36
    %p43 = scmp.eq.s32.totalorder %s19, 1
    %p44 = por %p42, %p43
    %p45 = scmp.ne.s32.totalorder %s36, %s37
    %p46 = scmp.eq.s32.totalorder %s19, 0
    %p47 = por %p45, %p46
    %p48 = scmp.ne.s32.totalorder %s36, %s37
    %p49 = scmp.eq.s32.totalorder %s20, 1
    %p50 = por %p48, %p49
    %p52 = scmp.ne.s32.totalorder %s37, %s51
    %p53 = scmp.eq.s32.totalorder %s20, 0
    %p54 = por %p52, %p53
    %s56 = sadd.s32 %s55, 1
    %p59 = scmp.eq.s32.totalorder %s14, 1
    %p60 = scmp.ne.s32.totalorder %s55, %s57
    %p61 = scmp.eq.s32.totalorder %s14, 0
    %p62 = por %p60, %p61
    %p63 = scmp.ne.s32.totalorder %s55, %s57
    %p64 = scmp.eq.s32.totalorder %s19, 1
    %p65 = por %p63, %p64
    %p66 = scmp.ne.s32.totalorder %s57, %s58
    %p67 = scmp.eq.s32.totalorder %s19, 0
    %p68 = por %p66, %p67
    %p69 = scmp.ne.s32.totalorder %s57, %s58
    %p70 = scmp.eq.s32.totalorder %s20, 1
    %p71 = por %p69, %p70
    %p73 = scmp.ne.s32.totalorder %s58, %s72
    %p74 = scmp.eq.s32.totalorder %s20, 0
    %p75 = por %p73, %p74
    %s76 = ssub.s32 %s21, %s33
    %s77 = ssub.s32 %s22, %s29
    %s78 = sor.u32 %s76, %s77
    %p79 = scmp.eq.s32.totalorder %s78, 0
    %s81 = sadd.s32 %s80, 1
    %s82 = scalar_select %p79, %s80, %s81
    %p85 = pneg %p79
    %p86 = scmp.eq.s32.totalorder %s14, 1
    %p87 = por %p85, %p86
    %p88 = scmp.ne.s32.totalorder %s80, %s83
    %p89 = scmp.eq.s32.totalorder %s14, 0
    %p90 = por %p88, %p89
    %p91 = scmp.ne.s32.totalorder %s80, %s83
    %p92 = scmp.eq.s32.totalorder %s19, 1
    %p93 = por %p91, %p92
    %p94 = scmp.ne.s32.totalorder %s83, %s84
    %p95 = scmp.eq.s32.totalorder %s19, 0
    %p96 = por %p94, %p95
    %p97 = scmp.ne.s32.totalorder %s83, %s84
    %p98 = scmp.eq.s32.totalorder %s20, 1
    %p99 = por %p97, %p98
    %p101 = scmp.ne.s32.totalorder %s84, %s100
    %p102 = scmp.eq.s32.totalorder %s20, 0
    %p103 = por %p101, %p102
    %s104 = smul.u32 %s22, 16
    %s105 = ssub.s32 %s104, 1
    %p106 = scmp.gt.s32.totalorder %s105, 0
    %s107 = scalar_select %p106, %s105, 0
    %s108 = smul.u32 %s29, 16
    %s109 = ssub.s32 %s108, 1
    %p110 = scmp.gt.s32.totalorder %s109, 0
    %s111 = scalar_select %p110, %s109, 0
    %s112 = ssub.s32 %s21, %s33
    %s113 = ssub.s32 %s107, %s111
    %s114 = sor.u32 %s112, %s113
    %p115 = scmp.eq.s32.totalorder %s114, 0
    %s117 = sadd.s32 %s116, 1
    %s118 = scalar_select %p115, %s116, %s117
    %p121 = pneg %p115
    %p122 = scmp.eq.s32.totalorder %s14, 1
    %p123 = por %p121, %p122
    %p124 = scmp.ne.s32.totalorder %s116, %s119
    %p125 = scmp.eq.s32.totalorder %s14, 0
    %p126 = por %p124, %p125
    %p127 = scmp.ne.s32.totalorder %s116, %s119
    %p128 = scmp.eq.s32.totalorder %s19, 1
    %p129 = por %p127, %p128
    %p130 = scmp.ne.s32.totalorder %s119, %s120
    %p131 = scmp.eq.s32.totalorder %s19, 0
    %p132 = por %p130, %p131
    %p133 = scmp.ne.s32.totalorder %s119, %s120
    %p134 = scmp.eq.s32.totalorder %s20, 1
    %p135 = por %p133, %p134
    %p137 = scmp.ne.s32.totalorder %s120, %s136
    %p138 = scmp.eq.s32.totalorder %s20, 0
    %p139 = por %p137, %p138
    %s140 = smul.u32 %s22, 16
    %s141 = sadd.s32 %s140, 16
    %p142 = scmp.lt.s32.totalorder %s141, 15
    %s143 = scalar_select %p142, %s141, 15
    %s144 = smul.u32 %s29, 16
    %s145 = sadd.s32 %s144, 16
    %p146 = scmp.lt.s32.totalorder %s145, 15
    %s147 = scalar_select %p146, %s145, 15
    %s148 = ssub.s32 %s21, %s33
    %s149 = ssub.s32 %s143, %s147
    %s150 = sor.u32 %s148, %s149
    %p151 = scmp.eq.s32.totalorder %s150, 0
    %s153 = sadd.s32 %s152, 1
    %s154 = scalar_select %p151, %s152, %s153
    %p157 = pneg %p151
    %p158 = scmp.eq.s32.totalorder %s14, 1
    %p159 = por %p157, %p158
    %p160 = scmp.ne.s32.totalorder %s152, %s155
    %p161 = scmp.eq.s32.totalorder %s14, 0
    %p162 = por %p160, %p161
    %p163 = scmp.ne.s32.totalorder %s152, %s155
    %p164 = scmp.eq.s32.totalorder %s19, 1
    %p165 = por %p163, %p164
    %p166 = scmp.ne.s32.totalorder %s155, %s156
    %p167 = scmp.eq.s32.totalorder %s19, 0
    %p168 = por %p166, %p167
    %p169 = scmp.ne.s32.totalorder %s155, %s156
    %p170 = scmp.eq.s32.totalorder %s20, 1
    %p171 = por %p169, %p170
    %p173 = scmp.ne.s32.totalorder %s156, %s172
    %p174 = scmp.eq.s32.totalorder %s20, 0
    %p175 = por %p173, %p174
    %s177 = sadd.s32 %s176, 1
    %p180 = scmp.eq.s32.totalorder %s14, 1
    %p181 = scmp.ne.s32.totalorder %s176, %s178
    %p182 = scmp.eq.s32.totalorder %s14, 0
    %p183 = por %p181, %p182
    %p184 = scmp.ne.s32.totalorder %s176, %s178
    %p185 = scmp.eq.s32.totalorder %s19, 1
    %p186 = por %p184, %p185
    %p187 = scmp.ne.s32.totalorder %s178, %s179
    %p188 = scmp.eq.s32.totalorder %s19, 0
    %p189 = por %p187, %p188
    %p190 = scmp.ne.s32.totalorder %s178, %s179
    %p191 = scmp.eq.s32.totalorder %s20, 1
    %p192 = por %p190, %p191
    %p194 = scmp.ne.s32.totalorder %s179, %s193
    %p195 = scmp.eq.s32.totalorder %s20, 0
    %p196 = por %p194, %p195
    %s197 = ssub.s32 %s21, %s33
    %s198 = ssub.s32 %s22, %s29
    %s199 = sor.u32 %s197, %s198
    %p200 = scmp.eq.s32.totalorder %s199, 0
    %s202 = sadd.s32 %s201, 1
    %s203 = scalar_select %p200, %s201, %s202
    %p206 = pneg %p200
    %p207 = scmp.eq.s32.totalorder %s14, 1
    %p208 = por %p206, %p207
    %p209 = scmp.ne.s32.totalorder %s201, %s204
    %p210 = scmp.eq.s32.totalorder %s14, 0
    %p211 = por %p209, %p210
    %p212 = scmp.ne.s32.totalorder %s201, %s204
    %p213 = scmp.eq.s32.totalorder %s19, 1
    %p214 = por %p212, %p213
    %p215 = scmp.ne.s32.totalorder %s204, %s205
    %p216 = scmp.eq.s32.totalorder %s19, 0
    %p217 = por %p215, %p216
    %p218 = scmp.ne.s32.totalorder %s204, %s205
    %p219 = scmp.eq.s32.totalorder %s20, 1
    %p220 = por %p218, %p219
    %p222 = scmp.ne.s32.totalorder %s205, %s221
    %p223 = scmp.eq.s32.totalorder %s20, 0
    %p224 = por %p222, %p223
    %s225 = ssub.s32 %s21, %s33
    %p226 = scmp.eq.s32.totalorder %s225, 0
    %s228 = sadd.s32 %s227, 1
    %s229 = scalar_select %p226, %s227, %s228
    %p232 = pneg %p226
    %p233 = scmp.eq.s32.totalorder %s14, 1
    %p234 = por %p232, %p233
    %p235 = scmp.ne.s32.totalorder %s227, %s230
    %p236 = scmp.eq.s32.totalorder %s14, 0
    %p237 = por %p235, %p236
    %p238 = scmp.ne.s32.totalorder %s227, %s230
    %p239 = scmp.eq.s32.totalorder %s19, 1
    %p240 = por %p238, %p239
    %p241 = scmp.ne.s32.totalorder %s230, %s231
    %p242 = scmp.eq.s32.totalorder %s19, 0
    %p243 = por %p241, %p242
    %p244 = scmp.ne.s32.totalorder %s230, %s231
    %p245 = scmp.eq.s32.totalorder %s20, 1
    %p246 = por %p244, %p245
    %p248 = scmp.ne.s32.totalorder %s231, %s247
    %p249 = scmp.eq.s32.totalorder %s20, 0
    %p250 = por %p248, %p249
    %p251 = scmp.le.s32.totalorder 1, %s14
    %p252 = scmp.lt.s32.totalorder %s14, 3
    %p253 = pnand %p251, %p252
    %p254 = pneg %p253
    // Predicated region
    $region9: #{unet_conv_forward.4} parent=5 // pred_check
      _
    $region10: #{unet_conv_forward.4} parent=5 // pred_check_branch
      %256 = sbr.rel (%p253) target = $region12
    $region11: #{unet_conv_forward.4} parent=5 // pred_region
      %s257 = ssub.s32 %s14, 1
      // Predicated region
      $region13: #{unet_conv_forward.4} parent=11 // pred_check
        %p258 = pneg %p47
      $region14: #{unet_conv_forward.4} parent=11 // pred_check_branch
        %260 = sbr.rel (%p258) target = $region16
      $region15: #{unet_conv_forward.4} parent=11 // pred_region
        _
      $region16: #{unet_conv_forward.4} parent=11 // pred_fallthru
        _
      // Predicated region
      $region17: #{unet_conv_forward.4} parent=11 // pred_check
        %p261 = pneg %p68
      $region18: #{unet_conv_forward.4} parent=11 // pred_check_branch
        %263 = sbr.rel (%p261) target = $region20
      $region19: #{unet_conv_forward.4} parent=11 // pred_region
        _
      $region20: #{unet_conv_forward.4} parent=11 // pred_fallthru
        _
      // Predicated region
      $region21: #{unet_conv_forward.4} parent=11 // pred_check
        %p264 = pneg %p189
      $region22: #{unet_conv_forward.4} parent=11 // pred_check_branch
        %266 = sbr.rel (%p264) target = $region24
      $region23: #{unet_conv_forward.4} parent=11 // pred_region
        _
      $region24: #{unet_conv_forward.4} parent=11 // pred_fallthru
        _
    $region12: #{unet_conv_forward.4} parent=5 // pred_fallthru
      _
    %p267 = scmp.lt.s32.totalorder %s14, 2
    // Predicated region
    $region25: #{unet_conv_forward.4} parent=5 // pred_check
      %p268 = pneg %p267
    $region26: #{unet_conv_forward.4} parent=5 // pred_check_branch
      %270 = sbr.rel (%p268) target = $region28
    $region27: #{unet_conv_forward.4} parent=5 // pred_region
      // Predicated region
      $region29: #{unet_conv_forward.4} parent=27 // pred_check
        %p271 = pneg %p90
      $region30: #{unet_conv_forward.4} parent=27 // pred_check_branch
        %273 = sbr.rel (%p271) target = $region32
      $region31: #{unet_conv_forward.4} parent=27 // pred_region
        %s274 = smul.u32 16, %s22
        %p275 = scmp.lt.s32.totalorder %s21, 1
        %s276 = scalar_select %p275, %s21, 1
        %p277 = scmp.lt.s32.totalorder %s274, 15
        %s278 = scalar_select %p277, %s274, 15
        %s279 = smul.addr %s278, 2
        %s280 = smul.addr %s276, 32
        %s281 = sadd.s32 %s279, %s280
        %s282 = smul.addr %s281, 4
        %s283 = scalar_lea.vmem %s2, %s282
        %s284 = smul.u32 16, %s22
      $region32: #{unet_conv_forward.4} parent=27 // pred_fallthru
        _
      // Predicated region
      $region33: #{unet_conv_forward.4} parent=27 // pred_check
        %p285 = pneg %p126
      $region34: #{unet_conv_forward.4} parent=27 // pred_check_branch
        %287 = sbr.rel (%p285) target = $region36
      $region35: #{unet_conv_forward.4} parent=27 // pred_region
        %s288 = smul.u32 %s22, 16
        %s289 = ssub.s32 %s288, 1
        %p290 = scmp.gt.s32.totalorder %s289, 0
        %s291 = scalar_select %p290, %s289, 0
        %p292 = scmp.lt.s32.totalorder %s21, 1
        %s293 = scalar_select %p292, %s21, 1
        %p294 = scmp.lt.s32.totalorder %s291, 15
        %s295 = scalar_select %p294, %s291, 15
        %s296 = smul.addr %s295, 2
        %s297 = smul.addr %s293, 32
        %s298 = sadd.s32 %s296, %s297
        %s299 = smul.addr %s298, 4
        %s300 = scalar_lea.vmem %s3, %s299
        %s301 = smul.u32 %s22, 16
        %s302 = ssub.s32 %s301, 1
        %p303 = scmp.gt.s32.totalorder %s302, 0
        %s304 = scalar_select %p303, %s302, 0
      $region36: #{unet_conv_forward.4} parent=27 // pred_fallthru
        _
      // Predicated region
      $region37: #{unet_conv_forward.4} parent=27 // pred_check
        %p305 = pneg %p162
      $region38: #{unet_conv_forward.4} parent=27 // pred_check_branch
        %307 = sbr.rel (%p305) target = $region40
      $region39: #{unet_conv_forward.4} parent=27 // pred_region
        %s308 = smul.u32 %s22, 16
        %s309 = sadd.s32 %s308, 16
        %p310 = scmp.lt.s32.totalorder %s309, 15
        %s311 = scalar_select %p310, %s309, 15
        %p312 = scmp.lt.s32.totalorder %s21, 1
        %s313 = scalar_select %p312, %s21, 1
        %p314 = scmp.lt.s32.totalorder %s311, 15
        %s315 = scalar_select %p314, %s311, 15
        %s316 = smul.addr %s315, 2
        %s317 = smul.addr %s313, 32
        %s318 = sadd.s32 %s316, %s317
        %s319 = smul.addr %s318, 4
        %s320 = scalar_lea.vmem %s4, %s319
        %s321 = smul.u32 %s22, 16
        %s322 = sadd.s32 %s321, 16
        %p323 = scmp.lt.s32.totalorder %s322, 15
        %s324 = scalar_select %p323, %s322, 15
      $region40: #{unet_conv_forward.4} parent=27 // pred_fallthru
        _
    $region28: #{unet_conv_forward.4} parent=5 // pred_fallthru
      _
    %p325 = scmp.le.s32.totalorder 1, %s14
    %p326 = scmp.lt.s32.totalorder %s14, 3
    %p327 = pnand %p325, %p326
    %p328 = pneg %p327
    // Predicated region
    $region41: #{unet_conv_forward.4} parent=5 // pred_check
      _
    $region42: #{unet_conv_forward.4} parent=5 // pred_check_branch
      %330 = sbr.rel (%p327) target = $region44
    $region43: #{unet_conv_forward.4} parent=5 // pred_region
      %s331 = ssub.s32 %s14, 1
      %p332 = pneg %p47
      %p333 = pneg %p44
      %p334 = pneg %p68
      %p335 = pneg %p65
      %s336 = smul.u32 16, %s24
      %p337 = scmp.lt.s32.totalorder %s23, 1
      %s338 = scalar_select %p337, %s23, 1
      %p339 = scmp.lt.s32.totalorder %s336, 15
      %s340 = scalar_select %p339, %s336, 15
      %s341 = smul.addr %s340, 2
      %s342 = smul.addr %s338, 32
      %s343 = sadd.s32 %s341, %s342
      %s344 = smul.addr %s343, 4
      %s345 = scalar_lea.vmem %s2, %s344
      %p346 = pneg %p96
      %p347 = pneg %p93
      %s348 = smul.u32 %s24, 16
      %s349 = ssub.s32 %s348, 1
      %p350 = scmp.gt.s32.totalorder %s349, 0
      %s351 = scalar_select %p350, %s349, 0
      %p352 = scmp.lt.s32.totalorder %s23, 1
      %s353 = scalar_select %p352, %s23, 1
      %p354 = scmp.lt.s32.totalorder %s351, 15
      %s355 = scalar_select %p354, %s351, 15
      %s356 = smul.addr %s355, 2
      %s357 = smul.addr %s353, 32
      %s358 = sadd.s32 %s356, %s357
      %s359 = smul.addr %s358, 4
      %s360 = scalar_lea.vmem %s3, %s359
      %p361 = pneg %p132
      %p362 = pneg %p129
      %s363 = smul.u32 %s24, 16
      %s364 = sadd.s32 %s363, 16
      %p365 = scmp.lt.s32.totalorder %s364, 15
      %s366 = scalar_select %p365, %s364, 15
      %p367 = scmp.lt.s32.totalorder %s23, 1
      %s368 = scalar_select %p367, %s23, 1
      %p369 = scmp.lt.s32.totalorder %s366, 15
      %s370 = scalar_select %p369, %s366, 15
      %s371 = smul.addr %s370, 2
      %s372 = smul.addr %s368, 32
      %s373 = sadd.s32 %s371, %s372
      %s374 = smul.addr %s373, 4
      %s375 = scalar_lea.vmem %s4, %s374
      %p376 = pneg %p168
      %p377 = pneg %p165
      %p378 = pneg %p189
      %p379 = pneg %p186
      %p380 = pneg %p217
      %p381 = pneg %p214
      %s382 = smul.u32 16, %s24
      %p383 = scmp.lt.s32.totalorder %s23, 1
      %s384 = scalar_select %p383, %s23, 1
      %p385 = scmp.lt.s32.totalorder %s382, 15
      %s386 = scalar_select %p385, %s382, 15
      %s387 = smul.addr %s386, 2
      %s388 = smul.addr %s384, 32
      %s389 = sadd.s32 %s387, %s388
      %s390 = smul.addr %s389, 4
      %s391 = scalar_lea.vmem %s6, %s390
      %p392 = pneg %p243
      %p393 = pneg %p240
      %p394 = scmp.lt.s32.totalorder %s23, 1
      %s395 = scalar_select %p394, %s23, 1
      %s396 = smul.addr %s395, 2
      %s397 = scalar_lea.vmem %s7, %s396
      %s398 = smul.u32 16, %s24
      %p399 = scmp.lt.s32.totalorder %s23, 1
      %s400 = scalar_select %p399, %s23, 1
      %p401 = scmp.lt.s32.totalorder %s398, 15
      %s402 = scalar_select %p401, %s398, 15
      %s403 = smul.addr %s402, 2
      %s404 = smul.addr %s400, 32
      %s405 = sadd.s32 %s403, %s404
      %s406 = smul.addr %s405, 4
      %s407 = scalar_lea.vmem %s2, %s406
      %s408 = smul.u32 16, %s24
      %s409 = smul.u32 %s24, 16
      %s410 = ssub.s32 %s409, 1
      %p411 = scmp.gt.s32.totalorder %s410, 0
      %s412 = scalar_select %p411, %s410, 0
      %p413 = scmp.lt.s32.totalorder %s23, 1
      %s414 = scalar_select %p413, %s23, 1
      %p415 = scmp.lt.s32.totalorder %s412, 15
      %s416 = scalar_select %p415, %s412, 15
      %s417 = smul.addr %s416, 2
      %s418 = smul.addr %s414, 32
      %s419 = sadd.s32 %s417, %s418
      %s420 = smul.addr %s419, 4
      %s421 = scalar_lea.vmem %s3, %s420
      %s422 = smul.u32 %s24, 16
      %s423 = ssub.s32 %s422, 1
      %p424 = scmp.gt.s32.totalorder %s423, 0
      %s425 = scalar_select %p424, %s423, 0
      %s426 = smul.u32 %s24, 16
      %s427 = sadd.s32 %s426, 16
      %p428 = scmp.lt.s32.totalorder %s427, 15
      %s429 = scalar_select %p428, %s427, 15
      %p430 = scmp.lt.s32.totalorder %s23, 1
      %s431 = scalar_select %p430, %s23, 1
      %p432 = scmp.lt.s32.totalorder %s429, 15
      %s433 = scalar_select %p432, %s429, 15
      %s434 = smul.addr %s433, 2
      %s435 = smul.addr %s431, 32
      %s436 = sadd.s32 %s434, %s435
      %s437 = smul.addr %s436, 4
      %s438 = scalar_lea.vmem %s4, %s437
      %s439 = smul.u32 %s24, 16
      %s440 = sadd.s32 %s439, 16
      %p441 = scmp.lt.s32.totalorder %s440, 15
      %s442 = scalar_select %p441, %s440, 15
      %s443 = smul.u32 16, %s24
      %p444 = scmp.lt.s32.totalorder %s23, 1
      %s445 = scalar_select %p444, %s23, 1
      %p446 = scmp.lt.s32.totalorder %s443, 15
      %s447 = scalar_select %p446, %s443, 15
      %s448 = smul.addr %s447, 2
      %s449 = smul.addr %s445, 32
      %s450 = sadd.s32 %s448, %s449
      %s451 = smul.addr %s450, 4
      %s452 = scalar_lea.vmem %s6, %s451
      %s453 = smul.u32 16, %s24
      %p454 = scmp.lt.s32.totalorder %s23, 1
      %s455 = scalar_select %p454, %s23, 1
      %s456 = smul.addr %s455, 2
      %s457 = scalar_lea.vmem %s7, %s456
      %p459 = scmp.eq.s32.totalorder %s24, 0
      // Predicated region
      $region45: #{unet_conv_forward.4} parent=43 // pred_check
        %p460 = pneg %p459
      $region46: #{unet_conv_forward.4} parent=43 // pred_check_branch
        %462 = sbr.rel (%p460) target = $region48
      $region47: #{unet_conv_forward.4} parent=43 // pred_region
        %vm463 = vcmask 254976
        %464 = vst.msk [vmem:[%s457] sm:$0x3] %vm463, 0.0
      $region48: #{unet_conv_forward.4} parent=43 // pred_fallthru
        _
      %v465 = vld [vmem:[%s407] sm:$0xf]
      %v466 = vld [vmem:[%s407 + $0x4] sm:$0xf]
      %v467 = vld [vmem:[%s407 + $0x8] sm:$0xf]
      %v468 = vld [vmem:[%s407 + $0xc] sm:$0xf]
      %v469 = vld [vmem:[%s407 + $0x10] sm:$0xf]
      %v470 = vld [vmem:[%s407 + $0x14] sm:$0xf]
      %v471 = vld [vmem:[%s407 + $0x18] sm:$0xf]
      %v472 = vld [vmem:[%s407 + $0x1c] sm:$0xf]
      %v473 = vld [vmem:[%s407 + $0x20] sm:$0xf]
      %v474 = vld [vmem:[%s407 + $0x24] sm:$0xf]
      %v475 = vld [vmem:[%s407 + $0x28] sm:$0xf]
      %v476 = vld [vmem:[%s407 + $0x2c] sm:$0xf]
      %v477 = vld [vmem:[%s407 + $0x30] sm:$0xf]
      %v478 = vld [vmem:[%s407 + $0x34] sm:$0xf]
      %v479 = vld [vmem:[%s407 + $0x38] sm:$0xf]
      %v480 = vld [vmem:[%s407 + $0x3c] sm:$0xf]
      %v481 = vld [vmem:[%s407 + $0x40] sm:$0xf]
      %v482 = vld [vmem:[%s407 + $0x44] sm:$0xf]
      %v483 = vld [vmem:[%s407 + $0x48] sm:$0xf]
      %v484 = vld [vmem:[%s407 + $0x4c] sm:$0xf]
      %v485 = vld [vmem:[%s407 + $0x50] sm:$0xf]
      %v486 = vld [vmem:[%s407 + $0x54] sm:$0xf]
      %v487 = vld [vmem:[%s407 + $0x58] sm:$0xf]
      %v488 = vld [vmem:[%s407 + $0x5c] sm:$0xf]
      %v489 = vld [vmem:[%s407 + $0x60] sm:$0xf]
      %v490 = vld [vmem:[%s407 + $0x64] sm:$0xf]
      %v491 = vld [vmem:[%s407 + $0x68] sm:$0xf]
      %v492 = vld [vmem:[%s407 + $0x6c] sm:$0xf]
      %v493 = vld [vmem:[%s407 + $0x70] sm:$0xf]
      %v494 = vld [vmem:[%s407 + $0x74] sm:$0xf]
      %v495 = vld [vmem:[%s407 + $0x78] sm:$0xf]
      %v496 = vld [vmem:[%s407 + $0x7c] sm:$0xf]
      %v497 = vunpack.c.l.bf16 %v465
      %v498 = vunpack.c.l.bf16 %v466
      %v499 = vunpack.c.l.bf16 %v467
      %v500 = vunpack.c.l.bf16 %v468
      %v501 = vunpack.c.l.bf16 %v469
      %v502 = vunpack.c.l.bf16 %v470
      %v503 = vunpack.c.l.bf16 %v471
      %v504 = vunpack.c.l.bf16 %v472
      %v505 = vunpack.c.l.bf16 %v473
      %v506 = vunpack.c.l.bf16 %v474
      %v507 = vunpack.c.l.bf16 %v475
      %v508 = vunpack.c.l.bf16 %v476
      %v509 = vunpack.c.l.bf16 %v477
      %v510 = vunpack.c.l.bf16 %v478
      %v511 = vunpack.c.l.bf16 %v479
      %v512 = vunpack.c.l.bf16 %v480
      %v513 = vunpack.c.l.bf16 %v481
      %v514 = vunpack.c.l.bf16 %v482
      %v515 = vunpack.c.l.bf16 %v483
      %v516 = vunpack.c.l.bf16 %v484
      %v517 = vunpack.c.l.bf16 %v485
      %v518 = vunpack.c.l.bf16 %v486
      %v519 = vunpack.c.l.bf16 %v487
      %v520 = vunpack.c.l.bf16 %v488
      %v521 = vunpack.c.l.bf16 %v489
      %v522 = vunpack.c.l.bf16 %v490
      %v523 = vunpack.c.l.bf16 %v491
      %v524 = vunpack.c.l.bf16 %v492
      %v525 = vunpack.c.l.bf16 %v493
      %v526 = vunpack.c.l.bf16 %v494
      %v527 = vunpack.c.l.bf16 %v495
      %v528 = vunpack.c.l.bf16 %v496
      %v529 = vld [vmem:[%s0] sm:$0x1]
      %v531 = vlaneseq
      %v532 = vshrl.u32 %v531, 7
      %v533 = vsub.s32 0, %v532
      %v534 = vrot.slane %v529, %v533
      %v536 = vmul.f32 %v497, %v534
      %v537 = vmul.f32 %v498, %v534
      %v538 = vmul.f32 %v499, %v534
      %v539 = vmul.f32 %v500, %v534
      %v540 = vmul.f32 %v501, %v534
      %v541 = vmul.f32 %v502, %v534
      %v542 = vmul.f32 %v503, %v534
      %v543 = vmul.f32 %v504, %v534
      %v544 = vmul.f32 %v505, %v534
      %v545 = vmul.f32 %v506, %v534
      %v546 = vmul.f32 %v507, %v534
      %v547 = vmul.f32 %v508, %v534
      %v548 = vmul.f32 %v509, %v534
      %v549 = vmul.f32 %v510, %v534
      %v550 = vmul.f32 %v511, %v534
      %v551 = vmul.f32 %v512, %v534
      %v552 = vmul.f32 %v513, %v534
      %v553 = vmul.f32 %v514, %v534
      %v554 = vmul.f32 %v515, %v534
      %v555 = vmul.f32 %v516, %v534
      %v556 = vmul.f32 %v517, %v534
      %v557 = vmul.f32 %v518, %v534
      %v558 = vmul.f32 %v519, %v534
      %v559 = vmul.f32 %v520, %v534
      %v560 = vmul.f32 %v521, %v534
      %v561 = vmul.f32 %v522, %v534
      %v562 = vmul.f32 %v523, %v534
      %v563 = vmul.f32 %v524, %v534
      %v564 = vmul.f32 %v525, %v534
      %v565 = vmul.f32 %v526, %v534
      %v566 = vmul.f32 %v527, %v534
      %v567 = vmul.f32 %v528, %v534
      %v568 = vld [vmem:[%s1] sm:$0x1]
      %v570 = vlaneseq
      %v571 = vshrl.u32 %v570, 7
      %v572 = vsub.s32 0, %v571
      %v573 = vrot.slane %v568, %v572
      %v575 = vadd.f32 %v536, %v573
      %v576 = vadd.f32 %v537, %v573
      %v577 = vadd.f32 %v538, %v573
      %v578 = vadd.f32 %v539, %v573
      %v579 = vadd.f32 %v540, %v573
      %v580 = vadd.f32 %v541, %v573
      %v581 = vadd.f32 %v542, %v573
      %v582 = vadd.f32 %v543, %v573
      %v583 = vadd.f32 %v544, %v573
      %v584 = vadd.f32 %v545, %v573
      %v585 = vadd.f32 %v546, %v573
      %v586 = vadd.f32 %v547, %v573
      %v587 = vadd.f32 %v548, %v573
      %v588 = vadd.f32 %v549, %v573
      %v589 = vadd.f32 %v550, %v573
      %v590 = vadd.f32 %v551, %v573
      %v591 = vadd.f32 %v552, %v573
      %v592 = vadd.f32 %v553, %v573
      %v593 = vadd.f32 %v554, %v573
      %v594 = vadd.f32 %v555, %v573
      %v595 = vadd.f32 %v556, %v573
      %v596 = vadd.f32 %v557, %v573
      %v597 = vadd.f32 %v558, %v573
      %v598 = vadd.f32 %v559, %v573
      %v599 = vadd.f32 %v560, %v573
      %v600 = vadd.f32 %v561, %v573
      %v601 = vadd.f32 %v562, %v573
      %v602 = vadd.f32 %v563, %v573
      %v603 = vadd.f32 %v564, %v573
      %v604 = vadd.f32 %v565, %v573
      %v605 = vadd.f32 %v566, %v573
      %v606 = vadd.f32 %v567, %v573
      %v607 = vmax.f32 %v575, 0.0
      %v608 = vmax.f32 %v576, 0.0
      %v609 = vmax.f32 %v577, 0.0
      %v610 = vmax.f32 %v578, 0.0
      %v611 = vmax.f32 %v579, 0.0
      %v612 = vmax.f32 %v580, 0.0
      %v613 = vmax.f32 %v581, 0.0
      %v614 = vmax.f32 %v582, 0.0
      %v615 = vmax.f32 %v583, 0.0
      %v616 = vmax.f32 %v584, 0.0
      %v617 = vmax.f32 %v585, 0.0
      %v618 = vmax.f32 %v586, 0.0
      %v619 = vmax.f32 %v587, 0.0
      %v620 = vmax.f32 %v588, 0.0
      %v621 = vmax.f32 %v589, 0.0
      %v622 = vmax.f32 %v590, 0.0
      %v623 = vmax.f32 %v591, 0.0
      %v624 = vmax.f32 %v592, 0.0
      %v625 = vmax.f32 %v593, 0.0
      %v626 = vmax.f32 %v594, 0.0
      %v627 = vmax.f32 %v595, 0.0
      %v628 = vmax.f32 %v596, 0.0
      %v629 = vmax.f32 %v597, 0.0
      %v630 = vmax.f32 %v598, 0.0
      %v631 = vmax.f32 %v599, 0.0
      %v632 = vmax.f32 %v600, 0.0
      %v633 = vmax.f32 %v601, 0.0
      %v634 = vmax.f32 %v602, 0.0
      %v635 = vmax.f32 %v603, 0.0
      %v636 = vmax.f32 %v604, 0.0
      %v637 = vmax.f32 %v605, 0.0
      %v638 = vmax.f32 %v606, 0.0
      %v639 = vpack.c.bf16 %v608, %v607
      %v640 = vpack.c.bf16 %v610, %v609
      %v641 = vpack.c.bf16 %v612, %v611
      %v642 = vpack.c.bf16 %v614, %v613
      %v643 = vpack.c.bf16 %v616, %v615
      %v644 = vpack.c.bf16 %v618, %v617
      %v645 = vpack.c.bf16 %v620, %v619
      %v646 = vpack.c.bf16 %v622, %v621
      %v647 = vpack.c.bf16 %v624, %v623
      %v648 = vpack.c.bf16 %v626, %v625
      %v649 = vpack.c.bf16 %v628, %v627
      %v650 = vpack.c.bf16 %v630, %v629
      %v651 = vpack.c.bf16 %v632, %v631
      %v652 = vpack.c.bf16 %v634, %v633
      %v653 = vpack.c.bf16 %v636, %v635
      %v654 = vpack.c.bf16 %v638, %v637
      %v655 = vld [vmem:[%s421] sm:$0xf]
      %v656 = vld [vmem:[%s421 + $0x4] sm:$0xf]
      %p657 = scmp.gt.s32.totalorder %s24, 0
      %s658 = scalar_select %p657, 1, 0
      %s659 = scvt.s32.f32 %s658
      %v660 = vunpack.c.l.bf16 %v655
      %v661 = vunpack.c.l.bf16 %v656
      %v662 = vmul.f32 %v660, %v534
      %v663 = vmul.f32 %v661, %v534
      %v664 = vadd.f32 %v662, %v573
      %v665 = vadd.f32 %v663, %v573
      %v666 = vmax.f32 %v664, 0.0
      %v667 = vmax.f32 %v665, 0.0
      %v668 = vstv %s659
      %v669 = vmul.f32 %v666, %v668
      %v670 = vmul.f32 %v667, %v668
      %v671 = vpack.c.bf16 %v670, %v669
      %v672 = vld [vmem:[%s438] sm:$0xf]
      %v673 = vld [vmem:[%s438 + $0x4] sm:$0xf]
      %p674 = scmp.lt.s32.totalorder %s24, 0
      %s675 = scalar_select %p674, 1, 0
      %s676 = scvt.s32.f32 %s675
      %v677 = vunpack.c.l.bf16 %v672
      %v678 = vunpack.c.l.bf16 %v673
      %v679 = vmul.f32 %v677, %v534
      %v680 = vmul.f32 %v678, %v534
      %v681 = vadd.f32 %v679, %v573
      %v682 = vadd.f32 %v680, %v573
      %v683 = vmax.f32 %v681, 0.0
      %v684 = vmax.f32 %v682, 0.0
      %v685 = vstv %s676
      %v686 = vmul.f32 %v683, %v685
      %v687 = vmul.f32 %v684, %v685
      %v688 = vpack.c.bf16 %v687, %v686
      %v690 = vshrl.u32 %v671, 16
      %v692 = vrot.slane %v690, 7
      %v693 = vshll.u32 %v671, 16
      %v695 = vor.u32 %v692, %v693
      %v697 = vshrl.u32 %v639, 16
      %v699 = vrot.slane %v697, 7
      %v700 = vshll.u32 %v639, 16
      %v702 = vor.u32 %v699, %v700
      %v704 = vshrl.u32 %v640, 16
      %v706 = vrot.slane %v704, 7
      %v707 = vshll.u32 %v640, 16
      %v709 = vor.u32 %v706, %v707
      %v711 = vshrl.u32 %v641, 16
      %v713 = vrot.slane %v711, 7
      %v714 = vshll.u32 %v641, 16
      %v716 = vor.u32 %v713, %v714
      %v718 = vshrl.u32 %v642, 16
      %v720 = vrot.slane %v718, 7
      %v721 = vshll.u32 %v642, 16
      %v723 = vor.u32 %v720, %v721
      %v725 = vshrl.u32 %v643, 16
      %v727 = vrot.slane %v725, 7
      %v728 = vshll.u32 %v643, 16
      %v730 = vor.u32 %v727, %v728
      %v732 = vshrl.u32 %v644, 16
      %v734 = vrot.slane %v732, 7
      %v735 = vshll.u32 %v644, 16
      %v737 = vor.u32 %v734, %v735
      %v739 = vshrl.u32 %v645, 16
      %v741 = vrot.slane %v739, 7
      %v742 = vshll.u32 %v645, 16
      %v744 = vor.u32 %v741, %v742
      %v746 = vshrl.u32 %v646, 16
      %v748 = vrot.slane %v746, 7
      %v749 = vshll.u32 %v646, 16
      %v751 = vor.u32 %v748, %v749
      %v753 = vshrl.u32 %v647, 16
      %v755 = vrot.slane %v753, 7
      %v756 = vshll.u32 %v647, 16
      %v758 = vor.u32 %v755, %v756
      %v760 = vshrl.u32 %v648, 16
      %v762 = vrot.slane %v760, 7
      %v763 = vshll.u32 %v648, 16
      %v765 = vor.u32 %v762, %v763
      %v767 = vshrl.u32 %v649, 16
      %v769 = vrot.slane %v767, 7
      %v770 = vshll.u32 %v649, 16
      %v772 = vor.u32 %v769, %v770
      %v774 = vshrl.u32 %v650, 16
      %v776 = vrot.slane %v774, 7
      %v777 = vshll.u32 %v650, 16
      %v779 = vor.u32 %v776, %v777
      %v781 = vshrl.u32 %v651, 16
      %v783 = vrot.slane %v781, 7
      %v784 = vshll.u32 %v651, 16
      %v786 = vor.u32 %v783, %v784
      %v788 = vshrl.u32 %v652, 16
      %v790 = vrot.slane %v788, 7
      %v791 = vshll.u32 %v652, 16
      %v793 = vor.u32 %v790, %v791
      %v795 = vshrl.u32 %v653, 16
      %v797 = vrot.slane %v795, 7
      %v798 = vshll.u32 %v653, 16
      %v800 = vor.u32 %v797, %v798
      %v802 = vshrl.u32 %v654, 16
      %v804 = vrot.slane %v802, 7
      %v805 = vshll.u32 %v654, 16
      %v807 = vor.u32 %v804, %v805
      %v809 = vshrl.u32 %v688, 16
      %v811 = vrot.slane %v809, 7
      %v812 = vshll.u32 %v688, 16
      %v814 = vor.u32 %v811, %v812
      %vm851 = vcmask 1040384
      %vm852 = vsmask.f32 256
      %vm853 = vmand %vm851, %vm852
      %v854 = vsel %vm853, 0, %v695
      %v855 = vsel %vm853, 0, %v702
      %v856 = vsel %vm853, 0, %v709
      %v857 = vsel %vm853, 0, %v716
      %v858 = vsel %vm853, 0, %v723
      %v859 = vsel %vm853, 0, %v730
      %v860 = vsel %vm853, 0, %v737
      %v861 = vsel %vm853, 0, %v744
      %v862 = vsel %vm853, 0, %v751
      %v863 = vsel %vm853, 0, %v758
      %v864 = vsel %vm853, 0, %v765
      %v865 = vsel %vm853, 0, %v772
      %v866 = vsel %vm853, 0, %v779
      %v867 = vsel %vm853, 0, %v786
      %v868 = vsel %vm853, 0, %v793
      %v869 = vsel %vm853, 0, %v800
      %v870 = vsel %vm853, 0, %v807
      %v871 = vsel %vm853, 0, %v814
      %v872 = vsel %vm853, %v692, 0
      %v873 = vsel %vm853, %v699, 0
      %v874 = vsel %vm853, %v706, 0
      %v875 = vsel %vm853, %v713, 0
      %v876 = vsel %vm853, %v720, 0
      %v877 = vsel %vm853, %v727, 0
      %v878 = vsel %vm853, %v734, 0
      %v879 = vsel %vm853, %v741, 0
      %v880 = vsel %vm853, %v748, 0
      %v881 = vsel %vm853, %v755, 0
      %v882 = vsel %vm853, %v762, 0
      %v883 = vsel %vm853, %v769, 0
      %v884 = vsel %vm853, %v776, 0
      %v885 = vsel %vm853, %v783, 0
      %v886 = vsel %vm853, %v790, 0
      %v887 = vsel %vm853, %v797, 0
      %v888 = vsel %vm853, %v804, 0
      %v889 = vsel %vm853, %v811, 0
      %vm890 = vsmask.f32 7424
      %v892 = vshrl.u32 %v854, 16
      %v894 = vshll.u32 %v854, 16
      %v896 = vrot.slane %v894, 1
      %v897 = vor.u32 %v892, %v896
      %v899 = vshll.u32 %v872, 16
      %v901 = vrot.slane %v899, 1
      %v902 = vsel %vm890, %v897, %v901
      %v904 = vshrl.u32 %v855, 16
      %v906 = vshll.u32 %v855, 16
      %v908 = vrot.slane %v906, 1
      %v909 = vor.u32 %v904, %v908
      %v911 = vshll.u32 %v873, 16
      %v913 = vrot.slane %v911, 1
      %v914 = vsel %vm890, %v909, %v913
      %v916 = vshrl.u32 %v856, 16
      %v918 = vshll.u32 %v856, 16
      %v920 = vrot.slane %v918, 1
      %v921 = vor.u32 %v916, %v920
      %v923 = vshll.u32 %v874, 16
      %v925 = vrot.slane %v923, 1
      %v926 = vsel %vm890, %v921, %v925
      %v928 = vshrl.u32 %v857, 16
      %v930 = vshll.u32 %v857, 16
      %v932 = vrot.slane %v930, 1
      %v933 = vor.u32 %v928, %v932
      %v935 = vshll.u32 %v875, 16
      %v937 = vrot.slane %v935, 1
      %v938 = vsel %vm890, %v933, %v937
      %v940 = vshrl.u32 %v858, 16
      %v942 = vshll.u32 %v858, 16
      %v944 = vrot.slane %v942, 1
      %v945 = vor.u32 %v940, %v944
      %v947 = vshll.u32 %v876, 16
      %v949 = vrot.slane %v947, 1
      %v950 = vsel %vm890, %v945, %v949
      %v952 = vshrl.u32 %v859, 16
      %v954 = vshll.u32 %v859, 16
      %v956 = vrot.slane %v954, 1
      %v957 = vor.u32 %v952, %v956
      %v959 = vshll.u32 %v877, 16
      %v961 = vrot.slane %v959, 1
      %v962 = vsel %vm890, %v957, %v961
      %v964 = vshrl.u32 %v860, 16
      %v966 = vshll.u32 %v860, 16
      %v968 = vrot.slane %v966, 1
      %v969 = vor.u32 %v964, %v968
      %v971 = vshll.u32 %v878, 16
      %v973 = vrot.slane %v971, 1
      %v974 = vsel %vm890, %v969, %v973
      %v976 = vshrl.u32 %v861, 16
      %v978 = vshll.u32 %v861, 16
      %v980 = vrot.slane %v978, 1
      %v981 = vor.u32 %v976, %v980
      %v983 = vshll.u32 %v879, 16
      %v985 = vrot.slane %v983, 1
      %v986 = vsel %vm890, %v981, %v985
      %v988 = vshrl.u32 %v862, 16
      %v990 = vshll.u32 %v862, 16
      %v992 = vrot.slane %v990, 1
      %v993 = vor.u32 %v988, %v992
      %v995 = vshll.u32 %v880, 16
      %v997 = vrot.slane %v995, 1
      %v998 = vsel %vm890, %v993, %v997
      %v1000 = vshrl.u32 %v863, 16
      %v1002 = vshll.u32 %v863, 16
      %v1004 = vrot.slane %v1002, 1
      %v1005 = vor.u32 %v1000, %v1004
      %v1007 = vshll.u32 %v881, 16
      %v1009 = vrot.slane %v1007, 1
      %v1010 = vsel %vm890, %v1005, %v1009
      %v1012 = vshrl.u32 %v864, 16
      %v1014 = vshll.u32 %v864, 16
      %v1016 = vrot.slane %v1014, 1
      %v1017 = vor.u32 %v1012, %v1016
      %v1019 = vshll.u32 %v882, 16
      %v1021 = vrot.slane %v1019, 1
      %v1022 = vsel %vm890, %v1017, %v1021
      %v1024 = vshrl.u32 %v865, 16
      %v1026 = vshll.u32 %v865, 16
      %v1028 = vrot.slane %v1026, 1
      %v1029 = vor.u32 %v1024, %v1028
      %v1031 = vshll.u32 %v883, 16
      %v1033 = vrot.slane %v1031, 1
      %v1034 = vsel %vm890, %v1029, %v1033
      %v1036 = vshrl.u32 %v866, 16
      %v1038 = vshll.u32 %v866, 16
      %v1040 = vrot.slane %v1038, 1
      %v1041 = vor.u32 %v1036, %v1040
      %v1043 = vshll.u32 %v884, 16
      %v1045 = vrot.slane %v1043, 1
      %v1046 = vsel %vm890, %v1041, %v1045
      %v1048 = vshrl.u32 %v867, 16
      %v1050 = vshll.u32 %v867, 16
      %v1052 = vrot.slane %v1050, 1
      %v1053 = vor.u32 %v1048, %v1052
      %v1055 = vshll.u32 %v885, 16
      %v1057 = vrot.slane %v1055, 1
      %v1058 = vsel %vm890, %v1053, %v1057
      %v1060 = vshrl.u32 %v868, 16
      %v1062 = vshll.u32 %v868, 16
      %v1064 = vrot.slane %v1062, 1
      %v1065 = vor.u32 %v1060, %v1064
      %v1067 = vshll.u32 %v886, 16
      %v1069 = vrot.slane %v1067, 1
      %v1070 = vsel %vm890, %v1065, %v1069
      %v1072 = vshrl.u32 %v869, 16
      %v1074 = vshll.u32 %v869, 16
      %v1076 = vrot.slane %v1074, 1
      %v1077 = vor.u32 %v1072, %v1076
      %v1079 = vshll.u32 %v887, 16
      %v1081 = vrot.slane %v1079, 1
      %v1082 = vsel %vm890, %v1077, %v1081
      %vm1115 = vcmask 1046528
      %v1116 = vrot.slane %v854, 1
      %v1117 = vrot.slane %v872, 1
      %v1118 = vsel %vm1115, %v1116, %v1117
      %v1119 = vrot.slane %v855, 1
      %v1120 = vrot.slane %v873, 1
      %v1121 = vsel %vm1115, %v1119, %v1120
      %v1122 = vrot.slane %v856, 1
      %v1123 = vrot.slane %v874, 1
      %v1124 = vsel %vm1115, %v1122, %v1123
      %v1125 = vrot.slane %v857, 1
      %v1126 = vrot.slane %v875, 1
      %v1127 = vsel %vm1115, %v1125, %v1126
      %v1128 = vrot.slane %v858, 1
      %v1129 = vrot.slane %v876, 1
      %v1130 = vsel %vm1115, %v1128, %v1129
      %v1131 = vrot.slane %v859, 1
      %v1132 = vrot.slane %v877, 1
      %v1133 = vsel %vm1115, %v1131, %v1132
      %v1134 = vrot.slane %v860, 1
      %v1135 = vrot.slane %v878, 1
      %v1136 = vsel %vm1115, %v1134, %v1135
      %v1137 = vrot.slane %v861, 1
      %v1138 = vrot.slane %v879, 1
      %v1139 = vsel %vm1115, %v1137, %v1138
      %v1140 = vrot.slane %v862, 1
      %v1141 = vrot.slane %v880, 1
      %v1142 = vsel %vm1115, %v1140, %v1141
      %v1143 = vrot.slane %v863, 1
      %v1144 = vrot.slane %v881, 1
      %v1145 = vsel %vm1115, %v1143, %v1144
      %v1146 = vrot.slane %v864, 1
      %v1147 = vrot.slane %v882, 1
      %v1148 = vsel %vm1115, %v1146, %v1147
      %v1149 = vrot.slane %v865, 1
      %v1150 = vrot.slane %v883, 1
      %v1151 = vsel %vm1115, %v1149, %v1150
      %v1152 = vrot.slane %v866, 1
      %v1153 = vrot.slane %v884, 1
      %v1154 = vsel %vm1115, %v1152, %v1153
      %v1155 = vrot.slane %v867, 1
      %v1156 = vrot.slane %v885, 1
      %v1157 = vsel %vm1115, %v1155, %v1156
      %v1158 = vrot.slane %v868, 1
      %v1159 = vrot.slane %v886, 1
      %v1160 = vsel %vm1115, %v1158, %v1159
      %v1161 = vrot.slane %v869, 1
      %v1162 = vrot.slane %v887, 1
      %v1163 = vsel %vm1115, %v1161, %v1162
      %v1165 = vshrl.u32 %v870, 16
      %v1167 = vshll.u32 %v870, 16
      %v1169 = vrot.slane %v1167, 1
      %v1170 = vor.u32 %v1165, %v1169
      %v1172 = vshll.u32 %v888, 16
      %v1174 = vrot.slane %v1172, 1
      %v1175 = vsel %vm890, %v1170, %v1174
      %v1178 = vrot.slane %v870, 1
      %v1179 = vrot.slane %v888, 1
      %v1180 = vsel %vm1115, %v1178, %v1179
      %v1182 = vshrl.u32 %v871, 16
      %v1184 = vshll.u32 %v871, 16
      %v1186 = vrot.slane %v1184, 1
      %v1187 = vor.u32 %v1182, %v1186
      %v1189 = vshll.u32 %v889, 16
      %v1191 = vrot.slane %v1189, 1
      %v1192 = vsel %vm890, %v1187, %v1191
      %v1195 = vrot.slane %v871, 1
      %v1196 = vrot.slane %v889, 1
      %v1197 = vsel %vm1115, %v1195, %v1196
      %1198 = vrot.lane.b32.xlu0 %v902, 32
      %v1199 = vpop.permute.xlu0 %1198
      %1200 = vrot.lane.b32.xlu0 %v914, 32
      %v1201 = vpop.permute.xlu0 %1200
      %1202 = vrot.lane.b32.xlu0 %v926, 32
      %v1203 = vpop.permute.xlu0 %1202
      %1204 = vrot.lane.b32.xlu0 %v938, 32
      %v1205 = vpop.permute.xlu0 %1204
      %1206 = vrot.lane.b32.xlu0 %v950, 32
      %v1207 = vpop.permute.xlu0 %1206
      %1208 = vrot.lane.b32.xlu0 %v962, 32
      %v1209 = vpop.permute.xlu0 %1208
      %1210 = vrot.lane.b32.xlu0 %v974, 32
      %v1211 = vpop.permute.xlu0 %1210
      %1212 = vrot.lane.b32.xlu0 %v986, 32
      %v1213 = vpop.permute.xlu0 %1212
      %1214 = vrot.lane.b32.xlu0 %v998, 32
      %v1215 = vpop.permute.xlu0 %1214
      %1216 = vrot.lane.b32.xlu0 %v1010, 32
      %v1217 = vpop.permute.xlu0 %1216
      %1218 = vrot.lane.b32.xlu0 %v1022, 32
      %v1219 = vpop.permute.xlu0 %1218
      %1220 = vrot.lane.b32.xlu0 %v1034, 32
      %v1221 = vpop.permute.xlu0 %1220
      %1222 = vrot.lane.b32.xlu0 %v1046, 32
      %v1223 = vpop.permute.xlu0 %1222
      %1224 = vrot.lane.b32.xlu0 %v1058, 32
      %v1225 = vpop.permute.xlu0 %1224
      %1226 = vrot.lane.b32.xlu0 %v1070, 32
      %v1227 = vpop.permute.xlu0 %1226
      %1228 = vrot.lane.b32.xlu0 %v1082, 32
      %v1229 = vpop.permute.xlu0 %1228
      %1230 = vrot.lane.b32.xlu0 %v1118, 64
      %v1231 = vpop.permute.xlu0 %1230
      %1232 = vrot.lane.b32.xlu0 %v1121, 64
      %v1233 = vpop.permute.xlu0 %1232
      %1234 = vrot.lane.b32.xlu0 %v1124, 64
      %v1235 = vpop.permute.xlu0 %1234
      %1236 = vrot.lane.b32.xlu0 %v1127, 64
      %v1237 = vpop.permute.xlu0 %1236
      %1238 = vrot.lane.b32.xlu0 %v1130, 64
      %v1239 = vpop.permute.xlu0 %1238
      %1240 = vrot.lane.b32.xlu0 %v1133, 64
      %v1241 = vpop.permute.xlu0 %1240
      %1242 = vrot.lane.b32.xlu0 %v1136, 64
      %v1243 = vpop.permute.xlu0 %1242
      %1244 = vrot.lane.b32.xlu0 %v1139, 64
      %v1245 = vpop.permute.xlu0 %1244
      %1246 = vrot.lane.b32.xlu0 %v1142, 64
      %v1247 = vpop.permute.xlu0 %1246
      %1248 = vrot.lane.b32.xlu0 %v1145, 64
      %v1249 = vpop.permute.xlu0 %1248
      %1250 = vrot.lane.b32.xlu0 %v1148, 64
      %v1251 = vpop.permute.xlu0 %1250
      %1252 = vrot.lane.b32.xlu0 %v1151, 64
      %v1253 = vpop.permute.xlu0 %1252
      %1254 = vrot.lane.b32.xlu0 %v1154, 64
      %v1255 = vpop.permute.xlu0 %1254
      %1256 = vrot.lane.b32.xlu0 %v1157, 64
      %v1257 = vpop.permute.xlu0 %1256
      %1258 = vrot.lane.b32.xlu0 %v1160, 64
      %v1259 = vpop.permute.xlu0 %1258
      %1260 = vrot.lane.b32.xlu0 %v1163, 64
      %v1261 = vpop.permute.xlu0 %1260
      %1262 = vrot.lane.b32.xlu0 %v855, 96
      %v1263 = vpop.permute.xlu0 %1262
      %1264 = vrot.lane.b32.xlu0 %v856, 96
      %v1265 = vpop.permute.xlu0 %1264
      %1266 = vrot.lane.b32.xlu0 %v857, 96
      %v1267 = vpop.permute.xlu0 %1266
      %1268 = vrot.lane.b32.xlu0 %v858, 96
      %v1269 = vpop.permute.xlu0 %1268
      %1270 = vrot.lane.b32.xlu0 %v859, 96
      %v1271 = vpop.permute.xlu0 %1270
      %1272 = vrot.lane.b32.xlu0 %v860, 96
      %v1273 = vpop.permute.xlu0 %1272
      %1274 = vrot.lane.b32.xlu0 %v861, 96
      %v1275 = vpop.permute.xlu0 %1274
      %1276 = vrot.lane.b32.xlu0 %v862, 96
      %v1277 = vpop.permute.xlu0 %1276
      %1278 = vrot.lane.b32.xlu0 %v863, 96
      %v1279 = vpop.permute.xlu0 %1278
      %1280 = vrot.lane.b32.xlu0 %v864, 96
      %v1281 = vpop.permute.xlu0 %1280
      %1282 = vrot.lane.b32.xlu0 %v865, 96
      %v1283 = vpop.permute.xlu0 %1282
      %1284 = vrot.lane.b32.xlu0 %v866, 96
      %v1285 = vpop.permute.xlu0 %1284
      %1286 = vrot.lane.b32.xlu0 %v867, 96
      %v1287 = vpop.permute.xlu0 %1286
      %1288 = vrot.lane.b32.xlu0 %v868, 96
      %v1289 = vpop.permute.xlu0 %1288
      %1290 = vrot.lane.b32.xlu0 %v869, 96
      %v1291 = vpop.permute.xlu0 %1290
      %1292 = vrot.lane.b32.xlu0 %v870, 96
      %v1293 = vpop.permute.xlu0 %1292
      %1294 = vrot.lane.b32.xlu0 %v1121, 32
      %v1295 = vpop.permute.xlu0 %1294
      %1296 = vrot.lane.b32.xlu0 %v1124, 32
      %v1297 = vpop.permute.xlu0 %1296
      %1298 = vrot.lane.b32.xlu0 %v1127, 32
      %v1299 = vpop.permute.xlu0 %1298
      %1300 = vrot.lane.b32.xlu0 %v1130, 32
      %v1301 = vpop.permute.xlu0 %1300
      %1302 = vrot.lane.b32.xlu0 %v1133, 32
      %v1303 = vpop.permute.xlu0 %1302
      %1304 = vrot.lane.b32.xlu0 %v1136, 32
      %v1305 = vpop.permute.xlu0 %1304
      %1306 = vrot.lane.b32.xlu0 %v1139, 32
      %v1307 = vpop.permute.xlu0 %1306
      %1308 = vrot.lane.b32.xlu0 %v1142, 32
      %v1309 = vpop.permute.xlu0 %1308
      %1310 = vrot.lane.b32.xlu0 %v1145, 32
      %v1311 = vpop.permute.xlu0 %1310
      %1312 = vrot.lane.b32.xlu0 %v1148, 32
      %v1313 = vpop.permute.xlu0 %1312
      %1314 = vrot.lane.b32.xlu0 %v1151, 32
      %v1315 = vpop.permute.xlu0 %1314
      %1316 = vrot.lane.b32.xlu0 %v1154, 32
      %v1317 = vpop.permute.xlu0 %1316
      %1318 = vrot.lane.b32.xlu0 %v1157, 32
      %v1319 = vpop.permute.xlu0 %1318
      %1320 = vrot.lane.b32.xlu0 %v1160, 32
      %v1321 = vpop.permute.xlu0 %1320
      %1322 = vrot.lane.b32.xlu0 %v1163, 32
      %v1323 = vpop.permute.xlu0 %1322
      %1324 = vrot.lane.b32.xlu0 %v1180, 32
      %v1325 = vpop.permute.xlu0 %1324
      %1326 = vrot.lane.b32.xlu0 %v856, 64
      %v1327 = vpop.permute.xlu0 %1326
      %1328 = vrot.lane.b32.xlu0 %v857, 64
      %v1329 = vpop.permute.xlu0 %1328
      %1330 = vrot.lane.b32.xlu0 %v858, 64
      %v1331 = vpop.permute.xlu0 %1330
      %1332 = vrot.lane.b32.xlu0 %v859, 64
      %v1333 = vpop.permute.xlu0 %1332
      %1334 = vrot.lane.b32.xlu0 %v860, 64
      %v1335 = vpop.permute.xlu0 %1334
      %1336 = vrot.lane.b32.xlu0 %v861, 64
      %v1337 = vpop.permute.xlu0 %1336
      %1338 = vrot.lane.b32.xlu0 %v862, 64
      %v1339 = vpop.permute.xlu0 %1338
      %1340 = vrot.lane.b32.xlu0 %v863, 64
      %v1341 = vpop.permute.xlu0 %1340
      %1342 = vrot.lane.b32.xlu0 %v864, 64
      %v1343 = vpop.permute.xlu0 %1342
      %1344 = vrot.lane.b32.xlu0 %v865, 64
      %v1345 = vpop.permute.xlu0 %1344
      %1346 = vrot.lane.b32.xlu0 %v866, 64
      %v1347 = vpop.permute.xlu0 %1346
      %1348 = vrot.lane.b32.xlu0 %v867, 64
      %v1349 = vpop.permute.xlu0 %1348
      %1350 = vrot.lane.b32.xlu0 %v868, 64
      %v1351 = vpop.permute.xlu0 %1350
      %1352 = vrot.lane.b32.xlu0 %v869, 64
      %v1353 = vpop.permute.xlu0 %1352
      %1354 = vrot.lane.b32.xlu0 %v870, 64
      %v1355 = vpop.permute.xlu0 %1354
      %1356 = vrot.lane.b32.xlu0 %v871, 64
      %v1357 = vpop.permute.xlu0 %1356
      %1358 = vrot.lane.b32.xlu0 %v926, 96
      %v1359 = vpop.permute.xlu0 %1358
      %1360 = vrot.lane.b32.xlu0 %v938, 96
      %v1361 = vpop.permute.xlu0 %1360
      %1362 = vrot.lane.b32.xlu0 %v950, 96
      %v1363 = vpop.permute.xlu0 %1362
      %1364 = vrot.lane.b32.xlu0 %v962, 96
      %v1365 = vpop.permute.xlu0 %1364
      %1366 = vrot.lane.b32.xlu0 %v974, 96
      %v1367 = vpop.permute.xlu0 %1366
      %1368 = vrot.lane.b32.xlu0 %v986, 96
      %v1369 = vpop.permute.xlu0 %1368
      %1370 = vrot.lane.b32.xlu0 %v998, 96
      %v1371 = vpop.permute.xlu0 %1370
      %1372 = vrot.lane.b32.xlu0 %v1010, 96
      %v1373 = vpop.permute.xlu0 %1372
      %1374 = vrot.lane.b32.xlu0 %v1022, 96
      %v1375 = vpop.permute.xlu0 %1374
      %1376 = vrot.lane.b32.xlu0 %v1034, 96
      %v1377 = vpop.permute.xlu0 %1376
      %1378 = vrot.lane.b32.xlu0 %v1046, 96
      %v1379 = vpop.permute.xlu0 %1378
      %1380 = vrot.lane.b32.xlu0 %v1058, 96
      %v1381 = vpop.permute.xlu0 %1380
      %1382 = vrot.lane.b32.xlu0 %v1070, 96
      %v1383 = vpop.permute.xlu0 %1382
      %1384 = vrot.lane.b32.xlu0 %v1082, 96
      %v1385 = vpop.permute.xlu0 %1384
      %1386 = vrot.lane.b32.xlu0 %v1175, 96
      %v1387 = vpop.permute.xlu0 %1386
      %1388 = vrot.lane.b32.xlu0 %v1192, 96
      %v1389 = vpop.permute.xlu0 %1388
      %vm1390 = vcmask 261120
      %v1392 = vsel %vm1390, %v854, %v1199
      %v1394 = vsel %vm1390, %v855, %v1201
      %v1396 = vsel %vm1390, %v856, %v1203
      %v1398 = vsel %vm1390, %v857, %v1205
      %v1400 = vsel %vm1390, %v858, %v1207
      %v1402 = vsel %vm1390, %v859, %v1209
      %v1404 = vsel %vm1390, %v860, %v1211
      %v1406 = vsel %vm1390, %v861, %v1213
      %v1408 = vsel %vm1390, %v862, %v1215
      %v1410 = vsel %vm1390, %v863, %v1217
      %v1412 = vsel %vm1390, %v864, %v1219
      %v1414 = vsel %vm1390, %v865, %v1221
      %v1416 = vsel %vm1390, %v866, %v1223
      %v1418 = vsel %vm1390, %v867, %v1225
      %v1420 = vsel %vm1390, %v868, %v1227
      %v1422 = vsel %vm1390, %v869, %v1229
      %vm1423 = vcmask 523264
      %v1425 = vsel %vm1423, %v1392, %v1231
      %v1427 = vsel %vm1423, %v1394, %v1233
      %v1429 = vsel %vm1423, %v1396, %v1235
      %v1431 = vsel %vm1423, %v1398, %v1237
      %v1433 = vsel %vm1423, %v1400, %v1239
      %v1435 = vsel %vm1423, %v1402, %v1241
      %v1437 = vsel %vm1423, %v1404, %v1243
      %v1439 = vsel %vm1423, %v1406, %v1245
      %v1441 = vsel %vm1423, %v1408, %v1247
      %v1443 = vsel %vm1423, %v1410, %v1249
      %v1445 = vsel %vm1423, %v1412, %v1251
      %v1447 = vsel %vm1423, %v1414, %v1253
      %v1449 = vsel %vm1423, %v1416, %v1255
      %v1451 = vsel %vm1423, %v1418, %v1257
      %v1453 = vsel %vm1423, %v1420, %v1259
      %v1455 = vsel %vm1423, %v1422, %v1261
      %vm1456 = vcmask 785408
      %v1458 = vsel %vm1456, %v1425, %v1263
      %v1461 = vsel %vm1456, %v1427, %v1265
      %v1464 = vsel %vm1456, %v1429, %v1267
      %v1467 = vsel %vm1456, %v1431, %v1269
      %v1470 = vsel %vm1456, %v1433, %v1271
      %v1473 = vsel %vm1456, %v1435, %v1273
      %v1476 = vsel %vm1456, %v1437, %v1275
      %v1479 = vsel %vm1456, %v1439, %v1277
      %v1482 = vsel %vm1456, %v1441, %v1279
      %v1485 = vsel %vm1456, %v1443, %v1281
      %v1488 = vsel %vm1456, %v1445, %v1283
      %v1491 = vsel %vm1456, %v1447, %v1285
      %v1494 = vsel %vm1456, %v1449, %v1287
      %v1497 = vsel %vm1456, %v1451, %v1289
      %v1500 = vsel %vm1456, %v1453, %v1291
      %v1503 = vsel %vm1456, %v1455, %v1293
      %v1507 = vsel %vm1390, %v914, %v1295
      %v1510 = vsel %vm1390, %v926, %v1297
      %v1513 = vsel %vm1390, %v938, %v1299
      %v1516 = vsel %vm1390, %v950, %v1301
      %v1519 = vsel %vm1390, %v962, %v1303
      %v1522 = vsel %vm1390, %v974, %v1305
      %v1525 = vsel %vm1390, %v986, %v1307
      %v1528 = vsel %vm1390, %v998, %v1309
      %v1531 = vsel %vm1390, %v1010, %v1311
      %v1534 = vsel %vm1390, %v1022, %v1313
      %v1537 = vsel %vm1390, %v1034, %v1315
      %v1540 = vsel %vm1390, %v1046, %v1317
      %v1543 = vsel %vm1390, %v1058, %v1319
      %v1546 = vsel %vm1390, %v1070, %v1321
      %v1549 = vsel %vm1390, %v1082, %v1323
      %v1552 = vsel %vm1390, %v1175, %v1325
      %v1554 = vsel %vm1423, %v1507, %v1327
      %v1556 = vsel %vm1423, %v1510, %v1329
      %v1558 = vsel %vm1423, %v1513, %v1331
      %v1560 = vsel %vm1423, %v1516, %v1333
      %v1562 = vsel %vm1423, %v1519, %v1335
      %v1564 = vsel %vm1423, %v1522, %v1337
      %v1566 = vsel %vm1423, %v1525, %v1339
      %v1568 = vsel %vm1423, %v1528, %v1341
      %v1570 = vsel %vm1423, %v1531, %v1343
      %v1572 = vsel %vm1423, %v1534, %v1345
      %v1574 = vsel %vm1423, %v1537, %v1347
      %v1576 = vsel %vm1423, %v1540, %v1349
      %v1578 = vsel %vm1423, %v1543, %v1351
      %v1580 = vsel %vm1423, %v1546, %v1353
      %v1582 = vsel %vm1423, %v1549, %v1355
      %v1584 = vsel %vm1423, %v1552, %v1357
      %v1586 = vsel %vm1456, %v1554, %v1359
      %v1589 = vsel %vm1456, %v1556, %v1361
      %v1592 = vsel %vm1456, %v1558, %v1363
      %v1595 = vsel %vm1456, %v1560, %v1365
      %v1598 = vsel %vm1456, %v1562, %v1367
      %v1601 = vsel %vm1456, %v1564, %v1369
      %v1604 = vsel %vm1456, %v1566, %v1371
      %v1607 = vsel %vm1456, %v1568, %v1373
      %v1610 = vsel %vm1456, %v1570, %v1375
      %v1613 = vsel %vm1456, %v1572, %v1377
      %v1616 = vsel %vm1456, %v1574, %v1379
      %v1619 = vsel %vm1456, %v1576, %v1381
      %v1622 = vsel %vm1456, %v1578, %v1383
      %v1625 = vsel %vm1456, %v1580, %v1385
      %v1628 = vsel %vm1456, %v1582, %v1387
      %v1631 = vsel %vm1456, %v1584, %v1389
      %v1633 = vld [vmem:[%s5] sm:$0xf]
      %v1634 = vld [vmem:[%s5 + $0x4] sm:$0xf]
      %v1635 = vld [vmem:[%s5 + $0x8] sm:$0xf]
      %v1636 = vld [vmem:[%s5 + $0xc] sm:$0xf]
      %v1637 = vld [vmem:[%s5 + $0x10] sm:$0xf]
      %v1638 = vld [vmem:[%s5 + $0x14] sm:$0xf]
      %v1639 = vld [vmem:[%s5 + $0x18] sm:$0xf]
      %v1640 = vld [vmem:[%s5 + $0x1c] sm:$0xf]
      %v1641 = vld [vmem:[%s5 + $0x20] sm:$0xf]
      %v1642 = vld [vmem:[%s5 + $0x24] sm:$0xf]
      %v1643 = vld [vmem:[%s5 + $0x28] sm:$0xf]
      %v1644 = vld [vmem:[%s5 + $0x2c] sm:$0xf]
      %v1645 = vld [vmem:[%s5 + $0x30] sm:$0xf]
      %v1646 = vld [vmem:[%s5 + $0x34] sm:$0xf]
      %v1647 = vld [vmem:[%s5 + $0x38] sm:$0xf]
      %v1648 = vld [vmem:[%s5 + $0x3c] sm:$0xf]
      %v1649 = vld [vmem:[%s5 + $0x40] sm:$0xf]
      %v1650 = vld [vmem:[%s5 + $0x44] sm:$0xf]
      %v1651 = vld [vmem:[%s5 + $0x48] sm:$0xf]
      %v1652 = vld [vmem:[%s5 + $0x4c] sm:$0xf]
      %v1653 = vld [vmem:[%s5 + $0x50] sm:$0xf]
      %v1654 = vld [vmem:[%s5 + $0x54] sm:$0xf]
      %v1655 = vld [vmem:[%s5 + $0x58] sm:$0xf]
      %v1656 = vld [vmem:[%s5 + $0x5c] sm:$0xf]
      %v1657 = vld [vmem:[%s5 + $0x60] sm:$0xf]
      %v1658 = vld [vmem:[%s5 + $0x64] sm:$0xf]
      %v1659 = vld [vmem:[%s5 + $0x68] sm:$0xf]
      %v1660 = vld [vmem:[%s5 + $0x6c] sm:$0xf]
      %v1661 = vld [vmem:[%s5 + $0x70] sm:$0xf]
      %v1662 = vld [vmem:[%s5 + $0x74] sm:$0xf]
      %v1663 = vld [vmem:[%s5 + $0x78] sm:$0xf]
      %v1664 = vld [vmem:[%s5 + $0x7c] sm:$0xf]
      %v1665 = vld [vmem:[%s5 + $0x80] sm:$0xf]
      %v1666 = vld [vmem:[%s5 + $0x84] sm:$0xf]
      %v1667 = vld [vmem:[%s5 + $0x88] sm:$0xf]
      %v1668 = vld [vmem:[%s5 + $0x8c] sm:$0xf]
      %v1705 = vunpack.c.l.b16 %v1633
      %v1706 = vunpack.c.l.b16 %v1634
      %v1707 = vunpack.c.l.b16 %v1635
      %v1708 = vunpack.c.l.b16 %v1636
      %v1709 = vunpack.c.l.b16 %v1637
      %v1710 = vunpack.c.l.b16 %v1638
      %v1711 = vunpack.c.l.b16 %v1639
      %v1712 = vunpack.c.l.b16 %v1640
      %v1713 = vunpack.c.l.b16 %v1641
      %v1714 = vunpack.c.l.b16 %v1642
      %v1715 = vunpack.c.l.b16 %v1643
      %v1716 = vunpack.c.l.b16 %v1644
      %v1717 = vunpack.c.l.b16 %v1645
      %v1718 = vunpack.c.l.b16 %v1646
      %v1719 = vunpack.c.l.b16 %v1647
      %v1720 = vunpack.c.l.b16 %v1648
      %v1721 = vunpack.c.l.b16 %v1649
      %v1722 = vunpack.c.l.b16 %v1650
      %v1723 = vunpack.c.l.b16 %v1651
      %v1724 = vunpack.c.l.b16 %v1652
      %v1725 = vunpack.c.l.b16 %v1653
      %v1726 = vunpack.c.l.b16 %v1654
      %v1727 = vunpack.c.l.b16 %v1655
      %v1728 = vunpack.c.l.b16 %v1656
      %v1729 = vunpack.c.l.b16 %v1657
      %v1730 = vunpack.c.l.b16 %v1658
      %v1731 = vunpack.c.l.b16 %v1659
      %v1732 = vunpack.c.l.b16 %v1660
      %v1733 = vunpack.c.l.b16 %v1661
      %v1734 = vunpack.c.l.b16 %v1662
      %v1735 = vunpack.c.l.b16 %v1663
      %v1736 = vunpack.c.l.b16 %v1664
      %v1737 = vunpack.c.l.b16 %v1665
      %v1738 = vunpack.c.l.b16 %v1666
      %v1739 = vunpack.c.l.b16 %v1667
      %v1740 = vunpack.c.l.b16 %v1668
      %v1741 = vpack.c.b16 %v1706, %v1705
      %v1742 = vpack.c.b16 %v1708, %v1707
      %v1743 = vpack.c.b16 %v1710, %v1709
      %v1744 = vpack.c.b16 %v1712, %v1711
      %v1745 = vpack.c.b16 %v1714, %v1713
      %v1746 = vpack.c.b16 %v1716, %v1715
      %v1747 = vpack.c.b16 %v1718, %v1717
      %v1748 = vpack.c.b16 %v1720, %v1719
      %v1749 = vpack.c.b16 %v1722, %v1721
      %v1750 = vpack.c.b16 %v1724, %v1723
      %v1751 = vpack.c.b16 %v1726, %v1725
      %v1752 = vpack.c.b16 %v1728, %v1727
      %v1753 = vpack.c.b16 %v1730, %v1729
      %v1754 = vpack.c.b16 %v1732, %v1731
      %v1755 = vpack.c.b16 %v1734, %v1733
      %v1756 = vpack.c.b16 %v1736, %v1735
      %v1757 = vpack.c.b16 %v1738, %v1737
      %v1758 = vpack.c.b16 %v1740, %v1739
      %v1778 = vsel %vm1390, %v1124, 0
      %v1781 = vsel %vm1390, %v1127, 0
      %v1784 = vsel %vm1390, %v1130, 0
      %v1787 = vsel %vm1390, %v1133, 0
      %v1790 = vsel %vm1390, %v1136, 0
      %v1793 = vsel %vm1390, %v1139, 0
      %v1796 = vsel %vm1390, %v1142, 0
      %v1799 = vsel %vm1390, %v1145, 0
      %v1802 = vsel %vm1390, %v1148, 0
      %v1805 = vsel %vm1390, %v1151, 0
      %v1808 = vsel %vm1390, %v1154, 0
      %v1811 = vsel %vm1390, %v1157, 0
      %v1814 = vsel %vm1390, %v1160, 0
      %v1817 = vsel %vm1390, %v1163, 0
      %v1820 = vsel %vm1390, %v1180, 0
      %v1823 = vsel %vm1390, %v1197, 0
      %1825 = vmatprep.subr.bf16.mxu0 0
      %1826 = vmatpush1.bf16.msra.mxu0 %v1741
      %1827 = vmatprep.subr.bf16.mxu0 0
      %1828 = vmatpush1.bf16.msra.mxu0 %v1742
      %1829 = vmatprep.subr.bf16.mxu0 0
      %1830 = vmatpush1.bf16.msra.mxu0 %v1743
      %1831 = vmatprep.subr.bf16.mxu0 0
      %1832 = vmatpush1.bf16.msra.mxu0 %v1744
      %1833 = vmatprep.subr.bf16.mxu0 0
      %1834 = vmatpush1.bf16.msra.mxu0 %v1745
      %1835 = vmatprep.subr.bf16.mxu0 0
      %1836 = vmatpush1.bf16.msra.mxu0 %v1746
      %1837 = vmatprep.subr.bf16.mxu0 0
      %1838 = vmatpush1.bf16.msra.mxu0 %v1747
      %1839 = vmatprep.subr.bf16.mxu0 0
      %1840 = vmatpush1.bf16.msra.mxu0 %v1748
      %1841 = vmatprep.subr.bf16.mxu0 0
      %1842 = vmatpush1.bf16.msra.mxu0 %v1749
      %1843 = vmatprep.subr.bf16.mxu0 0
      %1844 = vmatpush1.bf16.msra.mxu0 %v1750
      %1845 = vmatprep.subr.bf16.mxu0 0
      %1846 = vmatpush1.bf16.msra.mxu0 %v1751
      %1847 = vmatprep.subr.bf16.mxu0 0
      %1848 = vmatpush1.bf16.msra.mxu0 %v1752
      %1849 = vmatprep.subr.bf16.mxu0 0
      %1850 = vmatpush1.bf16.msra.mxu0 %v1753
      %1851 = vmatprep.subr.bf16.mxu0 0
      %1852 = vmatpush1.bf16.msra.mxu0 %v1754
      %1853 = vmatprep.subr.bf16.mxu0 0
      %1854 = vmatpush1.bf16.msra.mxu0 %v1755
      %1855 = vmatprep.subr.bf16.mxu0 0
      %1856 = vmatpush1.bf16.msra.mxu0 %v1756
      %1857 = vmatprep.mubr.bf16.mxu0 %v1586
      %1858 = vmatmul.mubr.bf16.gmra.mrb[0].mxu0 %v1458
      %v1859 = vpop.f32.mrb[0].mxu0
      %v1860 = vadd.f32 0.0, %v1859
      %v1861 = vpop.f32.mrb[0].mxu0
      %v1862 = vpop.f32.mrb[0].mxu0
      %v1863 = vadd.f32 0.0, %v1862
      %v1864 = vpop.f32.mrb[0].mxu0
      %1865 = vmatprep.mubr.bf16.mxu0 %v1589
      %1866 = vmatmul.mubr.bf16.gmra.mrb[0].mxu0 %v1461
      %v1867 = vpop.f32.mrb[0].mxu0
      %v1868 = vadd.f32 0.0, %v1867
      %v1869 = vpop.f32.mrb[0].mxu0
      %v1870 = vpop.f32.mrb[0].mxu0
      %v1871 = vadd.f32 0.0, %v1870
      %v1872 = vpop.f32.mrb[0].mxu0
      %1873 = vmatprep.mubr.bf16.mxu0 %v1592
      %1874 = vmatmul.mubr.bf16.gmra.mrb[0].mxu0 %v1464
      %v1875 = vpop.f32.mrb[0].mxu0
      %v1876 = vadd.f32 0.0, %v1875
      %v1877 = vpop.f32.mrb[0].mxu0
      %v1878 = vpop.f32.mrb[0].mxu0
      %v1879 = vadd.f32 0.0, %v1878
      %v1880 = vpop.f32.mrb[0].mxu0
      %1881 = vmatprep.mubr.bf16.mxu0 %v1595
      %1882 = vmatmul.mubr.bf16.gmra.mrb[0].mxu0 %v1467
      %v1883 = vpop.f32.mrb[0].mxu0
      %v1884 = vadd.f32 0.0, %v1883
      %v1885 = vpop.f32.mrb[0].mxu0
      %v1886 = vpop.f32.mrb[0].mxu0
      %v1887 = vadd.f32 0.0, %v1886
      %v1888 = vpop.f32.mrb[0].mxu0
      %1889 = vmatprep.mubr.bf16.mxu0 %v1598
      %1890 = vmatmul.mubr.bf16.gmra.mrb[0].mxu0 %v1470
      %v1891 = vpop.f32.mrb[0].mxu0
      %v1892 = vadd.f32 0.0, %v1891
      %v1893 = vpop.f32.mrb[0].mxu0
      %v1894 = vpop.f32.mrb[0].mxu0
      %v1895 = vadd.f32 0.0, %v1894
      %v1896 = vpop.f32.mrb[0].mxu0
      %1897 = vmatprep.mubr.bf16.mxu0 %v1601
      %1898 = vmatmul.mubr.bf16.gmra.mrb[0].mxu0 %v1473
      %v1899 = vpop.f32.mrb[0].mxu0
      %v1900 = vadd.f32 0.0, %v1899
      %v1901 = vpop.f32.mrb[0].mxu0
      %v1902 = vpop.f32.mrb[0].mxu0
      %v1903 = vadd.f32 0.0, %v1902
      %v1904 = vpop.f32.mrb[0].mxu0
      %1905 = vmatprep.mubr.bf16.mxu0 %v1604
      %1906 = vmatmul.mubr.bf16.gmra.mrb[0].mxu0 %v1476
      %v1907 = vpop.f32.mrb[0].mxu0
      %v1908 = vadd.f32 0.0, %v1907
      %v1909 = vpop.f32.mrb[0].mxu0
      %v1910 = vpop.f32.mrb[0].mxu0
      %v1911 = vadd.f32 0.0, %v1910
      %v1912 = vpop.f32.mrb[0].mxu0
      %1913 = vmatprep.mubr.bf16.mxu0 %v1607
      %1914 = vmatmul.mubr.bf16.gmra.mrb[0].mxu0 %v1479
      %v1915 = vpop.f32.mrb[0].mxu0
      %v1916 = vadd.f32 0.0, %v1915
      %v1917 = vpop.f32.mrb[0].mxu0
      %v1918 = vpop.f32.mrb[0].mxu0
      %v1919 = vadd.f32 0.0, %v1918
      %v1920 = vpop.f32.mrb[0].mxu0
      %1921 = vmatprep.mubr.bf16.mxu0 %v1610
      %1922 = vmatmul.mubr.bf16.gmra.mrb[0].mxu0 %v1482
      %v1923 = vpop.f32.mrb[0].mxu0
      %v1924 = vadd.f32 0.0, %v1923
      %v1925 = vpop.f32.mrb[0].mxu0
      %v1926 = vpop.f32.mrb[0].mxu0
      %v1927 = vadd.f32 0.0, %v1926
      %v1928 = vpop.f32.mrb[0].mxu0
      %1929 = vmatprep.mubr.bf16.mxu0 %v1613
      %1930 = vmatmul.mubr.bf16.gmra.mrb[0].mxu0 %v1485
      %v1931 = vpop.f32.mrb[0].mxu0
      %v1932 = vadd.f32 0.0, %v1931
      %v1933 = vpop.f32.mrb[0].mxu0
      %v1934 = vpop.f32.mrb[0].mxu0
      %v1935 = vadd.f32 0.0, %v1934
      %v1936 = vpop.f32.mrb[0].mxu0
      %1937 = vmatprep.mubr.bf16.mxu0 %v1616
      %1938 = vmatmul.mubr.bf16.gmra.mrb[0].mxu0 %v1488
      %v1939 = vpop.f32.mrb[0].mxu0
      %v1940 = vadd.f32 0.0, %v1939
      %v1941 = vpop.f32.mrb[0].mxu0
      %v1942 = vpop.f32.mrb[0].mxu0
      %v1943 = vadd.f32 0.0, %v1942
      %v1944 = vpop.f32.mrb[0].mxu0
      %1945 = vmatprep.mubr.bf16.mxu0 %v1619
      %1946 = vmatmul.mubr.bf16.gmra.mrb[0].mxu0 %v1491
      %v1947 = vpop.f32.mrb[0].mxu0
      %v1948 = vadd.f32 0.0, %v1947
      %v1949 = vpop.f32.mrb[0].mxu0
      %v1950 = vpop.f32.mrb[0].mxu0
      %v1951 = vadd.f32 0.0, %v1950
      %v1952 = vpop.f32.mrb[0].mxu0
      %1953 = vmatprep.mubr.bf16.mxu0 %v1622
      %1954 = vmatmul.mubr.bf16.gmra.mrb[0].mxu0 %v1494
      %v1955 = vpop.f32.mrb[0].mxu0
      %v1956 = vadd.f32 0.0, %v1955
      %v1957 = vpop.f32.mrb[0].mxu0
      %v1958 = vpop.f32.mrb[0].mxu0
      %v1959 = vadd.f32 0.0, %v1958
      %v1960 = vpop.f32.mrb[0].mxu0
      %1961 = vmatprep.mubr.bf16.mxu0 %v1625
      %1962 = vmatmul.mubr.bf16.gmra.mrb[0].mxu0 %v1497
      %v1963 = vpop.f32.mrb[0].mxu0
      %v1964 = vadd.f32 0.0, %v1963
      %v1965 = vpop.f32.mrb[0].mxu0
      %v1966 = vpop.f32.mrb[0].mxu0
      %v1967 = vadd.f32 0.0, %v1966
      %v1968 = vpop.f32.mrb[0].mxu0
      %1969 = vmatprep.mubr.bf16.mxu0 %v1628
      %1970 = vmatmul.mubr.bf16.gmra.mrb[0].mxu0 %v1500
      %v1971 = vpop.f32.mrb[0].mxu0
      %v1972 = vadd.f32 0.0, %v1971
      %v1973 = vpop.f32.mrb[0].mxu0
      %v1974 = vpop.f32.mrb[0].mxu0
      %v1975 = vadd.f32 0.0, %v1974
      %v1976 = vpop.f32.mrb[0].mxu0
      %1977 = vmatprep.mubr.bf16.mxu0 %v1631
      %1978 = vmatmul.mubr.bf16.gmra.mrb[0].mxu0 %v1503
      %v1979 = vpop.f32.mrb[0].mxu0
      %v1980 = vadd.f32 0.0, %v1979
      %v1981 = vpop.f32.mrb[0].mxu0
      %v1982 = vpop.f32.mrb[0].mxu0
      %v1983 = vadd.f32 0.0, %v1982
      %v1984 = vpop.f32.mrb[0].mxu0
      %1985 = vdwg.mxu0
      %1986 = vmatprep.subr.bf16.mxu0 0
      %1987 = vmatpush1.bf16.msra.mxu0 %v1757
      %1988 = vmatprep.subr.bf16.mxu0 0
      %1989 = vmatpush1.bf16.msra.mxu0 %v1758
      %1990 = vmatprep.subr.bf16.mxu0 0
      %1991 = vmatpush1.bf16.msra.mxu0 0
      %1992 = vmatprep.subr.bf16.mxu0 0
      %1993 = vmatpush1.bf16.msra.mxu0 0
      %1994 = vmatprep.subr.bf16.mxu0 0
      %1995 = vmatpush1.bf16.msra.mxu0 0
      %1996 = vmatprep.subr.bf16.mxu0 0
      %1997 = vmatpush1.bf16.msra.mxu0 0
      %1998 = vmatprep.subr.bf16.mxu0 0
      %1999 = vmatpush1.bf16.msra.mxu0 0
      %2000 = vmatprep.subr.bf16.mxu0 0
      %2001 = vmatpush1.bf16.msra.mxu0 0
      %2002 = vmatprep.subr.bf16.mxu0 0
      %2003 = vmatpush1.bf16.msra.mxu0 0
      %2004 = vmatprep.subr.bf16.mxu0 0
      %2005 = vmatpush1.bf16.msra.mxu0 0
      %2006 = vmatprep.subr.bf16.mxu0 0
      %2007 = vmatpush1.bf16.msra.mxu0 0
      %2008 = vmatprep.subr.bf16.mxu0 0
      %2009 = vmatpush1.bf16.msra.mxu0 0
      %2010 = vmatprep.subr.bf16.mxu0 0
      %2011 = vmatpush1.bf16.msra.mxu0 0
      %2012 = vmatprep.subr.bf16.mxu0 0
      %2013 = vmatpush1.bf16.msra.mxu0 0
      %2014 = vmatprep.subr.bf16.mxu0 0
      %2015 = vmatpush1.bf16.msra.mxu0 0
      %2016 = vmatprep.subr.bf16.mxu0 0
      %2017 = vmatpush1.bf16.msra.mxu0 0
      %2018 = vmatprep.mubr.bf16.mxu0 0
      %2019 = vmatmul.mubr.bf16.gmra.mrb[0].mxu0 %v1778
      %v2020 = vpop.f32.mrb[0].mxu0
      %v2021 = vadd.f32 %v1860, %v2020
      %v2022 = vpop.f32.mrb[0].mxu0
      %v2023 = vpop.f32.mrb[0].mxu0
      %v2024 = vadd.f32 %v1863, %v2023
      %v2025 = vpop.f32.mrb[0].mxu0
      %2026 = vmatprep.mubr.bf16.mxu0 0
      %2027 = vmatmul.mubr.bf16.gmra.mrb[0].mxu0 %v1781
      %v2028 = vpop.f32.mrb[0].mxu0
      %v2029 = vadd.f32 %v1868, %v2028
      %v2030 = vpop.f32.mrb[0].mxu0
      %v2031 = vpop.f32.mrb[0].mxu0
      %v2032 = vadd.f32 %v1871, %v2031
      %v2033 = vpop.f32.mrb[0].mxu0
      %2034 = vmatprep.mubr.bf16.mxu0 0
      %2035 = vmatmul.mubr.bf16.gmra.mrb[0].mxu0 %v1784
      %v2036 = vpop.f32.mrb[0].mxu0
      %v2037 = vadd.f32 %v1876, %v2036
      %v2038 = vpop.f32.mrb[0].mxu0
      %v2039 = vpop.f32.mrb[0].mxu0
      %v2040 = vadd.f32 %v1879, %v2039
      %v2041 = vpop.f32.mrb[0].mxu0
      %2042 = vmatprep.mubr.bf16.mxu0 0
      %2043 = vmatmul.mubr.bf16.gmra.mrb[0].mxu0 %v1787
      %v2044 = vpop.f32.mrb[0].mxu0
      %v2045 = vadd.f32 %v1884, %v2044
      %v2046 = vpop.f32.mrb[0].mxu0
      %v2047 = vpop.f32.mrb[0].mxu0
      %v2048 = vadd.f32 %v1887, %v2047
      %v2049 = vpop.f32.mrb[0].mxu0
      %2050 = vmatprep.mubr.bf16.mxu0 0
      %2051 = vmatmul.mubr.bf16.gmra.mrb[0].mxu0 %v1790
      %v2052 = vpop.f32.mrb[0].mxu0
      %v2053 = vadd.f32 %v1892, %v2052
      %v2054 = vpop.f32.mrb[0].mxu0
      %v2055 = vpop.f32.mrb[0].mxu0
      %v2056 = vadd.f32 %v1895, %v2055
      %v2057 = vpop.f32.mrb[0].mxu0
      %2058 = vmatprep.mubr.bf16.mxu0 0
      %2059 = vmatmul.mubr.bf16.gmra.mrb[0].mxu0 %v1793
      %v2060 = vpop.f32.mrb[0].mxu0
      %v2061 = vadd.f32 %v1900, %v2060
      %v2062 = vpop.f32.mrb[0].mxu0
      %v2063 = vpop.f32.mrb[0].mxu0
      %v2064 = vadd.f32 %v1903, %v2063
      %v2065 = vpop.f32.mrb[0].mxu0
      %2066 = vmatprep.mubr.bf16.mxu0 0
      %2067 = vmatmul.mubr.bf16.gmra.mrb[0].mxu0 %v1796
      %v2068 = vpop.f32.mrb[0].mxu0
      %v2069 = vadd.f32 %v1908, %v2068
      %v2070 = vpop.f32.mrb[0].mxu0
      %v2071 = vpop.f32.mrb[0].mxu0
      %v2072 = vadd.f32 %v1911, %v2071
      %v2073 = vpop.f32.mrb[0].mxu0
      %2074 = vmatprep.mubr.bf16.mxu0 0
      %2075 = vmatmul.mubr.bf16.gmra.mrb[0].mxu0 %v1799
      %v2076 = vpop.f32.mrb[0].mxu0
      %v2077 = vadd.f32 %v1916, %v2076
      %v2078 = vpop.f32.mrb[0].mxu0
      %v2079 = vpop.f32.mrb[0].mxu0
      %v2080 = vadd.f32 %v1919, %v2079
      %v2081 = vpop.f32.mrb[0].mxu0
      %2082 = vmatprep.mubr.bf16.mxu0 0
      %2083 = vmatmul.mubr.bf16.gmra.mrb[0].mxu0 %v1802
      %v2084 = vpop.f32.mrb[0].mxu0
      %v2085 = vadd.f32 %v1924, %v2084
      %v2086 = vpop.f32.mrb[0].mxu0
      %v2087 = vpop.f32.mrb[0].mxu0
      %v2088 = vadd.f32 %v1927, %v2087
      %v2089 = vpop.f32.mrb[0].mxu0
      %2090 = vmatprep.mubr.bf16.mxu0 0
      %2091 = vmatmul.mubr.bf16.gmra.mrb[0].mxu0 %v1805
      %v2092 = vpop.f32.mrb[0].mxu0
      %v2093 = vadd.f32 %v1932, %v2092
      %v2094 = vpop.f32.mrb[0].mxu0
      %v2095 = vpop.f32.mrb[0].mxu0
      %v2096 = vadd.f32 %v1935, %v2095
      %v2097 = vpop.f32.mrb[0].mxu0
      %2098 = vmatprep.mubr.bf16.mxu0 0
      %2099 = vmatmul.mubr.bf16.gmra.mrb[0].mxu0 %v1808
      %v2100 = vpop.f32.mrb[0].mxu0
      %v2101 = vadd.f32 %v1940, %v2100
      %v2102 = vpop.f32.mrb[0].mxu0
      %v2103 = vpop.f32.mrb[0].mxu0
      %v2104 = vadd.f32 %v1943, %v2103
      %v2105 = vpop.f32.mrb[0].mxu0
      %2106 = vmatprep.mubr.bf16.mxu0 0
      %2107 = vmatmul.mubr.bf16.gmra.mrb[0].mxu0 %v1811
      %v2108 = vpop.f32.mrb[0].mxu0
      %v2109 = vadd.f32 %v1948, %v2108
      %v2110 = vpop.f32.mrb[0].mxu0
      %v2111 = vpop.f32.mrb[0].mxu0
      %v2112 = vadd.f32 %v1951, %v2111
      %v2113 = vpop.f32.mrb[0].mxu0
      %2114 = vmatprep.mubr.bf16.mxu0 0
      %2115 = vmatmul.mubr.bf16.gmra.mrb[0].mxu0 %v1814
      %v2116 = vpop.f32.mrb[0].mxu0
      %v2117 = vadd.f32 %v1956, %v2116
      %v2118 = vpop.f32.mrb[0].mxu0
      %v2119 = vpop.f32.mrb[0].mxu0
      %v2120 = vadd.f32 %v1959, %v2119
      %v2121 = vpop.f32.mrb[0].mxu0
      %2122 = vmatprep.mubr.bf16.mxu0 0
      %2123 = vmatmul.mubr.bf16.gmra.mrb[0].mxu0 %v1817
      %v2124 = vpop.f32.mrb[0].mxu0
      %v2125 = vadd.f32 %v1964, %v2124
      %v2126 = vpop.f32.mrb[0].mxu0
      %v2127 = vpop.f32.mrb[0].mxu0
      %v2128 = vadd.f32 %v1967, %v2127
      %v2129 = vpop.f32.mrb[0].mxu0
      %2130 = vmatprep.mubr.bf16.mxu0 0
      %2131 = vmatmul.mubr.bf16.gmra.mrb[0].mxu0 %v1820
      %v2132 = vpop.f32.mrb[0].mxu0
      %v2133 = vadd.f32 %v1972, %v2132
      %v2134 = vpop.f32.mrb[0].mxu0
      %v2135 = vpop.f32.mrb[0].mxu0
      %v2136 = vadd.f32 %v1975, %v2135
      %v2137 = vpop.f32.mrb[0].mxu0
      %2138 = vmatprep.mubr.bf16.mxu0 0
      %2139 = vmatmul.mubr.bf16.gmra.mrb[0].mxu0 %v1823
      %v2140 = vpop.f32.mrb[0].mxu0
      %v2141 = vadd.f32 %v1980, %v2140
      %v2142 = vpop.f32.mrb[0].mxu0
      %v2143 = vpop.f32.mrb[0].mxu0
      %v2144 = vadd.f32 %v1983, %v2143
      %v2145 = vpop.f32.mrb[0].mxu0
      %2146 = vdwg.mxu0
      %v2147 = vpack.c.bf16 %v2024, %v2021
      %v2148 = vpack.c.bf16 %v2032, %v2029
      %v2149 = vpack.c.bf16 %v2040, %v2037
      %v2150 = vpack.c.bf16 %v2048, %v2045
      %v2151 = vpack.c.bf16 %v2056, %v2053
      %v2152 = vpack.c.bf16 %v2064, %v2061
      %v2153 = vpack.c.bf16 %v2072, %v2069
      %v2154 = vpack.c.bf16 %v2080, %v2077
      %v2155 = vpack.c.bf16 %v2088, %v2085
      %v2156 = vpack.c.bf16 %v2096, %v2093
      %v2157 = vpack.c.bf16 %v2104, %v2101
      %v2158 = vpack.c.bf16 %v2112, %v2109
      %v2159 = vpack.c.bf16 %v2120, %v2117
      %v2160 = vpack.c.bf16 %v2128, %v2125
      %v2161 = vpack.c.bf16 %v2136, %v2133
      %v2162 = vpack.c.bf16 %v2144, %v2141
      %v2179 = vunpack.c.l.b16 %v2147
      %v2180 = vunpack.c.h.b16 %v2147
      %v2181 = vunpack.c.l.b16 %v2148
      %v2182 = vunpack.c.h.b16 %v2148
      %v2183 = vunpack.c.l.b16 %v2149
      %v2184 = vunpack.c.h.b16 %v2149
      %v2185 = vunpack.c.l.b16 %v2150
      %v2186 = vunpack.c.h.b16 %v2150
      %v2187 = vunpack.c.l.b16 %v2151
      %v2188 = vunpack.c.h.b16 %v2151
      %v2189 = vunpack.c.l.b16 %v2152
      %v2190 = vunpack.c.h.b16 %v2152
      %v2191 = vunpack.c.l.b16 %v2153
      %v2192 = vunpack.c.h.b16 %v2153
      %v2193 = vunpack.c.l.b16 %v2154
      %v2194 = vunpack.c.h.b16 %v2154
      %v2195 = vunpack.c.l.b16 %v2155
      %v2196 = vunpack.c.h.b16 %v2155
      %v2197 = vunpack.c.l.b16 %v2156
      %v2198 = vunpack.c.h.b16 %v2156
      %v2199 = vunpack.c.l.b16 %v2157
      %v2200 = vunpack.c.h.b16 %v2157
      %v2201 = vunpack.c.l.b16 %v2158
      %v2202 = vunpack.c.h.b16 %v2158
      %v2203 = vunpack.c.l.b16 %v2159
      %v2204 = vunpack.c.h.b16 %v2159
      %v2205 = vunpack.c.l.b16 %v2160
      %v2206 = vunpack.c.h.b16 %v2160
      %v2207 = vunpack.c.l.b16 %v2161
      %v2208 = vunpack.c.h.b16 %v2161
      %v2209 = vunpack.c.l.b16 %v2162
      %v2210 = vunpack.c.h.b16 %v2162
      %v2211 = vpack.c.b16 %v2179, %v2179
      %v2212 = vpack.c.b16 %v2180, %v2180
      %v2213 = vpack.c.b16 %v2181, %v2181
      %v2214 = vpack.c.b16 %v2182, %v2182
      %v2215 = vpack.c.b16 %v2183, %v2183
      %v2216 = vpack.c.b16 %v2184, %v2184
      %v2217 = vpack.c.b16 %v2185, %v2185
      %v2218 = vpack.c.b16 %v2186, %v2186
      %v2219 = vpack.c.b16 %v2187, %v2187
      %v2220 = vpack.c.b16 %v2188, %v2188
      %v2221 = vpack.c.b16 %v2189, %v2189
      %v2222 = vpack.c.b16 %v2190, %v2190
      %v2223 = vpack.c.b16 %v2191, %v2191
      %v2224 = vpack.c.b16 %v2192, %v2192
      %v2225 = vpack.c.b16 %v2193, %v2193
      %v2226 = vpack.c.b16 %v2194, %v2194
      %v2227 = vpack.c.b16 %v2195, %v2195
      %v2228 = vpack.c.b16 %v2196, %v2196
      %v2229 = vpack.c.b16 %v2197, %v2197
      %v2230 = vpack.c.b16 %v2198, %v2198
      %v2231 = vpack.c.b16 %v2199, %v2199
      %v2232 = vpack.c.b16 %v2200, %v2200
      %v2233 = vpack.c.b16 %v2201, %v2201
      %v2234 = vpack.c.b16 %v2202, %v2202
      %v2235 = vpack.c.b16 %v2203, %v2203
      %v2236 = vpack.c.b16 %v2204, %v2204
      %v2237 = vpack.c.b16 %v2205, %v2205
      %v2238 = vpack.c.b16 %v2206, %v2206
      %v2239 = vpack.c.b16 %v2207, %v2207
      %v2240 = vpack.c.b16 %v2208, %v2208
      %v2241 = vpack.c.b16 %v2209, %v2209
      %v2242 = vpack.c.b16 %v2210, %v2210
      %vm2275 = vcmask 257024
      %2276 = vst.msk [vmem:[%s452] sm:$0xf] %vm2275, %v2211
      %2277 = vst.msk [vmem:[%s452 + $0x4] sm:$0xf] %vm2275, %v2212
      %2278 = vst.msk [vmem:[%s452 + $0x8] sm:$0xf] %vm2275, %v2213
      %2279 = vst.msk [vmem:[%s452 + $0xc] sm:$0xf] %vm2275, %v2214
      %2280 = vst.msk [vmem:[%s452 + $0x10] sm:$0xf] %vm2275, %v2215
      %2281 = vst.msk [vmem:[%s452 + $0x14] sm:$0xf] %vm2275, %v2216
      %2282 = vst.msk [vmem:[%s452 + $0x18] sm:$0xf] %vm2275, %v2217
      %2283 = vst.msk [vmem:[%s452 + $0x1c] sm:$0xf] %vm2275, %v2218
      %2284 = vst.msk [vmem:[%s452 + $0x20] sm:$0xf] %vm2275, %v2219
      %2285 = vst.msk [vmem:[%s452 + $0x24] sm:$0xf] %vm2275, %v2220
      %2286 = vst.msk [vmem:[%s452 + $0x28] sm:$0xf] %vm2275, %v2221
      %2287 = vst.msk [vmem:[%s452 + $0x2c] sm:$0xf] %vm2275, %v2222
      %2288 = vst.msk [vmem:[%s452 + $0x30] sm:$0xf] %vm2275, %v2223
      %2289 = vst.msk [vmem:[%s452 + $0x34] sm:$0xf] %vm2275, %v2224
      %2290 = vst.msk [vmem:[%s452 + $0x38] sm:$0xf] %vm2275, %v2225
      %2291 = vst.msk [vmem:[%s452 + $0x3c] sm:$0xf] %vm2275, %v2226
      %2292 = vst.msk [vmem:[%s452 + $0x40] sm:$0xf] %vm2275, %v2227
      %2293 = vst.msk [vmem:[%s452 + $0x44] sm:$0xf] %vm2275, %v2228
      %2294 = vst.msk [vmem:[%s452 + $0x48] sm:$0xf] %vm2275, %v2229
      %2295 = vst.msk [vmem:[%s452 + $0x4c] sm:$0xf] %vm2275, %v2230
      %2296 = vst.msk [vmem:[%s452 + $0x50] sm:$0xf] %vm2275, %v2231
      %2297 = vst.msk [vmem:[%s452 + $0x54] sm:$0xf] %vm2275, %v2232
      %2298 = vst.msk [vmem:[%s452 + $0x58] sm:$0xf] %vm2275, %v2233
      %2299 = vst.msk [vmem:[%s452 + $0x5c] sm:$0xf] %vm2275, %v2234
      %2300 = vst.msk [vmem:[%s452 + $0x60] sm:$0xf] %vm2275, %v2235
      %2301 = vst.msk [vmem:[%s452 + $0x64] sm:$0xf] %vm2275, %v2236
      %2302 = vst.msk [vmem:[%s452 + $0x68] sm:$0xf] %vm2275, %v2237
      %2303 = vst.msk [vmem:[%s452 + $0x6c] sm:$0xf] %vm2275, %v2238
      %2304 = vst.msk [vmem:[%s452 + $0x70] sm:$0xf] %vm2275, %v2239
      %2305 = vst.msk [vmem:[%s452 + $0x74] sm:$0xf] %vm2275, %v2240
      %2306 = vst.msk [vmem:[%s452 + $0x78] sm:$0xf] %vm2275, %v2241
      %2307 = vst.msk [vmem:[%s452 + $0x7c] sm:$0xf] %vm2275, %v2242
      %v2308 = vsel %vm1390, %v2021, 0.0
      %v2309 = vsel %vm1390, %v2024, 0.0
      %v2310 = vadd.f32 %v2308, %v2309
      %v2311 = vsel %vm1390, %v2029, 0.0
      %v2312 = vadd.f32 %v2310, %v2311
      %v2313 = vsel %vm1390, %v2032, 0.0
      %v2314 = vadd.f32 %v2312, %v2313
      %v2315 = vsel %vm1390, %v2037, 0.0
      %v2316 = vadd.f32 %v2314, %v2315
      %v2317 = vsel %vm1390, %v2040, 0.0
      %v2318 = vadd.f32 %v2316, %v2317
      %v2319 = vsel %vm1390, %v2045, 0.0
      %v2320 = vadd.f32 %v2318, %v2319
      %v2321 = vsel %vm1390, %v2048, 0.0
      %v2322 = vadd.f32 %v2320, %v2321
      %v2323 = vsel %vm1390, %v2053, 0.0
      %v2324 = vadd.f32 %v2322, %v2323
      %v2325 = vsel %vm1390, %v2056, 0.0
      %v2326 = vadd.f32 %v2324, %v2325
      %v2327 = vsel %vm1390, %v2061, 0.0
      %v2328 = vadd.f32 %v2326, %v2327
      %v2329 = vsel %vm1390, %v2064, 0.0
      %v2330 = vadd.f32 %v2328, %v2329
      %v2331 = vsel %vm1390, %v2069, 0.0
      %v2332 = vadd.f32 %v2330, %v2331
      %v2333 = vsel %vm1390, %v2072, 0.0
      %v2334 = vadd.f32 %v2332, %v2333
      %v2335 = vsel %vm1390, %v2077, 0.0
      %v2336 = vadd.f32 %v2334, %v2335
      %v2337 = vsel %vm1390, %v2080, 0.0
      %v2338 = vadd.f32 %v2336, %v2337
      %v2339 = vsel %vm1390, %v2085, 0.0
      %v2340 = vadd.f32 %v2338, %v2339
      %v2341 = vsel %vm1390, %v2088, 0.0
      %v2342 = vadd.f32 %v2340, %v2341
      %v2343 = vsel %vm1390, %v2093, 0.0
      %v2344 = vadd.f32 %v2342, %v2343
      %v2345 = vsel %vm1390, %v2096, 0.0
      %v2346 = vadd.f32 %v2344, %v2345
      %v2347 = vsel %vm1390, %v2101, 0.0
      %v2348 = vadd.f32 %v2346, %v2347
      %v2349 = vsel %vm1390, %v2104, 0.0
      %v2350 = vadd.f32 %v2348, %v2349
      %v2351 = vsel %vm1390, %v2109, 0.0
      %v2352 = vadd.f32 %v2350, %v2351
      %v2353 = vsel %vm1390, %v2112, 0.0
      %v2354 = vadd.f32 %v2352, %v2353
      %v2355 = vsel %vm1390, %v2117, 0.0
      %v2356 = vadd.f32 %v2354, %v2355
      %v2357 = vsel %vm1390, %v2120, 0.0
      %v2358 = vadd.f32 %v2356, %v2357
      %v2359 = vsel %vm1390, %v2125, 0.0
      %v2360 = vadd.f32 %v2358, %v2359
      %v2361 = vsel %vm1390, %v2128, 0.0
      %v2362 = vadd.f32 %v2360, %v2361
      %v2363 = vsel %vm1390, %v2133, 0.0
      %v2364 = vadd.f32 %v2362, %v2363
      %v2365 = vsel %vm1390, %v2136, 0.0
      %v2366 = vadd.f32 %v2364, %v2365
      %v2367 = vsel %vm1390, %v2141, 0.0
      %v2368 = vadd.f32 %v2366, %v2367
      %v2369 = vsel %vm1390, %v2144, 0.0
      %v2370 = vadd.f32 %v2368, %v2369
      %v2371 = vrot.slane %v2370, 4
      %v2372 = vadd.f32 %v2370, %v2371
      %v2373 = vrot.slane %v2372, 2
      %v2374 = vadd.f32 %v2372, %v2373
      %v2375 = vrot.slane %v2374, 1
      %v2376 = vadd.f32 %v2374, %v2375
      %v2377 = vmul.f32 %v2021, %v2021
      %v2378 = vmul.f32 %v2024, %v2024
      %v2379 = vmul.f32 %v2029, %v2029
      %v2380 = vmul.f32 %v2032, %v2032
      %v2381 = vmul.f32 %v2037, %v2037
      %v2382 = vmul.f32 %v2040, %v2040
      %v2383 = vmul.f32 %v2045, %v2045
      %v2384 = vmul.f32 %v2048, %v2048
      %v2385 = vmul.f32 %v2053, %v2053
      %v2386 = vmul.f32 %v2056, %v2056
      %v2387 = vmul.f32 %v2061, %v2061
      %v2388 = vmul.f32 %v2064, %v2064
      %v2389 = vmul.f32 %v2069, %v2069
      %v2390 = vmul.f32 %v2072, %v2072
      %v2391 = vmul.f32 %v2077, %v2077
      %v2392 = vmul.f32 %v2080, %v2080
      %v2393 = vmul.f32 %v2085, %v2085
      %v2394 = vmul.f32 %v2088, %v2088
      %v2395 = vmul.f32 %v2093, %v2093
      %v2396 = vmul.f32 %v2096, %v2096
      %v2397 = vmul.f32 %v2101, %v2101
      %v2398 = vmul.f32 %v2104, %v2104
      %v2399 = vmul.f32 %v2109, %v2109
      %v2400 = vmul.f32 %v2112, %v2112
      %v2401 = vmul.f32 %v2117, %v2117
      %v2402 = vmul.f32 %v2120, %v2120
      %v2403 = vmul.f32 %v2125, %v2125
      %v2404 = vmul.f32 %v2128, %v2128
      %v2405 = vmul.f32 %v2133, %v2133
      %v2406 = vmul.f32 %v2136, %v2136
      %v2407 = vmul.f32 %v2141, %v2141
      %v2408 = vmul.f32 %v2144, %v2144
      %v2409 = vsel %vm1390, %v2377, 0.0
      %v2410 = vsel %vm1390, %v2378, 0.0
      %v2411 = vadd.f32 %v2409, %v2410
      %v2412 = vsel %vm1390, %v2379, 0.0
      %v2413 = vadd.f32 %v2411, %v2412
      %v2414 = vsel %vm1390, %v2380, 0.0
      %v2415 = vadd.f32 %v2413, %v2414
      %v2416 = vsel %vm1390, %v2381, 0.0
      %v2417 = vadd.f32 %v2415, %v2416
      %v2418 = vsel %vm1390, %v2382, 0.0
      %v2419 = vadd.f32 %v2417, %v2418
      %v2420 = vsel %vm1390, %v2383, 0.0
      %v2421 = vadd.f32 %v2419, %v2420
      %v2422 = vsel %vm1390, %v2384, 0.0
      %v2423 = vadd.f32 %v2421, %v2422
      %v2424 = vsel %vm1390, %v2385, 0.0
      %v2425 = vadd.f32 %v2423, %v2424
      %v2426 = vsel %vm1390, %v2386, 0.0
      %v2427 = vadd.f32 %v2425, %v2426
      %v2428 = vsel %vm1390, %v2387, 0.0
      %v2429 = vadd.f32 %v2427, %v2428
      %v2430 = vsel %vm1390, %v2388, 0.0
      %v2431 = vadd.f32 %v2429, %v2430
      %v2432 = vsel %vm1390, %v2389, 0.0
      %v2433 = vadd.f32 %v2431, %v2432
      %v2434 = vsel %vm1390, %v2390, 0.0
      %v2435 = vadd.f32 %v2433, %v2434
      %v2436 = vsel %vm1390, %v2391, 0.0
      %v2437 = vadd.f32 %v2435, %v2436
      %v2438 = vsel %vm1390, %v2392, 0.0
      %v2439 = vadd.f32 %v2437, %v2438
      %v2440 = vsel %vm1390, %v2393, 0.0
      %v2441 = vadd.f32 %v2439, %v2440
      %v2442 = vsel %vm1390, %v2394, 0.0
      %v2443 = vadd.f32 %v2441, %v2442
      %v2444 = vsel %vm1390, %v2395, 0.0
      %v2445 = vadd.f32 %v2443, %v2444
      %v2446 = vsel %vm1390, %v2396, 0.0
      %v2447 = vadd.f32 %v2445, %v2446
      %v2448 = vsel %vm1390, %v2397, 0.0
      %v2449 = vadd.f32 %v2447, %v2448
      %v2450 = vsel %vm1390, %v2398, 0.0
      %v2451 = vadd.f32 %v2449, %v2450
      %v2452 = vsel %vm1390, %v2399, 0.0
      %v2453 = vadd.f32 %v2451, %v2452
      %v2454 = vsel %vm1390, %v2400, 0.0
      %v2455 = vadd.f32 %v2453, %v2454
      %v2456 = vsel %vm1390, %v2401, 0.0
      %v2457 = vadd.f32 %v2455, %v2456
      %v2458 = vsel %vm1390, %v2402, 0.0
      %v2459 = vadd.f32 %v2457, %v2458
      %v2460 = vsel %vm1390, %v2403, 0.0
      %v2461 = vadd.f32 %v2459, %v2460
      %v2462 = vsel %vm1390, %v2404, 0.0
      %v2463 = vadd.f32 %v2461, %v2462
      %v2464 = vsel %vm1390, %v2405, 0.0
      %v2465 = vadd.f32 %v2463, %v2464
      %v2466 = vsel %vm1390, %v2406, 0.0
      %v2467 = vadd.f32 %v2465, %v2466
      %v2468 = vsel %vm1390, %v2407, 0.0
      %v2469 = vadd.f32 %v2467, %v2468
      %v2470 = vsel %vm1390, %v2408, 0.0
      %v2471 = vadd.f32 %v2469, %v2470
      %v2472 = vrot.slane %v2471, 4
      %v2473 = vadd.f32 %v2471, %v2472
      %v2474 = vrot.slane %v2473, 2
      %v2475 = vadd.f32 %v2473, %v2474
      %v2476 = vrot.slane %v2475, 1
      %v2477 = vadd.f32 %v2475, %v2476
      %v2478 = vld [vmem:[%s457] sm:$0x3]
      %vm2479 = vcmask 1040384
      %v2480 = vsel %vm2479, %v2376, %v2477
      %v2481 = vadd.f32 %v2478, %v2480
      %vm2482 = vcmask 254976
      %2483 = vst.msk [vmem:[%s457] sm:$0x3] %vm2482, %v2481
      %s2484 = smul.u32 16, %s24
      %p2485 = scmp.lt.s32.totalorder %s23, 1
      %s2486 = scalar_select %p2485, %s23, 1
      %p2487 = scmp.lt.s32.totalorder %s2484, 15
      %s2488 = scalar_select %p2487, %s2484, 15
      %s2489 = smul.addr %s2488, 2
      %s2490 = smul.addr %s2486, 32
      %s2491 = sadd.s32 %s2489, %s2490
      %s2492 = smul.addr %s2491, 4
      %s2493 = scalar_lea.vmem %s6, %s2492
      %p2494 = scmp.lt.s32.totalorder %s23, 1
      %s2495 = scalar_select %p2494, %s23, 1
      %s2496 = smul.addr %s2495, 2
      %s2497 = scalar_lea.vmem %s7, %s2496
      // Predicated region
      $region49: #{unet_conv_forward.4} parent=43 // pred_check
        %p2498 = pneg %p214
      $region50: #{unet_conv_forward.4} parent=43 // pred_check_branch
        %2500 = sbr.rel (%p2498) target = $region52
      $region51: #{unet_conv_forward.4} parent=43 // pred_region
        %s2501 = smul.u32 16, %s24
      $region52: #{unet_conv_forward.4} parent=43 // pred_fallthru
        _
      // Predicated region
      $region53: #{unet_conv_forward.4} parent=43 // pred_check
        %p2502 = pneg %p240
      $region54: #{unet_conv_forward.4} parent=43 // pred_check_branch
        %2504 = sbr.rel (%p2502) target = $region56
      $region55: #{unet_conv_forward.4} parent=43 // pred_region
        _
      $region56: #{unet_conv_forward.4} parent=43 // pred_fallthru
        _
    $region44: #{unet_conv_forward.4} parent=5 // pred_fallthru
      _
    %p2505 = scmp.le.s32.totalorder 2, %s14
    // Predicated region
    $region57: #{unet_conv_forward.4} parent=5 // pred_check
      %p2506 = pneg %p2505
    $region58: #{unet_conv_forward.4} parent=5 // pred_check_branch
      %2508 = sbr.rel (%p2506) target = $region60
    $region59: #{unet_conv_forward.4} parent=5 // pred_region
      %s2509 = ssub.s32 %s14, 2
      // Predicated region
      $region61: #{unet_conv_forward.4} parent=59 // pred_check
        %p2510 = pneg %p220
      $region62: #{unet_conv_forward.4} parent=59 // pred_check_branch
        %2512 = sbr.rel (%p2510) target = $region64
      $region63: #{unet_conv_forward.4} parent=59 // pred_region
        %s2513 = smul.u32 16, %s26
        %p2514 = scmp.lt.s32.totalorder %s25, 1
        %s2515 = scalar_select %p2514, %s25, 1
        %p2516 = scmp.lt.s32.totalorder %s2513, 15
        %s2517 = scalar_select %p2516, %s2513, 15
        %s2518 = smul.addr %s2517, 2
        %s2519 = smul.addr %s2515, 32
        %s2520 = sadd.s32 %s2518, %s2519
        %s2521 = smul.addr %s2520, 4
        %s2522 = scalar_lea.vmem %s6, %s2521
      $region64: #{unet_conv_forward.4} parent=59 // pred_fallthru
        _
      // Predicated region
      $region65: #{unet_conv_forward.4} parent=59 // pred_check
        %p2523 = pneg %p246
      $region66: #{unet_conv_forward.4} parent=59 // pred_check_branch
        %2525 = sbr.rel (%p2523) target = $region68
      $region67: #{unet_conv_forward.4} parent=59 // pred_region
        %p2526 = scmp.lt.s32.totalorder %s25, 1
        %s2527 = scalar_select %p2526, %s25, 1
        %s2528 = smul.addr %s2527, 2
        %s2529 = scalar_lea.vmem %s7, %s2528
      $region68: #{unet_conv_forward.4} parent=59 // pred_fallthru
        _
    $region60: #{unet_conv_forward.4} parent=5 // pred_fallthru
      _
  $region6: #{unet_conv_forward.4} parent=0 // loop_footer
    %s18 = sadd.s32 1, %s14
  $region7: #{unet_conv_forward.4} parent=0 // loop_footer_branch
    %13 = sbr.rel target = $region3
  $region8: #{unet_conv_forward.4} parent=0 // loop_exit
    _

</llo_original>
